<compile_context>
chip_gen: v6e
topology: v6e:2x2x1
jax: 0.10.0
libtpu: 0.0.40
codegen_flags: <defaults>
</compile_context>

<pallas_src>
import functools

import numpy as np
import jax
import jax.numpy as jnp
from jax import lax
from jax.experimental import pallas as pl
from jax.experimental.pallas import tpu as pltpu


# ConvTranspose2d(k=4, s=2, p=1), 1-D per axis:
#   out[2r]   = x[r]   * w[1] + x[r-1] * w[3]
#   out[2r+1] = x[r+1] * w[0] + x[r]   * w[2]
# With a 1-pixel zero pad (x[r] lives at padded index r+1):
#   parity -> ((kernel_index, padded_offset), (kernel_index, padded_offset))
_TAPS = (((1, 1), (3, 0)),        # even outputs
         ((0, 2), (2, 1)))        # odd outputs

# Second ConvTranspose applied directly to the 2x2 parity planes P_p of the
# first one (h1[2r + p] = P_p[r]).  Output phase q = output_index mod 4:
#   out[4r + q] = sum over (p, o, k) in _TAPS2[q] of P_p_padded[r + o] * w[k]
_TAPS2 = (((0, 1, 1), (1, 0, 3)),     # q = 0
          ((1, 1, 0), (0, 1, 2)),     # q = 1
          ((1, 1, 1), (0, 1, 3)),     # q = 2
          ((0, 2, 0), (1, 1, 2)))     # q = 3


# ----------------------------------------------------------------------------
# The fused decoder kernel
# ----------------------------------------------------------------------------
def decoder_kernel(x_ref, *refs, n_res_block):
    # refs = (flat weights..., o_ref, s_in, s_c, s_p)
    s_in, s_c, s_p = refs[-3:]
    o_ref = refs[-4]
    it = iter(refs[:-4])
    w_in, b_in = next(it)[...], next(it)[...]
    res_p = [tuple(next(it)[...] for _ in range(4)) for _ in range(n_res_block)]
    w_t1, b_t1 = next(it)[...], next(it)[...]
    w_t2, b_t2 = next(it)[...], next(it)[...]

    nb, H, W, _ = x_ref.shape
    C = w_in.shape[-1]

    # Zero the padded scratch buffers once per grid step.  (Unconditional, not
    # gated on program_id==0, so it stays correct when the "parallel" batch
    # axis is sharded across two TensorCores on v7x.)  Interiors are always
    # overwritten before each read; only the 1-pixel halo must stay zero.
    s_in[...] = jnp.zeros_like(s_in)
    s_c[...] = jnp.zeros_like(s_c)
    s_p[...] = jnp.zeros_like(s_p)

    def pad_patches(scratch, x):
        """Write x into the interior of a zero-bordered padded VMEM scratch and
        return the 3x3-window im2col matrix (nb*H*W, 9*c) of the padded tensor.
        No zero-slab concatenation, no HBM traffic.
        (Per the review, a per-tap-accumulation variant or a 128-lane-aligned
        scratch patch build may beat the 9-way lane concat here; pick per
        generation from bundle dumps.)"""
        n, h, w, c = x.shape
        scratch[:, 1:h + 1, 1:w + 1, :] = x
        xp = scratch[...]
        cols = [xp[:, dy:dy + h, dx:dx + w, :]
                for dy in range(3) for dx in range(3)]
        return jnp.concatenate(cols, axis=-1).reshape(n * h * w, 9 * c)

    # Conv2d(in_channel, channel, 3, padding=1): one deep-K matmul (K=9*Cin).
    p = pad_patches(s_in, x_ref[...])
    h = jnp.dot(p, w_in, preferred_element_type=jnp.float32) + b_in
    h = h.reshape(nb, H, W, C)

    # ResBlocks: h += Conv1x1(ReLU(Conv3x3(ReLU(h))))
    for (w1, b1, w2, b2) in res_p:
        p = pad_patches(s_c, jnp.maximum(h, 0.0))
        t = jnp.dot(p, w1, preferred_element_type=jnp.float32) + b1
        t = jnp.maximum(t, 0.0)
        h = h + (jnp.dot(t, w2, preferred_element_type=jnp.float32)
                 + b2).reshape(h.shape)

    # ReLU -> ConvTranspose2d(channel, channel//2, 4, 2, 1): all 4 output
    # parities in ONE matmul (N = 4*Cmid) over a shared 3x3-window im2col of
    # the padded input; the result stays lane-packed (parity-block columns).
    p = pad_patches(s_c, jnp.maximum(h, 0.0))
    planes = jnp.dot(p, w_t1, preferred_element_type=jnp.float32) + b_t1
    planes = planes.reshape(nb, H, W, w_t1.shape[-1])      # (nb,H,W,4*Cmid)

    # ReLU -> ConvTranspose2d(channel//2, out_channel, 4, 2, 1): all 16 output
    # phases in ONE matmul (N = 16*Cout) over a 3x3-window im2col of the
    # padded, lane-packed parity planes.
    p = pad_patches(s_p, jnp.maximum(planes, 0.0))
    out = jnp.dot(p, w_t2, preferred_element_type=jnp.float32) + b_t2
    o_ref[...] = out.reshape(nb, H, W, w_t2.shape[-1])      # (nb,H,W,16*Cout)


# ----------------------------------------------------------------------------
# Wrapper: weight prep, pallas_call, output un-phasing
# ----------------------------------------------------------------------------
def _prep_convt1_weight(w):
    """(4,4,Ci,Cm) -> (9*Ci, 4*Cm): the four output-parity classes of
    ConvTranspose2d(k=4,s=2,p=1) merged along the matmul N dim, expressed over
    a shared 3x3 window of the 1-padded input (unused taps are zero)."""
    Ci, Cm = w.shape[2], w.shape[3]
    wm = jnp.zeros((3, 3, Ci, 4 * Cm), w.dtype)
    for py in range(2):
        for px in range(2):
            blk = (py * 2 + px) * Cm
            for (ky, oy) in _TAPS[py]:
                for (kx, ox) in _TAPS[px]:
                    wm = wm.at[oy, ox, :, blk:blk + Cm].set(w[ky, kx])
    return wm.reshape(9 * Ci, 4 * Cm)


def _prep_convt2_weight(w):
    """(4,4,Cm,Co) -> (9*4*Cm, 16*Co): the 16 output-phase classes of the
    second ConvTranspose merged along N, expressed over a 3x3 window of the
    1-padded, parity-packed planes of the first ConvTranspose."""
    Cm, Co = w.shape[2], w.shape[3]
    wm = jnp.zeros((3, 3, 4, Cm, 16 * Co), w.dtype)
    for qy in range(4):
        for qx in range(4):
            blk = (qy * 4 + qx) * Co
            for (py, oy, ky) in _TAPS2[qy]:
                for (px, ox, kx) in _TAPS2[qx]:
                    wm = wm.at[oy, ox, py * 2 + px, :, blk:blk + Co].set(w[ky, kx])
    return wm.reshape(9 * 4 * Cm, 16 * Co)


def _rep_spec(shape):
    """Whole-array block replicated across the batch grid."""
    zeros = (0,) * len(shape)
    return pl.BlockSpec(shape, lambda n: zeros)


def decoder_forward(params, x_nchw, *, batch_block=None):
    # NCHW in / NCHW out (PyTorch convention); NHWC inside the kernel.
    x = jnp.transpose(x_nchw, (0, 2, 3, 1)).astype(jnp.float32)
    N, H0, W0, Cin = x.shape

    if batch_block is None:
        # Default: two batch blocks so the "parallel" axis can shard across
        # v7x's two TensorCores.  On v5e/v6e pass batch_block=N for a single
        # grid step with M = N*H0*W0 rows (max MXU row fill).
        batch_block = N // 2 if (N % 2 == 0 and N > 1) else N
    assert N % batch_block == 0, "batch must be divisible by batch_block"
    NB = batch_block

    w_in, b_in = params["conv_in"]
    C = w_in.shape[-1]
    flat = [w_in.reshape(9 * Cin, C), b_in]
    for (w1, b1), (w2, b2) in params["res"]:
        flat += [w1.reshape(9 * C, w1.shape[-1]), b1,
                 w2.reshape(w2.shape[2], w2.shape[3]), b2]
    wt1, bt1 = params["convt1"]
    wt2, bt2 = params["convt2"]
    Cmid, Cout = wt1.shape[-1], wt2.shape[-1]
    # Phase-merged weights + tiled biases (one broadcast add per layer).
    flat += [_prep_convt1_weight(wt1), jnp.tile(bt1, (1, 4)),
             _prep_convt2_weight(wt2), jnp.tile(bt2, (1, 16))]

    n_res = len(params["res"])
    kern = functools.partial(decoder_kernel, n_res_block=n_res)

    out = pl.pallas_call(
        kern,
        out_shape=jax.ShapeDtypeStruct((N, H0, W0, 16 * Cout), jnp.float32),
        grid=(N // NB,),
        in_specs=[pl.BlockSpec((NB, H0, W0, Cin), lambda n: (n, 0, 0, 0))]
                 + [_rep_spec(a.shape) for a in flat],
        out_specs=pl.BlockSpec((NB, H0, W0, 16 * Cout), lambda n: (n, 0, 0, 0)),
        scratch_shapes=[
            pltpu.VMEM((NB, H0 + 2, W0 + 2, Cin), jnp.float32),      # conv_in pad
            pltpu.VMEM((NB, H0 + 2, W0 + 2, C), jnp.float32),        # h pad (reused)
            pltpu.VMEM((NB, H0 + 2, W0 + 2, 4 * Cmid), jnp.float32), # parity planes pad
        ],
        compiler_params=pltpu.CompilerParams(
            dimension_semantics=("parallel",)),   # batch blocks across TCs on v7x
    )(x, *flat)

    # Single output-formatting op (replaces the NHWC->NCHW transpose that would
    # be needed anyway): un-pack the 4x4 output phases -> NCHW.
    out = out.reshape(N, H0, W0, 4, 4, Cout)
    out = jnp.transpose(out, (0, 5, 1, 3, 2, 4))
    return out.reshape(N, Cout, 4 * H0, 4 * W0)


# ----------------------------------------------------------------------------
# Parameter init + pure-JAX reference (same parameter convention)
# ----------------------------------------------------------------------------
def init_decoder_params(key, in_channel, out_channel, channel,
                        n_res_block, n_res_channel, stride):
    assert stride == 4, "this script implements the stride=4 decoder branch"
    keys = iter(jax.random.split(key, 64))

    def conv_p(cin, cout, k):
        scale = 1.0 / np.sqrt(cin * k * k)
        w = jax.random.normal(next(keys), (k, k, cin, cout), jnp.float32) * scale
        b = jax.random.normal(next(keys), (1, cout), jnp.float32) * 0.01
        return w, b

    params = {
        "conv_in": conv_p(in_channel, channel, 3),
        "res": [(conv_p(channel, n_res_channel, 3),
                 conv_p(n_res_channel, channel, 1))
                for _ in range(n_res_block)],
        "convt1": conv_p(channel, channel // 2, 4),
        "convt2": conv_p(channel // 2, out_channel, 4),
    }
    return params


def decoder_ref(params, x_nchw):
    dn = ("NHWC", "HWIO", "NHWC")
    x = jnp.transpose(x_nchw, (0, 2, 3, 1)).astype(jnp.float32)

    def conv(x, w, b, pad):
        y = lax.conv_general_dilated(x, w, (1, 1), [(pad, pad)] * 2,
                                     dimension_numbers=dn)
        return y + b.reshape(1, 1, 1, -1)

    def convt(x, w, b):
        wf = w[::-1, ::-1, :, :]
        y = lax.conv_general_dilated(x, wf, (1, 1), [(2, 2), (2, 2)],
                                     lhs_dilation=(2, 2), dimension_numbers=dn)
        return y + b.reshape(1, 1, 1, -1)

    w, b = params["conv_in"]
    h = conv(x, w, b, 1)
    for (w1, b1), (w2, b2) in params["res"]:
        t = conv(jax.nn.relu(h), w1, b1, 1)
        t = conv(jax.nn.relu(t), w2, b2, 0)
        h = h + t
    h = jax.nn.relu(h)
    w, b = params["convt1"]
    h = jax.nn.relu(convt(h, w, b))
    w, b = params["convt2"]
    h = convt(h, w, b)
    return jnp.transpose(h, (0, 3, 1, 2))


if __name__ == "__main__":
    key = jax.random.PRNGKey(0)
    k_param, k_x = jax.random.split(key)

    # Decoder(in_channel=4, out_channel=3, channel=32, n_res_block=2,
    #         n_res_channel=8, stride=4)
    in_channel, out_channel, channel = 4, 3, 32
    n_res_block, n_res_channel, stride = 2, 8, 4

    params = init_decoder_params(k_param, in_channel, out_channel, channel,
                                 n_res_block, n_res_channel, stride)

    x = jax.random.normal(k_x, (2, in_channel, 8, 8), jnp.float32)  # NCHW

    fwd = jax.jit(decoder_forward)
    out = jax.block_until_ready(fwd(params, x))
    assert out.shape == (2, out_channel, 32, 32), out.shape

    ref = jax.block_until_ready(decoder_ref(params, x))
    np.testing.assert_allclose(np.asarray(out), np.asarray(ref),
                               rtol=2e-3, atol=2e-3)

    print("KERNEL_OK")
</pallas_src>

<mosaic_0001>
module attributes {stable_mosaic.version = 11 : i64} {
  func.func @decoder_kernel(%arg0: i32, %arg1: memref<1x8x8x4xf32, #tpu.memory_space<vmem>>, %arg2: memref<36x32xf32, #tpu.memory_space<vmem>>, %arg3: memref<1x32xf32, #tpu.memory_space<vmem>>, %arg4: memref<288x8xf32, #tpu.memory_space<vmem>>, %arg5: memref<1x8xf32, #tpu.memory_space<vmem>>, %arg6: memref<8x32xf32, #tpu.memory_space<vmem>>, %arg7: memref<1x32xf32, #tpu.memory_space<vmem>>, %arg8: memref<288x8xf32, #tpu.memory_space<vmem>>, %arg9: memref<1x8xf32, #tpu.memory_space<vmem>>, %arg10: memref<8x32xf32, #tpu.memory_space<vmem>>, %arg11: memref<1x32xf32, #tpu.memory_space<vmem>>, %arg12: memref<288x64xf32, #tpu.memory_space<vmem>>, %arg13: memref<1x64xf32, #tpu.memory_space<vmem>>, %arg14: memref<576x48xf32, #tpu.memory_space<vmem>>, %arg15: memref<1x48xf32, #tpu.memory_space<vmem>>, %arg16: memref<1x8x8x48xf32, #tpu.memory_space<vmem>>, %arg17: memref<1x10x10x4xf32, #tpu.memory_space<vmem>>, %arg18: memref<1x10x10x32xf32, #tpu.memory_space<vmem>>, %arg19: memref<1x10x10x64xf32, #tpu.memory_space<vmem>>) attributes {dimension_semantics = [#tpu.dimension_semantics<parallel>], iteration_bounds = array<i64: 2>, scalar_prefetch = 0 : i64, scratch_operands = 3 : i64, tpu.core_type = #tpu.core_type<tc>, window_params = [{transform_indices = @transform_0, window_bounds = array<i64: 1, 8, 8, 4>}, {pipeline_mode = #tpu.pipeline_mode<synchronous>, transform_indices = @transform_1, window_bounds = array<i64: 36, 32>}, {pipeline_mode = #tpu.pipeline_mode<synchronous>, transform_indices = @transform_2, window_bounds = array<i64: 1, 32>}, {pipeline_mode = #tpu.pipeline_mode<synchronous>, transform_indices = @transform_3, window_bounds = array<i64: 288, 8>}, {pipeline_mode = #tpu.pipeline_mode<synchronous>, transform_indices = @transform_4, window_bounds = array<i64: 1, 8>}, {pipeline_mode = #tpu.pipeline_mode<synchronous>, transform_indices = @transform_5, window_bounds = array<i64: 8, 32>}, {pipeline_mode = #tpu.pipeline_mode<synchronous>, transform_indices = @transform_6, window_bounds = array<i64: 1, 32>}, {pipeline_mode = #tpu.pipeline_mode<synchronous>, transform_indices = @transform_7, window_bounds = array<i64: 288, 8>}, {pipeline_mode = #tpu.pipeline_mode<synchronous>, transform_indices = @transform_8, window_bounds = array<i64: 1, 8>}, {pipeline_mode = #tpu.pipeline_mode<synchronous>, transform_indices = @transform_9, window_bounds = array<i64: 8, 32>}, {pipeline_mode = #tpu.pipeline_mode<synchronous>, transform_indices = @transform_10, window_bounds = array<i64: 1, 32>}, {pipeline_mode = #tpu.pipeline_mode<synchronous>, transform_indices = @transform_11, window_bounds = array<i64: 288, 64>}, {pipeline_mode = #tpu.pipeline_mode<synchronous>, transform_indices = @transform_12, window_bounds = array<i64: 1, 64>}, {pipeline_mode = #tpu.pipeline_mode<synchronous>, transform_indices = @transform_13, window_bounds = array<i64: 576, 48>}, {pipeline_mode = #tpu.pipeline_mode<synchronous>, transform_indices = @transform_14, window_bounds = array<i64: 1, 48>}, {transform_indices = @transform_15, window_bounds = array<i64: 1, 8, 8, 48>}]} {
    %c0 = arith.constant 0 : index
    %c0_0 = arith.constant 0 : index
    %0 = vector.load %arg2[%c0, %c0_0] : memref<36x32xf32, #tpu.memory_space<vmem>>, vector<36x32xf32>
    %c0_1 = arith.constant 0 : index
    %c0_2 = arith.constant 0 : index
    %1 = vector.load %arg3[%c0_1, %c0_2] : memref<1x32xf32, #tpu.memory_space<vmem>>, vector<1x32xf32>
    %c0_3 = arith.constant 0 : index
    %c0_4 = arith.constant 0 : index
    %2 = vector.load %arg4[%c0_3, %c0_4] : memref<288x8xf32, #tpu.memory_space<vmem>>, vector<288x8xf32>
    %c0_5 = arith.constant 0 : index
    %c0_6 = arith.constant 0 : index
    %3 = vector.load %arg5[%c0_5, %c0_6] : memref<1x8xf32, #tpu.memory_space<vmem>>, vector<1x8xf32>
    %c0_7 = arith.constant 0 : index
    %c0_8 = arith.constant 0 : index
    %4 = vector.load %arg6[%c0_7, %c0_8] : memref<8x32xf32, #tpu.memory_space<vmem>>, vector<8x32xf32>
    %c0_9 = arith.constant 0 : index
    %c0_10 = arith.constant 0 : index
    %5 = vector.load %arg7[%c0_9, %c0_10] : memref<1x32xf32, #tpu.memory_space<vmem>>, vector<1x32xf32>
    %c0_11 = arith.constant 0 : index
    %c0_12 = arith.constant 0 : index
    %6 = vector.load %arg8[%c0_11, %c0_12] : memref<288x8xf32, #tpu.memory_space<vmem>>, vector<288x8xf32>
    %c0_13 = arith.constant 0 : index
    %c0_14 = arith.constant 0 : index
    %7 = vector.load %arg9[%c0_13, %c0_14] : memref<1x8xf32, #tpu.memory_space<vmem>>, vector<1x8xf32>
    %c0_15 = arith.constant 0 : index
    %c0_16 = arith.constant 0 : index
    %8 = vector.load %arg10[%c0_15, %c0_16] : memref<8x32xf32, #tpu.memory_space<vmem>>, vector<8x32xf32>
    %c0_17 = arith.constant 0 : index
    %c0_18 = arith.constant 0 : index
    %9 = vector.load %arg11[%c0_17, %c0_18] : memref<1x32xf32, #tpu.memory_space<vmem>>, vector<1x32xf32>
    %c0_19 = arith.constant 0 : index
    %c0_20 = arith.constant 0 : index
    %10 = vector.load %arg12[%c0_19, %c0_20] : memref<288x64xf32, #tpu.memory_space<vmem>>, vector<288x64xf32>
    %c0_21 = arith.constant 0 : index
    %c0_22 = arith.constant 0 : index
    %11 = vector.load %arg13[%c0_21, %c0_22] : memref<1x64xf32, #tpu.memory_space<vmem>>, vector<1x64xf32>
    %c0_23 = arith.constant 0 : index
    %c0_24 = arith.constant 0 : index
    %12 = vector.load %arg14[%c0_23, %c0_24] : memref<576x48xf32, #tpu.memory_space<vmem>>, vector<576x48xf32>
    %c0_25 = arith.constant 0 : index
    %c0_26 = arith.constant 0 : index
    %13 = vector.load %arg15[%c0_25, %c0_26] : memref<1x48xf32, #tpu.memory_space<vmem>>, vector<1x48xf32>
    %cst = arith.constant 0.000000e+00 : f32
    %14 = vector.broadcast %cst : f32 to vector<1x10x10x4xf32>
    %c0_27 = arith.constant 0 : index
    %c0_28 = arith.constant 0 : index
    %c0_29 = arith.constant 0 : index
    %c0_30 = arith.constant 0 : index
    %15 = vector.load %arg17[%c0_27, %c0_28, %c0_29, %c0_30] : memref<1x10x10x4xf32, #tpu.memory_space<vmem>>, vector<1x10x10x4xf32>
    tpu.vector_store %arg17[%c0_27, %c0_28, %c0_29, %c0_30], %14 {strides = array<i32>} : memref<1x10x10x4xf32, #tpu.memory_space<vmem>>, vector<1x10x10x4xf32>,
    %cst_31 = arith.constant 0.000000e+00 : f32
    %16 = vector.broadcast %cst_31 : f32 to vector<1x10x10x32xf32>
    %c0_32 = arith.constant 0 : index
    %c0_33 = arith.constant 0 : index
    %c0_34 = arith.constant 0 : index
    %c0_35 = arith.constant 0 : index
    %17 = vector.load %arg18[%c0_32, %c0_33, %c0_34, %c0_35] : memref<1x10x10x32xf32, #tpu.memory_space<vmem>>, vector<1x10x10x32xf32>
    tpu.vector_store %arg18[%c0_32, %c0_33, %c0_34, %c0_35], %16 {strides = array<i32>} : memref<1x10x10x32xf32, #tpu.memory_space<vmem>>, vector<1x10x10x32xf32>,
    %cst_36 = arith.constant 0.000000e+00 : f32
    %18 = vector.broadcast %cst_36 : f32 to vector<1x10x10x64xf32>
    %c0_37 = arith.constant 0 : index
    %c0_38 = arith.constant 0 : index
    %c0_39 = arith.constant 0 : index
    %c0_40 = arith.constant 0 : index
    %19 = vector.load %arg19[%c0_37, %c0_38, %c0_39, %c0_40] : memref<1x10x10x64xf32, #tpu.memory_space<vmem>>, vector<1x10x10x64xf32>
    tpu.vector_store %arg19[%c0_37, %c0_38, %c0_39, %c0_40], %18 {strides = array<i32>} : memref<1x10x10x64xf32, #tpu.memory_space<vmem>>, vector<1x10x10x64xf32>,
    %c0_41 = arith.constant 0 : index
    %c0_42 = arith.constant 0 : index
    %c0_43 = arith.constant 0 : index
    %c0_44 = arith.constant 0 : index
    %20 = vector.load %arg1[%c0_41, %c0_42, %c0_43, %c0_44] : memref<1x8x8x4xf32, #tpu.memory_space<vmem>>, vector<1x8x8x4xf32>
    %c0_45 = arith.constant 0 : index
    %c1 = arith.constant 1 : index
    %c1_46 = arith.constant 1 : index
    %c0_47 = arith.constant 0 : index
    %21 = vector.load %arg17[%c0_45, %c1, %c1_46, %c0_47] : memref<1x10x10x4xf32, #tpu.memory_space<vmem>>, vector<1x8x8x4xf32>
    tpu.vector_store %arg17[%c0_45, %c1, %c1_46, %c0_47], %20 {strides = array<i32>} : memref<1x10x10x4xf32, #tpu.memory_space<vmem>>, vector<1x8x8x4xf32>,
    %c0_48 = arith.constant 0 : index
    %c0_49 = arith.constant 0 : index
    %c0_50 = arith.constant 0 : index
    %c0_51 = arith.constant 0 : index
    %22 = vector.load %arg17[%c0_48, %c0_49, %c0_50, %c0_51] : memref<1x10x10x4xf32, #tpu.memory_space<vmem>>, vector<1x10x10x4xf32>
    %23 = vector.extract_strided_slice %22 {offsets = [0, 0, 0, 0], sizes = [1, 8, 8, 4], strides = [1, 1, 1, 1]} : vector<1x10x10x4xf32> to vector<1x8x8x4xf32>
    %24 = vector.extract_strided_slice %22 {offsets = [0, 0, 1, 0], sizes = [1, 8, 8, 4], strides = [1, 1, 1, 1]} : vector<1x10x10x4xf32> to vector<1x8x8x4xf32>
    %25 = vector.extract_strided_slice %22 {offsets = [0, 0, 2, 0], sizes = [1, 8, 8, 4], strides = [1, 1, 1, 1]} : vector<1x10x10x4xf32> to vector<1x8x8x4xf32>
    %26 = vector.extract_strided_slice %22 {offsets = [0, 1, 0, 0], sizes = [1, 8, 8, 4], strides = [1, 1, 1, 1]} : vector<1x10x10x4xf32> to vector<1x8x8x4xf32>
    %27 = vector.extract_strided_slice %22 {offsets = [0, 1, 1, 0], sizes = [1, 8, 8, 4], strides = [1, 1, 1, 1]} : vector<1x10x10x4xf32> to vector<1x8x8x4xf32>
    %28 = vector.extract_strided_slice %22 {offsets = [0, 1, 2, 0], sizes = [1, 8, 8, 4], strides = [1, 1, 1, 1]} : vector<1x10x10x4xf32> to vector<1x8x8x4xf32>
    %29 = vector.extract_strided_slice %22 {offsets = [0, 2, 0, 0], sizes = [1, 8, 8, 4], strides = [1, 1, 1, 1]} : vector<1x10x10x4xf32> to vector<1x8x8x4xf32>
    %30 = vector.extract_strided_slice %22 {offsets = [0, 2, 1, 0], sizes = [1, 8, 8, 4], strides = [1, 1, 1, 1]} : vector<1x10x10x4xf32> to vector<1x8x8x4xf32>
    %31 = vector.extract_strided_slice %22 {offsets = [0, 2, 2, 0], sizes = [1, 8, 8, 4], strides = [1, 1, 1, 1]} : vector<1x10x10x4xf32> to vector<1x8x8x4xf32>
    %32 = tpu.concatenate %23, %24, %25, %26, %27, %28, %29, %30, %31 in 3 : vector<1x8x8x4xf32>, vector<1x8x8x4xf32>, vector<1x8x8x4xf32>, vector<1x8x8x4xf32>, vector<1x8x8x4xf32>, vector<1x8x8x4xf32>, vector<1x8x8x4xf32>, vector<1x8x8x4xf32>, vector<1x8x8x4xf32> -> vector<1x8x8x36xf32>
    %33 = vector.shape_cast %32 : vector<1x8x8x36xf32> to vector<64x36xf32>
    %cst_52 = arith.constant dense<0.000000e+00> : vector<64x32xf32>
    %34 = tpu.matmul %33, %0, %cst_52 {dimension_numbers = #tpu.dot_dimension_numbers<[1], [0], [0], [1], [0, 0, 1, 1], [], []>} : vector<64x36xf32>, vector<36x32xf32>, vector<64x32xf32> -> vector<64x32xf32>
    %35 = vector.broadcast %1 : vector<1x32xf32> to vector<64x32xf32>
    %36 = arith.addf %34, %35 : vector<64x32xf32>
    %37 = vector.shape_cast %36 : vector<64x32xf32> to vector<1x8x8x32xf32>
    %cst_53 = arith.constant 0.000000e+00 : f32
    %38 = vector.broadcast %cst_53 : f32 to vector<1x8x8x32xf32>
    %39 = arith.maximumf %37, %38 : vector<1x8x8x32xf32>
    %c0_54 = arith.constant 0 : index
    %c1_55 = arith.constant 1 : index
    %c1_56 = arith.constant 1 : index
    %c0_57 = arith.constant 0 : index
    %40 = vector.load %arg18[%c0_54, %c1_55, %c1_56, %c0_57] : memref<1x10x10x32xf32, #tpu.memory_space<vmem>>, vector<1x8x8x32xf32>
    tpu.vector_store %arg18[%c0_54, %c1_55, %c1_56, %c0_57], %39 {strides = array<i32>} : memref<1x10x10x32xf32, #tpu.memory_space<vmem>>, vector<1x8x8x32xf32>,
    %c0_58 = arith.constant 0 : index
    %c0_59 = arith.constant 0 : index
    %c0_60 = arith.constant 0 : index
    %c0_61 = arith.constant 0 : index
    %41 = vector.load %arg18[%c0_58, %c0_59, %c0_60, %c0_61] : memref<1x10x10x32xf32, #tpu.memory_space<vmem>>, vector<1x10x10x32xf32>
    %42 = vector.extract_strided_slice %41 {offsets = [0, 0, 0, 0], sizes = [1, 8, 8, 32], strides = [1, 1, 1, 1]} : vector<1x10x10x32xf32> to vector<1x8x8x32xf32>
    %43 = vector.extract_strided_slice %41 {offsets = [0, 0, 1, 0], sizes = [1, 8, 8, 32], strides = [1, 1, 1, 1]} : vector<1x10x10x32xf32> to vector<1x8x8x32xf32>
    %44 = vector.extract_strided_slice %41 {offsets = [0, 0, 2, 0], sizes = [1, 8, 8, 32], strides = [1, 1, 1, 1]} : vector<1x10x10x32xf32> to vector<1x8x8x32xf32>
    %45 = vector.extract_strided_slice %41 {offsets = [0, 1, 0, 0], sizes = [1, 8, 8, 32], strides = [1, 1, 1, 1]} : vector<1x10x10x32xf32> to vector<1x8x8x32xf32>
    %46 = vector.extract_strided_slice %41 {offsets = [0, 1, 1, 0], sizes = [1, 8, 8, 32], strides = [1, 1, 1, 1]} : vector<1x10x10x32xf32> to vector<1x8x8x32xf32>
    %47 = vector.extract_strided_slice %41 {offsets = [0, 1, 2, 0], sizes = [1, 8, 8, 32], strides = [1, 1, 1, 1]} : vector<1x10x10x32xf32> to vector<1x8x8x32xf32>
    %48 = vector.extract_strided_slice %41 {offsets = [0, 2, 0, 0], sizes = [1, 8, 8, 32], strides = [1, 1, 1, 1]} : vector<1x10x10x32xf32> to vector<1x8x8x32xf32>
    %49 = vector.extract_strided_slice %41 {offsets = [0, 2, 1, 0], sizes = [1, 8, 8, 32], strides = [1, 1, 1, 1]} : vector<1x10x10x32xf32> to vector<1x8x8x32xf32>
    %50 = vector.extract_strided_slice %41 {offsets = [0, 2, 2, 0], sizes = [1, 8, 8, 32], strides = [1, 1, 1, 1]} : vector<1x10x10x32xf32> to vector<1x8x8x32xf32>
    %51 = tpu.concatenate %42, %43, %44, %45, %46, %47, %48, %49, %50 in 3 : vector<1x8x8x32xf32>, vector<1x8x8x32xf32>, vector<1x8x8x32xf32>, vector<1x8x8x32xf32>, vector<1x8x8x32xf32>, vector<1x8x8x32xf32>, vector<1x8x8x32xf32>, vector<1x8x8x32xf32>, vector<1x8x8x32xf32> -> vector<1x8x8x288xf32>
    %52 = vector.shape_cast %51 : vector<1x8x8x288xf32> to vector<64x288xf32>
    %cst_62 = arith.constant dense<0.000000e+00> : vector<64x8xf32>
    %53 = tpu.matmul %52, %2, %cst_62 {dimension_numbers = #tpu.dot_dimension_numbers<[1], [0], [0], [1], [0, 0, 1, 1], [], []>} : vector<64x288xf32>, vector<288x8xf32>, vector<64x8xf32> -> vector<64x8xf32>
    %54 = vector.broadcast %3 : vector<1x8xf32> to vector<64x8xf32>
    %55 = arith.addf %53, %54 : vector<64x8xf32>
    %cst_63 = arith.constant 0.000000e+00 : f32
    %56 = vector.broadcast %cst_63 : f32 to vector<64x8xf32>
    %57 = arith.maximumf %55, %56 : vector<64x8xf32>
    %cst_64 = arith.constant dense<0.000000e+00> : vector<64x32xf32>
    %58 = tpu.matmul %57, %4, %cst_64 {dimension_numbers = #tpu.dot_dimension_numbers<[1], [0], [0], [1], [0, 0, 1, 1], [], []>} : vector<64x8xf32>, vector<8x32xf32>, vector<64x32xf32> -> vector<64x32xf32>
    %59 = vector.broadcast %5 : vector<1x32xf32> to vector<64x32xf32>
    %60 = arith.addf %58, %59 : vector<64x32xf32>
    %61 = vector.shape_cast %60 : vector<64x32xf32> to vector<1x8x8x32xf32>
    %62 = arith.addf %37, %61 : vector<1x8x8x32xf32>
    %cst_65 = arith.constant 0.000000e+00 : f32
    %63 = vector.broadcast %cst_65 : f32 to vector<1x8x8x32xf32>
    %64 = arith.maximumf %62, %63 : vector<1x8x8x32xf32>
    %c0_66 = arith.constant 0 : index
    %c1_67 = arith.constant 1 : index
    %c1_68 = arith.constant 1 : index
    %c0_69 = arith.constant 0 : index
    %65 = vector.load %arg18[%c0_66, %c1_67, %c1_68, %c0_69] : memref<1x10x10x32xf32, #tpu.memory_space<vmem>>, vector<1x8x8x32xf32>
    tpu.vector_store %arg18[%c0_66, %c1_67, %c1_68, %c0_69], %64 {strides = array<i32>} : memref<1x10x10x32xf32, #tpu.memory_space<vmem>>, vector<1x8x8x32xf32>,
    %c0_70 = arith.constant 0 : index
    %c0_71 = arith.constant 0 : index
    %c0_72 = arith.constant 0 : index
    %c0_73 = arith.constant 0 : index
    %66 = vector.load %arg18[%c0_70, %c0_71, %c0_72, %c0_73] : memref<1x10x10x32xf32, #tpu.memory_space<vmem>>, vector<1x10x10x32xf32>
    %67 = vector.extract_strided_slice %66 {offsets = [0, 0, 0, 0], sizes = [1, 8, 8, 32], strides = [1, 1, 1, 1]} : vector<1x10x10x32xf32> to vector<1x8x8x32xf32>
    %68 = vector.extract_strided_slice %66 {offsets = [0, 0, 1, 0], sizes = [1, 8, 8, 32], strides = [1, 1, 1, 1]} : vector<1x10x10x32xf32> to vector<1x8x8x32xf32>
    %69 = vector.extract_strided_slice %66 {offsets = [0, 0, 2, 0], sizes = [1, 8, 8, 32], strides = [1, 1, 1, 1]} : vector<1x10x10x32xf32> to vector<1x8x8x32xf32>
    %70 = vector.extract_strided_slice %66 {offsets = [0, 1, 0, 0], sizes = [1, 8, 8, 32], strides = [1, 1, 1, 1]} : vector<1x10x10x32xf32> to vector<1x8x8x32xf32>
    %71 = vector.extract_strided_slice %66 {offsets = [0, 1, 1, 0], sizes = [1, 8, 8, 32], strides = [1, 1, 1, 1]} : vector<1x10x10x32xf32> to vector<1x8x8x32xf32>
    %72 = vector.extract_strided_slice %66 {offsets = [0, 1, 2, 0], sizes = [1, 8, 8, 32], strides = [1, 1, 1, 1]} : vector<1x10x10x32xf32> to vector<1x8x8x32xf32>
    %73 = vector.extract_strided_slice %66 {offsets = [0, 2, 0, 0], sizes = [1, 8, 8, 32], strides = [1, 1, 1, 1]} : vector<1x10x10x32xf32> to vector<1x8x8x32xf32>
    %74 = vector.extract_strided_slice %66 {offsets = [0, 2, 1, 0], sizes = [1, 8, 8, 32], strides = [1, 1, 1, 1]} : vector<1x10x10x32xf32> to vector<1x8x8x32xf32>
    %75 = vector.extract_strided_slice %66 {offsets = [0, 2, 2, 0], sizes = [1, 8, 8, 32], strides = [1, 1, 1, 1]} : vector<1x10x10x32xf32> to vector<1x8x8x32xf32>
    %76 = tpu.concatenate %67, %68, %69, %70, %71, %72, %73, %74, %75 in 3 : vector<1x8x8x32xf32>, vector<1x8x8x32xf32>, vector<1x8x8x32xf32>, vector<1x8x8x32xf32>, vector<1x8x8x32xf32>, vector<1x8x8x32xf32>, vector<1x8x8x32xf32>, vector<1x8x8x32xf32>, vector<1x8x8x32xf32> -> vector<1x8x8x288xf32>
    %77 = vector.shape_cast %76 : vector<1x8x8x288xf32> to vector<64x288xf32>
    %cst_74 = arith.constant dense<0.000000e+00> : vector<64x8xf32>
    %78 = tpu.matmul %77, %6, %cst_74 {dimension_numbers = #tpu.dot_dimension_numbers<[1], [0], [0], [1], [0, 0, 1, 1], [], []>} : vector<64x288xf32>, vector<288x8xf32>, vector<64x8xf32> -> vector<64x8xf32>
    %79 = vector.broadcast %7 : vector<1x8xf32> to vector<64x8xf32>
    %80 = arith.addf %78, %79 : vector<64x8xf32>
    %cst_75 = arith.constant 0.000000e+00 : f32
    %81 = vector.broadcast %cst_75 : f32 to vector<64x8xf32>
    %82 = arith.maximumf %80, %81 : vector<64x8xf32>
    %cst_76 = arith.constant dense<0.000000e+00> : vector<64x32xf32>
    %83 = tpu.matmul %82, %8, %cst_76 {dimension_numbers = #tpu.dot_dimension_numbers<[1], [0], [0], [1], [0, 0, 1, 1], [], []>} : vector<64x8xf32>, vector<8x32xf32>, vector<64x32xf32> -> vector<64x32xf32>
    %84 = vector.broadcast %9 : vector<1x32xf32> to vector<64x32xf32>
    %85 = arith.addf %83, %84 : vector<64x32xf32>
    %86 = vector.shape_cast %85 : vector<64x32xf32> to vector<1x8x8x32xf32>
    %87 = arith.addf %62, %86 : vector<1x8x8x32xf32>
    %cst_77 = arith.constant 0.000000e+00 : f32
    %88 = vector.broadcast %cst_77 : f32 to vector<1x8x8x32xf32>
    %89 = arith.maximumf %87, %88 : vector<1x8x8x32xf32>
    %c0_78 = arith.constant 0 : index
    %c1_79 = arith.constant 1 : index
    %c1_80 = arith.constant 1 : index
    %c0_81 = arith.constant 0 : index
    %90 = vector.load %arg18[%c0_78, %c1_79, %c1_80, %c0_81] : memref<1x10x10x32xf32, #tpu.memory_space<vmem>>, vector<1x8x8x32xf32>
    tpu.vector_store %arg18[%c0_78, %c1_79, %c1_80, %c0_81], %89 {strides = array<i32>} : memref<1x10x10x32xf32, #tpu.memory_space<vmem>>, vector<1x8x8x32xf32>,
    %c0_82 = arith.constant 0 : index
    %c0_83 = arith.constant 0 : index
    %c0_84 = arith.constant 0 : index
    %c0_85 = arith.constant 0 : index
    %91 = vector.load %arg18[%c0_82, %c0_83, %c0_84, %c0_85] : memref<1x10x10x32xf32, #tpu.memory_space<vmem>>, vector<1x10x10x32xf32>
    %92 = vector.extract_strided_slice %91 {offsets = [0, 0, 0, 0], sizes = [1, 8, 8, 32], strides = [1, 1, 1, 1]} : vector<1x10x10x32xf32> to vector<1x8x8x32xf32>
    %93 = vector.extract_strided_slice %91 {offsets = [0, 0, 1, 0], sizes = [1, 8, 8, 32], strides = [1, 1, 1, 1]} : vector<1x10x10x32xf32> to vector<1x8x8x32xf32>
    %94 = vector.extract_strided_slice %91 {offsets = [0, 0, 2, 0], sizes = [1, 8, 8, 32], strides = [1, 1, 1, 1]} : vector<1x10x10x32xf32> to vector<1x8x8x32xf32>
    %95 = vector.extract_strided_slice %91 {offsets = [0, 1, 0, 0], sizes = [1, 8, 8, 32], strides = [1, 1, 1, 1]} : vector<1x10x10x32xf32> to vector<1x8x8x32xf32>
    %96 = vector.extract_strided_slice %91 {offsets = [0, 1, 1, 0], sizes = [1, 8, 8, 32], strides = [1, 1, 1, 1]} : vector<1x10x10x32xf32> to vector<1x8x8x32xf32>
    %97 = vector.extract_strided_slice %91 {offsets = [0, 1, 2, 0], sizes = [1, 8, 8, 32], strides = [1, 1, 1, 1]} : vector<1x10x10x32xf32> to vector<1x8x8x32xf32>
    %98 = vector.extract_strided_slice %91 {offsets = [0, 2, 0, 0], sizes = [1, 8, 8, 32], strides = [1, 1, 1, 1]} : vector<1x10x10x32xf32> to vector<1x8x8x32xf32>
    %99 = vector.extract_strided_slice %91 {offsets = [0, 2, 1, 0], sizes = [1, 8, 8, 32], strides = [1, 1, 1, 1]} : vector<1x10x10x32xf32> to vector<1x8x8x32xf32>
    %100 = vector.extract_strided_slice %91 {offsets = [0, 2, 2, 0], sizes = [1, 8, 8, 32], strides = [1, 1, 1, 1]} : vector<1x10x10x32xf32> to vector<1x8x8x32xf32>
    %101 = tpu.concatenate %92, %93, %94, %95, %96, %97, %98, %99, %100 in 3 : vector<1x8x8x32xf32>, vector<1x8x8x32xf32>, vector<1x8x8x32xf32>, vector<1x8x8x32xf32>, vector<1x8x8x32xf32>, vector<1x8x8x32xf32>, vector<1x8x8x32xf32>, vector<1x8x8x32xf32>, vector<1x8x8x32xf32> -> vector<1x8x8x288xf32>
    %102 = vector.shape_cast %101 : vector<1x8x8x288xf32> to vector<64x288xf32>
    %cst_86 = arith.constant dense<0.000000e+00> : vector<64x64xf32>
    %103 = tpu.matmul %102, %10, %cst_86 {dimension_numbers = #tpu.dot_dimension_numbers<[1], [0], [0], [1], [0, 0, 1, 1], [], []>} : vector<64x288xf32>, vector<288x64xf32>, vector<64x64xf32> -> vector<64x64xf32>
    %104 = vector.broadcast %11 : vector<1x64xf32> to vector<64x64xf32>
    %105 = arith.addf %103, %104 : vector<64x64xf32>
    %106 = vector.shape_cast %105 : vector<64x64xf32> to vector<1x8x8x64xf32>
    %cst_87 = arith.constant 0.000000e+00 : f32
    %107 = vector.broadcast %cst_87 : f32 to vector<1x8x8x64xf32>
    %108 = arith.maximumf %106, %107 : vector<1x8x8x64xf32>
    %c0_88 = arith.constant 0 : index
    %c1_89 = arith.constant 1 : index
    %c1_90 = arith.constant 1 : index
    %c0_91 = arith.constant 0 : index
    %109 = vector.load %arg19[%c0_88, %c1_89, %c1_90, %c0_91] : memref<1x10x10x64xf32, #tpu.memory_space<vmem>>, vector<1x8x8x64xf32>
    tpu.vector_store %arg19[%c0_88, %c1_89, %c1_90, %c0_91], %108 {strides = array<i32>} : memref<1x10x10x64xf32, #tpu.memory_space<vmem>>, vector<1x8x8x64xf32>,
    %c0_92 = arith.constant 0 : index
    %c0_93 = arith.constant 0 : index
    %c0_94 = arith.constant 0 : index
    %c0_95 = arith.constant 0 : index
    %110 = vector.load %arg19[%c0_92, %c0_93, %c0_94, %c0_95] : memref<1x10x10x64xf32, #tpu.memory_space<vmem>>, vector<1x10x10x64xf32>
    %111 = vector.extract_strided_slice %110 {offsets = [0, 0, 0, 0], sizes = [1, 8, 8, 64], strides = [1, 1, 1, 1]} : vector<1x10x10x64xf32> to vector<1x8x8x64xf32>
    %112 = vector.extract_strided_slice %110 {offsets = [0, 0, 1, 0], sizes = [1, 8, 8, 64], strides = [1, 1, 1, 1]} : vector<1x10x10x64xf32> to vector<1x8x8x64xf32>
    %113 = vector.extract_strided_slice %110 {offsets = [0, 0, 2, 0], sizes = [1, 8, 8, 64], strides = [1, 1, 1, 1]} : vector<1x10x10x64xf32> to vector<1x8x8x64xf32>
    %114 = vector.extract_strided_slice %110 {offsets = [0, 1, 0, 0], sizes = [1, 8, 8, 64], strides = [1, 1, 1, 1]} : vector<1x10x10x64xf32> to vector<1x8x8x64xf32>
    %115 = vector.extract_strided_slice %110 {offsets = [0, 1, 1, 0], sizes = [1, 8, 8, 64], strides = [1, 1, 1, 1]} : vector<1x10x10x64xf32> to vector<1x8x8x64xf32>
    %116 = vector.extract_strided_slice %110 {offsets = [0, 1, 2, 0], sizes = [1, 8, 8, 64], strides = [1, 1, 1, 1]} : vector<1x10x10x64xf32> to vector<1x8x8x64xf32>
    %117 = vector.extract_strided_slice %110 {offsets = [0, 2, 0, 0], sizes = [1, 8, 8, 64], strides = [1, 1, 1, 1]} : vector<1x10x10x64xf32> to vector<1x8x8x64xf32>
    %118 = vector.extract_strided_slice %110 {offsets = [0, 2, 1, 0], sizes = [1, 8, 8, 64], strides = [1, 1, 1, 1]} : vector<1x10x10x64xf32> to vector<1x8x8x64xf32>
    %119 = vector.extract_strided_slice %110 {offsets = [0, 2, 2, 0], sizes = [1, 8, 8, 64], strides = [1, 1, 1, 1]} : vector<1x10x10x64xf32> to vector<1x8x8x64xf32>
    %120 = tpu.concatenate %111, %112, %113, %114, %115, %116, %117, %118, %119 in 3 : vector<1x8x8x64xf32>, vector<1x8x8x64xf32>, vector<1x8x8x64xf32>, vector<1x8x8x64xf32>, vector<1x8x8x64xf32>, vector<1x8x8x64xf32>, vector<1x8x8x64xf32>, vector<1x8x8x64xf32>, vector<1x8x8x64xf32> -> vector<1x8x8x576xf32>
    %121 = vector.shape_cast %120 : vector<1x8x8x576xf32> to vector<64x576xf32>
    %cst_96 = arith.constant dense<0.000000e+00> : vector<64x48xf32>
    %122 = tpu.matmul %121, %12, %cst_96 {dimension_numbers = #tpu.dot_dimension_numbers<[1], [0], [0], [1], [0, 0, 1, 1], [], []>} : vector<64x576xf32>, vector<576x48xf32>, vector<64x48xf32> -> vector<64x48xf32>
    %123 = vector.broadcast %13 : vector<1x48xf32> to vector<64x48xf32>
    %124 = arith.addf %122, %123 : vector<64x48xf32>
    %125 = vector.shape_cast %124 : vector<64x48xf32> to vector<1x8x8x48xf32>
    %c0_97 = arith.constant 0 : index
    %c0_98 = arith.constant 0 : index
    %c0_99 = arith.constant 0 : index
    %c0_100 = arith.constant 0 : index
    %126 = vector.load %arg16[%c0_97, %c0_98, %c0_99, %c0_100] : memref<1x8x8x48xf32, #tpu.memory_space<vmem>>, vector<1x8x8x48xf32>
    tpu.vector_store %arg16[%c0_97, %c0_98, %c0_99, %c0_100], %125 {strides = array<i32>} : memref<1x8x8x48xf32, #tpu.memory_space<vmem>>, vector<1x8x8x48xf32>,
    return
  }
  func.func @transform_0(%arg0: i32) -> (i32, i32, i32, i32) {
    %c0_i32 = arith.constant 0 : i32
    %c0_i32_0 = arith.constant 0 : i32
    %c0_i32_1 = arith.constant 0 : i32
    %c0_i32_2 = arith.constant 0 : i32
    return %arg0, %c0_i32, %c0_i32_0, %c0_i32_1 : i32, i32, i32, i32
  }
  func.func @transform_1(%arg0: i32) -> (i32, i32) {
    %c0_i32 = arith.constant 0 : i32
    %c0_i32_0 = arith.constant 0 : i32
    %c0_i32_1 = arith.constant 0 : i32
    return %c0_i32, %c0_i32_0 : i32, i32
  }
  func.func @transform_2(%arg0: i32) -> (i32, i32) {
    %c0_i32 = arith.constant 0 : i32
    %c0_i32_0 = arith.constant 0 : i32
    %c0_i32_1 = arith.constant 0 : i32
    return %c0_i32, %c0_i32_0 : i32, i32
  }
  func.func @transform_3(%arg0: i32) -> (i32, i32) {
    %c0_i32 = arith.constant 0 : i32
    %c0_i32_0 = arith.constant 0 : i32
    %c0_i32_1 = arith.constant 0 : i32
    return %c0_i32, %c0_i32_0 : i32, i32
  }
  func.func @transform_4(%arg0: i32) -> (i32, i32) {
    %c0_i32 = arith.constant 0 : i32
    %c0_i32_0 = arith.constant 0 : i32
    %c0_i32_1 = arith.constant 0 : i32
    return %c0_i32, %c0_i32_0 : i32, i32
  }
  func.func @transform_5(%arg0: i32) -> (i32, i32) {
    %c0_i32 = arith.constant 0 : i32
    %c0_i32_0 = arith.constant 0 : i32
    %c0_i32_1 = arith.constant 0 : i32
    return %c0_i32, %c0_i32_0 : i32, i32
  }
  func.func @transform_6(%arg0: i32) -> (i32, i32) {
    %c0_i32 = arith.constant 0 : i32
    %c0_i32_0 = arith.constant 0 : i32
    %c0_i32_1 = arith.constant 0 : i32
    return %c0_i32, %c0_i32_0 : i32, i32
  }
  func.func @transform_7(%arg0: i32) -> (i32, i32) {
    %c0_i32 = arith.constant 0 : i32
    %c0_i32_0 = arith.constant 0 : i32
    %c0_i32_1 = arith.constant 0 : i32
    return %c0_i32, %c0_i32_0 : i32, i32
  }
  func.func @transform_8(%arg0: i32) -> (i32, i32) {
    %c0_i32 = arith.constant 0 : i32
    %c0_i32_0 = arith.constant 0 : i32
    %c0_i32_1 = arith.constant 0 : i32
    return %c0_i32, %c0_i32_0 : i32, i32
  }
  func.func @transform_9(%arg0: i32) -> (i32, i32) {
    %c0_i32 = arith.constant 0 : i32
    %c0_i32_0 = arith.constant 0 : i32
    %c0_i32_1 = arith.constant 0 : i32
    return %c0_i32, %c0_i32_0 : i32, i32
  }
  func.func @transform_10(%arg0: i32) -> (i32, i32) {
    %c0_i32 = arith.constant 0 : i32
    %c0_i32_0 = arith.constant 0 : i32
    %c0_i32_1 = arith.constant 0 : i32
    return %c0_i32, %c0_i32_0 : i32, i32
  }
  func.func @transform_11(%arg0: i32) -> (i32, i32) {
    %c0_i32 = arith.constant 0 : i32
    %c0_i32_0 = arith.constant 0 : i32
    %c0_i32_1 = arith.constant 0 : i32
    return %c0_i32, %c0_i32_0 : i32, i32
  }
  func.func @transform_12(%arg0: i32) -> (i32, i32) {
    %c0_i32 = arith.constant 0 : i32
    %c0_i32_0 = arith.constant 0 : i32
    %c0_i32_1 = arith.constant 0 : i32
    return %c0_i32, %c0_i32_0 : i32, i32
  }
  func.func @transform_13(%arg0: i32) -> (i32, i32) {
    %c0_i32 = arith.constant 0 : i32
    %c0_i32_0 = arith.constant 0 : i32
    %c0_i32_1 = arith.constant 0 : i32
    return %c0_i32, %c0_i32_0 : i32, i32
  }
  func.func @transform_14(%arg0: i32) -> (i32, i32) {
    %c0_i32 = arith.constant 0 : i32
    %c0_i32_0 = arith.constant 0 : i32
    %c0_i32_1 = arith.constant 0 : i32
    return %c0_i32, %c0_i32_0 : i32, i32
  }
  func.func @transform_15(%arg0: i32) -> (i32, i32, i32, i32) {
    %c0_i32 = arith.constant 0 : i32
    %c0_i32_0 = arith.constant 0 : i32
    %c0_i32_1 = arith.constant 0 : i32
    %c0_i32_2 = arith.constant 0 : i32
    return %arg0, %c0_i32, %c0_i32_0, %c0_i32_1 : i32, i32, i32, i32
  }
}

</mosaic_0001>

<llo_original>
// kernel: decoder_forward.1
$region0: #{decoder_forward.1}
  #allocation0 [shape = 'u32[]', space=smem, size = 0x4, offset = 0x4, fixed_abs, tag = 'smem constant byte address 0x4 - core index']
  #allocation1 [shape = 'u32[144,128]{1,0:T(1,128)}', space=vmem, size = 0x12000, scoped, tag = 'internal scratch']
  #allocation2 [shape = 'f32[1,10,10,4]{3,2,1,0:T(8,128)}', space=vmem, size = 0x14000, scoped, tag = 'scratch operand']
  #allocation3 [shape = 'f32[1,10,10,32]{3,2,1,0:T(8,128)}', space=vmem, size = 0x14000, scoped, tag = 'scratch operand']
  #allocation4 [shape = 'f32[1,10,10,64]{3,2,1,0:T(8,128)}', space=vmem, size = 0x14000, scoped, tag = 'scratch operand']
  %s0 = inlined_call_operand.vmem [shape: f32[2,8,8,4], index: 0, kind: input, shape index: {}]
  %s1 = inlined_call_operand.vmem [shape: f32[36,32], index: 1, kind: input, shape index: {}]
  %s2 = inlined_call_operand.vmem [shape: f32[1,32], index: 2, kind: input, shape index: {}]
  %s3 = inlined_call_operand.vmem [shape: f32[288,8], index: 3, kind: input, shape index: {}]
  %s4 = inlined_call_operand.vmem [shape: f32[1,8], index: 4, kind: input, shape index: {}]
  %s5 = inlined_call_operand.vmem [shape: f32[8,32], index: 5, kind: input, shape index: {}]
  %s6 = inlined_call_operand.vmem [shape: f32[1,32], index: 6, kind: input, shape index: {}]
  %s7 = inlined_call_operand.vmem [shape: f32[288,8], index: 7, kind: input, shape index: {}]
  %s8 = inlined_call_operand.vmem [shape: f32[1,8], index: 8, kind: input, shape index: {}]
  %s9 = inlined_call_operand.vmem [shape: f32[8,32], index: 9, kind: input, shape index: {}]
  %s10 = inlined_call_operand.vmem [shape: f32[1,32], index: 10, kind: input, shape index: {}]
  %s11 = inlined_call_operand.vmem [shape: f32[288,64], index: 11, kind: input, shape index: {}]
  %s12 = inlined_call_operand.vmem [shape: f32[1,64], index: 12, kind: input, shape index: {}]
  %s13 = inlined_call_operand.vmem [shape: f32[576,48], index: 13, kind: input, shape index: {}]
  %s14 = inlined_call_operand.vmem [shape: f32[1,48], index: 14, kind: input, shape index: {}]
  %s15 = inlined_call_operand.vmem [shape: f32[2,8,8,48], index: 15, kind: output, shape index: {}]
  %s16 = sld [smem:[#allocation0]]
  $region93: #{decoder_forward.1} parent=0
    _
  %s18 = ssub.s32 1, %s16
  %s19 = scalar_select 0, %s18, %s16
  loop: start=0, step=1, limit=4
  $region2: #{decoder_forward.1} parent=0 // loop_pre_header
    _
  $region3: #{decoder_forward.1} parent=0 // loop_header
    %s21 = sphi 0, %s25
    %p22 = scmp.ge.s32.totalorder %s21, 4
    %s31 = sphi 0, %s33
    %s34 = sphi 0, %s31
    %s35 = sphi 0, %s34
    %s51 = sphi 0, %s35
    %s55 = sphi 0, %s55
    %s57 = sphi 0, %s55
    %s58 = sphi 0, %s57
    %s72 = sphi 0, %s58
    %s76 = sphi 0, %s76
    %s78 = sphi 0, %s76
    %s79 = sphi 0, %s78
    %s93 = sphi 0, %s79
    %s97 = sphi 0, %s97
    %s99 = sphi 0, %s97
    %s100 = sphi 0, %s99
    %s114 = sphi 0, %s100
    %s118 = sphi 0, %s118
    %s120 = sphi 0, %s118
    %s121 = sphi 0, %s120
    %s135 = sphi 0, %s121
    %s139 = sphi 0, %s139
    %s141 = sphi 0, %s139
    %s142 = sphi 0, %s141
    %s156 = sphi 0, %s142
    %s160 = sphi 0, %s160
    %s162 = sphi 0, %s160
    %s163 = sphi 0, %s162
    %s177 = sphi 0, %s163
    %s181 = sphi 0, %s181
    %s183 = sphi 0, %s181
    %s184 = sphi 0, %s183
    %s198 = sphi 0, %s184
    %s202 = sphi 0, %s202
    %s204 = sphi 0, %s202
    %s205 = sphi 0, %s204
    %s219 = sphi 0, %s205
    %s223 = sphi 0, %s223
    %s225 = sphi 0, %s223
    %s226 = sphi 0, %s225
    %s240 = sphi 0, %s226
    %s244 = sphi 0, %s244
    %s246 = sphi 0, %s244
    %s247 = sphi 0, %s246
    %s261 = sphi 0, %s247
    %s265 = sphi 0, %s265
    %s267 = sphi 0, %s265
    %s268 = sphi 0, %s267
    %s282 = sphi 0, %s268
    %s286 = sphi 0, %s286
    %s288 = sphi 0, %s286
    %s289 = sphi 0, %s288
    %s303 = sphi 0, %s289
    %s307 = sphi 0, %s307
    %s309 = sphi 0, %s307
    %s310 = sphi 0, %s309
    %s324 = sphi 0, %s310
    %s328 = sphi 0, %s328
    %s330 = sphi 0, %s328
    %s331 = sphi 0, %s330
    %s345 = sphi 0, %s331
    %s351 = sphi 0, %s353
    %s354 = sphi 0, %s351
    %s355 = sphi 0, %s354
    %s371 = sphi 0, %s355
  $region4: #{decoder_forward.1} parent=0 // loop_header_branch
    %24 = sbr.rel (%p22) target = $region8
  $region5: #{decoder_forward.1} parent=0 // loop_body
    %s26 = ssub.s32 %s21, 1
    %s27 = ssub.s32 %s21, 2
    %s28 = sadd.s32 %s21, 1
    %s29 = ssub.s32 %s21, %s28
    %p30 = scmp.eq.s32.totalorder %s29, 0
    %s32 = sadd.s32 %s31, 1
    %s33 = scalar_select %p30, %s31, %s32
    %p36 = pneg %p30
    %p37 = scmp.eq.s32.totalorder %s21, 1
    %p38 = por %p36, %p37
    %p39 = scmp.ne.s32.totalorder %s31, %s34
    %p40 = scmp.eq.s32.totalorder %s21, 0
    %p41 = por %p39, %p40
    %p42 = scmp.ne.s32.totalorder %s31, %s34
    %p43 = scmp.eq.s32.totalorder %s26, 1
    %p44 = por %p42, %p43
    %p45 = scmp.ne.s32.totalorder %s34, %s35
    %p46 = scmp.eq.s32.totalorder %s26, 0
    %p47 = por %p45, %p46
    %p48 = scmp.ne.s32.totalorder %s34, %s35
    %p49 = scmp.eq.s32.totalorder %s27, 1
    %p50 = por %p48, %p49
    %p52 = scmp.ne.s32.totalorder %s35, %s51
    %p53 = scmp.eq.s32.totalorder %s27, 0
    %p54 = por %p52, %p53
    %s56 = sadd.s32 %s55, 1
    %p59 = scmp.eq.s32.totalorder %s21, 1
    %p60 = scmp.ne.s32.totalorder %s55, %s57
    %p61 = scmp.eq.s32.totalorder %s21, 0
    %p62 = por %p60, %p61
    %p63 = scmp.ne.s32.totalorder %s55, %s57
    %p64 = scmp.eq.s32.totalorder %s26, 1
    %p65 = por %p63, %p64
    %p66 = scmp.ne.s32.totalorder %s57, %s58
    %p67 = scmp.eq.s32.totalorder %s26, 0
    %p68 = por %p66, %p67
    %p69 = scmp.ne.s32.totalorder %s57, %s58
    %p70 = scmp.eq.s32.totalorder %s27, 1
    %p71 = por %p69, %p70
    %p73 = scmp.ne.s32.totalorder %s58, %s72
    %p74 = scmp.eq.s32.totalorder %s27, 0
    %p75 = por %p73, %p74
    %s77 = sadd.s32 %s76, 1
    %p80 = scmp.eq.s32.totalorder %s21, 1
    %p81 = scmp.ne.s32.totalorder %s76, %s78
    %p82 = scmp.eq.s32.totalorder %s21, 0
    %p83 = por %p81, %p82
    %p84 = scmp.ne.s32.totalorder %s76, %s78
    %p85 = scmp.eq.s32.totalorder %s26, 1
    %p86 = por %p84, %p85
    %p87 = scmp.ne.s32.totalorder %s78, %s79
    %p88 = scmp.eq.s32.totalorder %s26, 0
    %p89 = por %p87, %p88
    %p90 = scmp.ne.s32.totalorder %s78, %s79
    %p91 = scmp.eq.s32.totalorder %s27, 1
    %p92 = por %p90, %p91
    %p94 = scmp.ne.s32.totalorder %s79, %s93
    %p95 = scmp.eq.s32.totalorder %s27, 0
    %p96 = por %p94, %p95
    %s98 = sadd.s32 %s97, 1
    %p101 = scmp.eq.s32.totalorder %s21, 1
    %p102 = scmp.ne.s32.totalorder %s97, %s99
    %p103 = scmp.eq.s32.totalorder %s21, 0
    %p104 = por %p102, %p103
    %p105 = scmp.ne.s32.totalorder %s97, %s99
    %p106 = scmp.eq.s32.totalorder %s26, 1
    %p107 = por %p105, %p106
    %p108 = scmp.ne.s32.totalorder %s99, %s100
    %p109 = scmp.eq.s32.totalorder %s26, 0
    %p110 = por %p108, %p109
    %p111 = scmp.ne.s32.totalorder %s99, %s100
    %p112 = scmp.eq.s32.totalorder %s27, 1
    %p113 = por %p111, %p112
    %p115 = scmp.ne.s32.totalorder %s100, %s114
    %p116 = scmp.eq.s32.totalorder %s27, 0
    %p117 = por %p115, %p116
    %s119 = sadd.s32 %s118, 1
    %p122 = scmp.eq.s32.totalorder %s21, 1
    %p123 = scmp.ne.s32.totalorder %s118, %s120
    %p124 = scmp.eq.s32.totalorder %s21, 0
    %p125 = por %p123, %p124
    %p126 = scmp.ne.s32.totalorder %s118, %s120
    %p127 = scmp.eq.s32.totalorder %s26, 1
    %p128 = por %p126, %p127
    %p129 = scmp.ne.s32.totalorder %s120, %s121
    %p130 = scmp.eq.s32.totalorder %s26, 0
    %p131 = por %p129, %p130
    %p132 = scmp.ne.s32.totalorder %s120, %s121
    %p133 = scmp.eq.s32.totalorder %s27, 1
    %p134 = por %p132, %p133
    %p136 = scmp.ne.s32.totalorder %s121, %s135
    %p137 = scmp.eq.s32.totalorder %s27, 0
    %p138 = por %p136, %p137
    %s140 = sadd.s32 %s139, 1
    %p143 = scmp.eq.s32.totalorder %s21, 1
    %p144 = scmp.ne.s32.totalorder %s139, %s141
    %p145 = scmp.eq.s32.totalorder %s21, 0
    %p146 = por %p144, %p145
    %p147 = scmp.ne.s32.totalorder %s139, %s141
    %p148 = scmp.eq.s32.totalorder %s26, 1
    %p149 = por %p147, %p148
    %p150 = scmp.ne.s32.totalorder %s141, %s142
    %p151 = scmp.eq.s32.totalorder %s26, 0
    %p152 = por %p150, %p151
    %p153 = scmp.ne.s32.totalorder %s141, %s142
    %p154 = scmp.eq.s32.totalorder %s27, 1
    %p155 = por %p153, %p154
    %p157 = scmp.ne.s32.totalorder %s142, %s156
    %p158 = scmp.eq.s32.totalorder %s27, 0
    %p159 = por %p157, %p158
    %s161 = sadd.s32 %s160, 1
    %p164 = scmp.eq.s32.totalorder %s21, 1
    %p165 = scmp.ne.s32.totalorder %s160, %s162
    %p166 = scmp.eq.s32.totalorder %s21, 0
    %p167 = por %p165, %p166
    %p168 = scmp.ne.s32.totalorder %s160, %s162
    %p169 = scmp.eq.s32.totalorder %s26, 1
    %p170 = por %p168, %p169
    %p171 = scmp.ne.s32.totalorder %s162, %s163
    %p172 = scmp.eq.s32.totalorder %s26, 0
    %p173 = por %p171, %p172
    %p174 = scmp.ne.s32.totalorder %s162, %s163
    %p175 = scmp.eq.s32.totalorder %s27, 1
    %p176 = por %p174, %p175
    %p178 = scmp.ne.s32.totalorder %s163, %s177
    %p179 = scmp.eq.s32.totalorder %s27, 0
    %p180 = por %p178, %p179
    %s182 = sadd.s32 %s181, 1
    %p185 = scmp.eq.s32.totalorder %s21, 1
    %p186 = scmp.ne.s32.totalorder %s181, %s183
    %p187 = scmp.eq.s32.totalorder %s21, 0
    %p188 = por %p186, %p187
    %p189 = scmp.ne.s32.totalorder %s181, %s183
    %p190 = scmp.eq.s32.totalorder %s26, 1
    %p191 = por %p189, %p190
    %p192 = scmp.ne.s32.totalorder %s183, %s184
    %p193 = scmp.eq.s32.totalorder %s26, 0
    %p194 = por %p192, %p193
    %p195 = scmp.ne.s32.totalorder %s183, %s184
    %p196 = scmp.eq.s32.totalorder %s27, 1
    %p197 = por %p195, %p196
    %p199 = scmp.ne.s32.totalorder %s184, %s198
    %p200 = scmp.eq.s32.totalorder %s27, 0
    %p201 = por %p199, %p200
    %s203 = sadd.s32 %s202, 1
    %p206 = scmp.eq.s32.totalorder %s21, 1
    %p207 = scmp.ne.s32.totalorder %s202, %s204
    %p208 = scmp.eq.s32.totalorder %s21, 0
    %p209 = por %p207, %p208
    %p210 = scmp.ne.s32.totalorder %s202, %s204
    %p211 = scmp.eq.s32.totalorder %s26, 1
    %p212 = por %p210, %p211
    %p213 = scmp.ne.s32.totalorder %s204, %s205
    %p214 = scmp.eq.s32.totalorder %s26, 0
    %p215 = por %p213, %p214
    %p216 = scmp.ne.s32.totalorder %s204, %s205
    %p217 = scmp.eq.s32.totalorder %s27, 1
    %p218 = por %p216, %p217
    %p220 = scmp.ne.s32.totalorder %s205, %s219
    %p221 = scmp.eq.s32.totalorder %s27, 0
    %p222 = por %p220, %p221
    %s224 = sadd.s32 %s223, 1
    %p227 = scmp.eq.s32.totalorder %s21, 1
    %p228 = scmp.ne.s32.totalorder %s223, %s225
    %p229 = scmp.eq.s32.totalorder %s21, 0
    %p230 = por %p228, %p229
    %p231 = scmp.ne.s32.totalorder %s223, %s225
    %p232 = scmp.eq.s32.totalorder %s26, 1
    %p233 = por %p231, %p232
    %p234 = scmp.ne.s32.totalorder %s225, %s226
    %p235 = scmp.eq.s32.totalorder %s26, 0
    %p236 = por %p234, %p235
    %p237 = scmp.ne.s32.totalorder %s225, %s226
    %p238 = scmp.eq.s32.totalorder %s27, 1
    %p239 = por %p237, %p238
    %p241 = scmp.ne.s32.totalorder %s226, %s240
    %p242 = scmp.eq.s32.totalorder %s27, 0
    %p243 = por %p241, %p242
    %s245 = sadd.s32 %s244, 1
    %p248 = scmp.eq.s32.totalorder %s21, 1
    %p249 = scmp.ne.s32.totalorder %s244, %s246
    %p250 = scmp.eq.s32.totalorder %s21, 0
    %p251 = por %p249, %p250
    %p252 = scmp.ne.s32.totalorder %s244, %s246
    %p253 = scmp.eq.s32.totalorder %s26, 1
    %p254 = por %p252, %p253
    %p255 = scmp.ne.s32.totalorder %s246, %s247
    %p256 = scmp.eq.s32.totalorder %s26, 0
    %p257 = por %p255, %p256
    %p258 = scmp.ne.s32.totalorder %s246, %s247
    %p259 = scmp.eq.s32.totalorder %s27, 1
    %p260 = por %p258, %p259
    %p262 = scmp.ne.s32.totalorder %s247, %s261
    %p263 = scmp.eq.s32.totalorder %s27, 0
    %p264 = por %p262, %p263
    %s266 = sadd.s32 %s265, 1
    %p269 = scmp.eq.s32.totalorder %s21, 1
    %p270 = scmp.ne.s32.totalorder %s265, %s267
    %p271 = scmp.eq.s32.totalorder %s21, 0
    %p272 = por %p270, %p271
    %p273 = scmp.ne.s32.totalorder %s265, %s267
    %p274 = scmp.eq.s32.totalorder %s26, 1
    %p275 = por %p273, %p274
    %p276 = scmp.ne.s32.totalorder %s267, %s268
    %p277 = scmp.eq.s32.totalorder %s26, 0
    %p278 = por %p276, %p277
    %p279 = scmp.ne.s32.totalorder %s267, %s268
    %p280 = scmp.eq.s32.totalorder %s27, 1
    %p281 = por %p279, %p280
    %p283 = scmp.ne.s32.totalorder %s268, %s282
    %p284 = scmp.eq.s32.totalorder %s27, 0
    %p285 = por %p283, %p284
    %s287 = sadd.s32 %s286, 1
    %p290 = scmp.eq.s32.totalorder %s21, 1
    %p291 = scmp.ne.s32.totalorder %s286, %s288
    %p292 = scmp.eq.s32.totalorder %s21, 0
    %p293 = por %p291, %p292
    %p294 = scmp.ne.s32.totalorder %s286, %s288
    %p295 = scmp.eq.s32.totalorder %s26, 1
    %p296 = por %p294, %p295
    %p297 = scmp.ne.s32.totalorder %s288, %s289
    %p298 = scmp.eq.s32.totalorder %s26, 0
    %p299 = por %p297, %p298
    %p300 = scmp.ne.s32.totalorder %s288, %s289
    %p301 = scmp.eq.s32.totalorder %s27, 1
    %p302 = por %p300, %p301
    %p304 = scmp.ne.s32.totalorder %s289, %s303
    %p305 = scmp.eq.s32.totalorder %s27, 0
    %p306 = por %p304, %p305
    %s308 = sadd.s32 %s307, 1
    %p311 = scmp.eq.s32.totalorder %s21, 1
    %p312 = scmp.ne.s32.totalorder %s307, %s309
    %p313 = scmp.eq.s32.totalorder %s21, 0
    %p314 = por %p312, %p313
    %p315 = scmp.ne.s32.totalorder %s307, %s309
    %p316 = scmp.eq.s32.totalorder %s26, 1
    %p317 = por %p315, %p316
    %p318 = scmp.ne.s32.totalorder %s309, %s310
    %p319 = scmp.eq.s32.totalorder %s26, 0
    %p320 = por %p318, %p319
    %p321 = scmp.ne.s32.totalorder %s309, %s310
    %p322 = scmp.eq.s32.totalorder %s27, 1
    %p323 = por %p321, %p322
    %p325 = scmp.ne.s32.totalorder %s310, %s324
    %p326 = scmp.eq.s32.totalorder %s27, 0
    %p327 = por %p325, %p326
    %s329 = sadd.s32 %s328, 1
    %p332 = scmp.eq.s32.totalorder %s21, 1
    %p333 = scmp.ne.s32.totalorder %s328, %s330
    %p334 = scmp.eq.s32.totalorder %s21, 0
    %p335 = por %p333, %p334
    %p336 = scmp.ne.s32.totalorder %s328, %s330
    %p337 = scmp.eq.s32.totalorder %s26, 1
    %p338 = por %p336, %p337
    %p339 = scmp.ne.s32.totalorder %s330, %s331
    %p340 = scmp.eq.s32.totalorder %s26, 0
    %p341 = por %p339, %p340
    %p342 = scmp.ne.s32.totalorder %s330, %s331
    %p343 = scmp.eq.s32.totalorder %s27, 1
    %p344 = por %p342, %p343
    %p346 = scmp.ne.s32.totalorder %s331, %s345
    %p347 = scmp.eq.s32.totalorder %s27, 0
    %p348 = por %p346, %p347
    %s349 = ssub.s32 %s21, %s28
    %p350 = scmp.eq.s32.totalorder %s349, 0
    %s352 = sadd.s32 %s351, 1
    %s353 = scalar_select %p350, %s351, %s352
    %p356 = pneg %p350
    %p357 = scmp.eq.s32.totalorder %s21, 1
    %p358 = por %p356, %p357
    %p359 = scmp.ne.s32.totalorder %s351, %s354
    %p360 = scmp.eq.s32.totalorder %s21, 0
    %p361 = por %p359, %p360
    %p362 = scmp.ne.s32.totalorder %s351, %s354
    %p363 = scmp.eq.s32.totalorder %s26, 1
    %p364 = por %p362, %p363
    %p365 = scmp.ne.s32.totalorder %s354, %s355
    %p366 = scmp.eq.s32.totalorder %s26, 0
    %p367 = por %p365, %p366
    %p368 = scmp.ne.s32.totalorder %s354, %s355
    %p369 = scmp.eq.s32.totalorder %s27, 1
    %p370 = por %p368, %p369
    %p372 = scmp.ne.s32.totalorder %s355, %s371
    %p373 = scmp.eq.s32.totalorder %s27, 0
    %p374 = por %p372, %p373
    %p375 = scmp.le.s32.totalorder 1, %s21
    %p376 = scmp.lt.s32.totalorder %s21, 3
    %p377 = pnand %p375, %p376
    %p378 = pneg %p377
    // Predicated region
    $region9: #{decoder_forward.1} parent=5 // pred_check
      _
    $region10: #{decoder_forward.1} parent=5 // pred_check_branch
      %380 = sbr.rel (%p377) target = $region12
    $region11: #{decoder_forward.1} parent=5 // pred_region
      %s381 = ssub.s32 %s21, 1
      // Predicated region
      $region13: #{decoder_forward.1} parent=11 // pred_check
        %p382 = pneg %p68
      $region14: #{decoder_forward.1} parent=11 // pred_check_branch
        %384 = sbr.rel (%p382) target = $region16
      $region15: #{decoder_forward.1} parent=11 // pred_region
        _
      $region16: #{decoder_forward.1} parent=11 // pred_fallthru
        _
      // Predicated region
      $region17: #{decoder_forward.1} parent=11 // pred_check
        %p385 = pneg %p89
      $region18: #{decoder_forward.1} parent=11 // pred_check_branch
        %387 = sbr.rel (%p385) target = $region20
      $region19: #{decoder_forward.1} parent=11 // pred_region
        _
      $region20: #{decoder_forward.1} parent=11 // pred_fallthru
        _
      // Predicated region
      $region21: #{decoder_forward.1} parent=11 // pred_check
        %p388 = pneg %p110
      $region22: #{decoder_forward.1} parent=11 // pred_check_branch
        %390 = sbr.rel (%p388) target = $region24
      $region23: #{decoder_forward.1} parent=11 // pred_region
        _
      $region24: #{decoder_forward.1} parent=11 // pred_fallthru
        _
      // Predicated region
      $region25: #{decoder_forward.1} parent=11 // pred_check
        %p391 = pneg %p131
      $region26: #{decoder_forward.1} parent=11 // pred_check_branch
        %393 = sbr.rel (%p391) target = $region28
      $region27: #{decoder_forward.1} parent=11 // pred_region
        _
      $region28: #{decoder_forward.1} parent=11 // pred_fallthru
        _
      // Predicated region
      $region29: #{decoder_forward.1} parent=11 // pred_check
        %p394 = pneg %p152
      $region30: #{decoder_forward.1} parent=11 // pred_check_branch
        %396 = sbr.rel (%p394) target = $region32
      $region31: #{decoder_forward.1} parent=11 // pred_region
        _
      $region32: #{decoder_forward.1} parent=11 // pred_fallthru
        _
      // Predicated region
      $region33: #{decoder_forward.1} parent=11 // pred_check
        %p397 = pneg %p173
      $region34: #{decoder_forward.1} parent=11 // pred_check_branch
        %399 = sbr.rel (%p397) target = $region36
      $region35: #{decoder_forward.1} parent=11 // pred_region
        _
      $region36: #{decoder_forward.1} parent=11 // pred_fallthru
        _
      // Predicated region
      $region37: #{decoder_forward.1} parent=11 // pred_check
        %p400 = pneg %p194
      $region38: #{decoder_forward.1} parent=11 // pred_check_branch
        %402 = sbr.rel (%p400) target = $region40
      $region39: #{decoder_forward.1} parent=11 // pred_region
        _
      $region40: #{decoder_forward.1} parent=11 // pred_fallthru
        _
      // Predicated region
      $region41: #{decoder_forward.1} parent=11 // pred_check
        %p403 = pneg %p215
      $region42: #{decoder_forward.1} parent=11 // pred_check_branch
        %405 = sbr.rel (%p403) target = $region44
      $region43: #{decoder_forward.1} parent=11 // pred_region
        _
      $region44: #{decoder_forward.1} parent=11 // pred_fallthru
        _
      // Predicated region
      $region45: #{decoder_forward.1} parent=11 // pred_check
        %p406 = pneg %p236
      $region46: #{decoder_forward.1} parent=11 // pred_check_branch
        %408 = sbr.rel (%p406) target = $region48
      $region47: #{decoder_forward.1} parent=11 // pred_region
        _
      $region48: #{decoder_forward.1} parent=11 // pred_fallthru
        _
      // Predicated region
      $region49: #{decoder_forward.1} parent=11 // pred_check
        %p409 = pneg %p257
      $region50: #{decoder_forward.1} parent=11 // pred_check_branch
        %411 = sbr.rel (%p409) target = $region52
      $region51: #{decoder_forward.1} parent=11 // pred_region
        _
      $region52: #{decoder_forward.1} parent=11 // pred_fallthru
        _
      // Predicated region
      $region53: #{decoder_forward.1} parent=11 // pred_check
        %p412 = pneg %p278
      $region54: #{decoder_forward.1} parent=11 // pred_check_branch
        %414 = sbr.rel (%p412) target = $region56
      $region55: #{decoder_forward.1} parent=11 // pred_region
        _
      $region56: #{decoder_forward.1} parent=11 // pred_fallthru
        _
      // Predicated region
      $region57: #{decoder_forward.1} parent=11 // pred_check
        %p415 = pneg %p299
      $region58: #{decoder_forward.1} parent=11 // pred_check_branch
        %417 = sbr.rel (%p415) target = $region60
      $region59: #{decoder_forward.1} parent=11 // pred_region
        _
      $region60: #{decoder_forward.1} parent=11 // pred_fallthru
        _
      // Predicated region
      $region61: #{decoder_forward.1} parent=11 // pred_check
        %p418 = pneg %p320
      $region62: #{decoder_forward.1} parent=11 // pred_check_branch
        %420 = sbr.rel (%p418) target = $region64
      $region63: #{decoder_forward.1} parent=11 // pred_region
        _
      $region64: #{decoder_forward.1} parent=11 // pred_fallthru
        _
      // Predicated region
      $region65: #{decoder_forward.1} parent=11 // pred_check
        %p421 = pneg %p341
      $region66: #{decoder_forward.1} parent=11 // pred_check_branch
        %423 = sbr.rel (%p421) target = $region68
      $region67: #{decoder_forward.1} parent=11 // pred_region
        _
      $region68: #{decoder_forward.1} parent=11 // pred_fallthru
        _
    $region12: #{decoder_forward.1} parent=5 // pred_fallthru
      _
    %p424 = scmp.lt.s32.totalorder %s21, 2
    // Predicated region
    $region69: #{decoder_forward.1} parent=5 // pred_check
      %p425 = pneg %p424
    $region70: #{decoder_forward.1} parent=5 // pred_check_branch
      %427 = sbr.rel (%p425) target = $region72
    $region71: #{decoder_forward.1} parent=5 // pred_region
      // Predicated region
      $region73: #{decoder_forward.1} parent=71 // pred_check
        %p428 = pneg %p41
      $region74: #{decoder_forward.1} parent=71 // pred_check_branch
        %430 = sbr.rel (%p428) target = $region76
      $region75: #{decoder_forward.1} parent=71 // pred_region
        %p431 = scmp.lt.s32.totalorder %s21, 1
        %s432 = scalar_select %p431, %s21, 1
        %s433 = smul.addr %s432, 8
        %s434 = smul.addr %s433, 8
        %s435 = scalar_lea.vmem %s0, %s434
      $region76: #{decoder_forward.1} parent=71 // pred_fallthru
        _
    $region72: #{decoder_forward.1} parent=5 // pred_fallthru
      _
    %p436 = scmp.le.s32.totalorder 1, %s21
    %p437 = scmp.lt.s32.totalorder %s21, 3
    %p438 = pnand %p436, %p437
    %p439 = pneg %p438
    // Predicated region
    $region77: #{decoder_forward.1} parent=5 // pred_check
      _
    $region78: #{decoder_forward.1} parent=5 // pred_check_branch
      %441 = sbr.rel (%p438) target = $region80
    $region79: #{decoder_forward.1} parent=5 // pred_region
      %s442 = ssub.s32 %s21, 1
      %p443 = scmp.lt.s32.totalorder %s26, 1
      %s444 = scalar_select %p443, %s26, 1
      %s445 = smul.addr %s444, 8
      %s446 = smul.addr %s445, 8
      %s447 = scalar_lea.vmem %s0, %s446
      %p448 = pneg %p47
      %p449 = pneg %p44
      %p450 = pneg %p68
      %p451 = pneg %p65
      %p452 = pneg %p89
      %p453 = pneg %p86
      %p454 = pneg %p110
      %p455 = pneg %p107
      %p456 = pneg %p131
      %p457 = pneg %p128
      %p458 = pneg %p152
      %p459 = pneg %p149
      %p460 = pneg %p173
      %p461 = pneg %p170
      %p462 = pneg %p194
      %p463 = pneg %p191
      %p464 = pneg %p215
      %p465 = pneg %p212
      %p466 = pneg %p236
      %p467 = pneg %p233
      %p468 = pneg %p257
      %p469 = pneg %p254
      %p470 = pneg %p278
      %p471 = pneg %p275
      %p472 = pneg %p299
      %p473 = pneg %p296
      %p474 = pneg %p320
      %p475 = pneg %p317
      %p476 = pneg %p341
      %p477 = pneg %p338
      %p478 = pneg %p367
      %p479 = pneg %p364
      %p480 = scmp.lt.s32.totalorder %s26, 1
      %s481 = scalar_select %p480, %s26, 1
      %s482 = smul.addr %s481, 8
      %s483 = smul.addr %s482, 8
      %s484 = scalar_lea.vmem %s15, %s483
      %p485 = scmp.lt.s32.totalorder %s26, 1
      %s486 = scalar_select %p485, %s26, 1
      %s487 = smul.addr %s486, 8
      %s488 = smul.addr %s487, 8
      %s489 = scalar_lea.vmem %s0, %s488
      %p490 = scmp.lt.s32.totalorder %s26, 1
      %s491 = scalar_select %p490, %s26, 1
      %s492 = smul.addr %s491, 8
      %s493 = smul.addr %s492, 8
      %s494 = scalar_lea.vmem %s15, %s493
      %v495 = vld [vmem:[%s1] sm:$0xff]
      %v496 = vld [vmem:[%s1 + $0x8] sm:$0xff]
      %v497 = vld [vmem:[%s1 + $0x10] sm:$0xff]
      %v498 = vld [vmem:[%s1 + $0x18] sm:$0xff]
      %v499 = vld [vmem:[%s1 + $0x20] sm:$0xf]
      %v500 = vld [vmem:[%s2] sm:$0x1]
      %v501 = vld [vmem:[%s3] sm:$0xff]
      %v502 = vld [vmem:[%s3 + $0x8] sm:$0xff]
      %v503 = vld [vmem:[%s3 + $0x10] sm:$0xff]
      %v504 = vld [vmem:[%s3 + $0x18] sm:$0xff]
      %v505 = vld [vmem:[%s3 + $0x20] sm:$0xff]
      %v506 = vld [vmem:[%s3 + $0x28] sm:$0xff]
      %v507 = vld [vmem:[%s3 + $0x30] sm:$0xff]
      %v508 = vld [vmem:[%s3 + $0x38] sm:$0xff]
      %v509 = vld [vmem:[%s3 + $0x40] sm:$0xff]
      %v510 = vld [vmem:[%s3 + $0x48] sm:$0xff]
      %v511 = vld [vmem:[%s3 + $0x50] sm:$0xff]
      %v512 = vld [vmem:[%s3 + $0x58] sm:$0xff]
      %v513 = vld [vmem:[%s3 + $0x60] sm:$0xff]
      %v514 = vld [vmem:[%s3 + $0x68] sm:$0xff]
      %v515 = vld [vmem:[%s3 + $0x70] sm:$0xff]
      %v516 = vld [vmem:[%s3 + $0x78] sm:$0xff]
      %v517 = vld [vmem:[%s3 + $0x80] sm:$0xff]
      %v518 = vld [vmem:[%s3 + $0x88] sm:$0xff]
      %v519 = vld [vmem:[%s3 + $0x90] sm:$0xff]
      %v520 = vld [vmem:[%s3 + $0x98] sm:$0xff]
      %v521 = vld [vmem:[%s3 + $0xa0] sm:$0xff]
      %v522 = vld [vmem:[%s3 + $0xa8] sm:$0xff]
      %v523 = vld [vmem:[%s3 + $0xb0] sm:$0xff]
      %v524 = vld [vmem:[%s3 + $0xb8] sm:$0xff]
      %v525 = vld [vmem:[%s3 + $0xc0] sm:$0xff]
      %v526 = vld [vmem:[%s3 + $0xc8] sm:$0xff]
      %v527 = vld [vmem:[%s3 + $0xd0] sm:$0xff]
      %v528 = vld [vmem:[%s3 + $0xd8] sm:$0xff]
      %v529 = vld [vmem:[%s3 + $0xe0] sm:$0xff]
      %v530 = vld [vmem:[%s3 + $0xe8] sm:$0xff]
      %v531 = vld [vmem:[%s3 + $0xf0] sm:$0xff]
      %v532 = vld [vmem:[%s3 + $0xf8] sm:$0xff]
      %v533 = vld [vmem:[%s3 + $0x100] sm:$0xff]
      %v534 = vld [vmem:[%s3 + $0x108] sm:$0xff]
      %v535 = vld [vmem:[%s3 + $0x110] sm:$0xff]
      %v536 = vld [vmem:[%s3 + $0x118] sm:$0xff]
      %v537 = vld [vmem:[%s4] sm:$0x1]
      %v538 = vld [vmem:[%s5] sm:$0xff]
      %v539 = vld [vmem:[%s6] sm:$0x1]
      %v540 = vld [vmem:[%s7] sm:$0xff]
      %v541 = vld [vmem:[%s7 + $0x8] sm:$0xff]
      %v542 = vld [vmem:[%s7 + $0x10] sm:$0xff]
      %v543 = vld [vmem:[%s7 + $0x18] sm:$0xff]
      %v544 = vld [vmem:[%s7 + $0x20] sm:$0xff]
      %v545 = vld [vmem:[%s7 + $0x28] sm:$0xff]
      %v546 = vld [vmem:[%s7 + $0x30] sm:$0xff]
      %v547 = vld [vmem:[%s7 + $0x38] sm:$0xff]
      %v548 = vld [vmem:[%s7 + $0x40] sm:$0xff]
      %v549 = vld [vmem:[%s7 + $0x48] sm:$0xff]
      %v550 = vld [vmem:[%s7 + $0x50] sm:$0xff]
      %v551 = vld [vmem:[%s7 + $0x58] sm:$0xff]
      %v552 = vld [vmem:[%s7 + $0x60] sm:$0xff]
      %v553 = vld [vmem:[%s7 + $0x68] sm:$0xff]
      %v554 = vld [vmem:[%s7 + $0x70] sm:$0xff]
      %v555 = vld [vmem:[%s7 + $0x78] sm:$0xff]
      %v556 = vld [vmem:[%s7 + $0x80] sm:$0xff]
      %v557 = vld [vmem:[%s7 + $0x88] sm:$0xff]
      %v558 = vld [vmem:[%s7 + $0x90] sm:$0xff]
      %v559 = vld [vmem:[%s7 + $0x98] sm:$0xff]
      %v560 = vld [vmem:[%s7 + $0xa0] sm:$0xff]
      %v561 = vld [vmem:[%s7 + $0xa8] sm:$0xff]
      %v562 = vld [vmem:[%s7 + $0xb0] sm:$0xff]
      %v563 = vld [vmem:[%s7 + $0xb8] sm:$0xff]
      %v564 = vld [vmem:[%s7 + $0xc0] sm:$0xff]
      %v565 = vld [vmem:[%s7 + $0xc8] sm:$0xff]
      %v566 = vld [vmem:[%s7 + $0xd0] sm:$0xff]
      %v567 = vld [vmem:[%s7 + $0xd8] sm:$0xff]
      %v568 = vld [vmem:[%s7 + $0xe0] sm:$0xff]
      %v569 = vld [vmem:[%s7 + $0xe8] sm:$0xff]
      %v570 = vld [vmem:[%s7 + $0xf0] sm:$0xff]
      %v571 = vld [vmem:[%s7 + $0xf8] sm:$0xff]
      %v572 = vld [vmem:[%s7 + $0x100] sm:$0xff]
      %v573 = vld [vmem:[%s7 + $0x108] sm:$0xff]
      %v574 = vld [vmem:[%s7 + $0x110] sm:$0xff]
      %v575 = vld [vmem:[%s7 + $0x118] sm:$0xff]
      %v576 = vld [vmem:[%s8] sm:$0x1]
      %v577 = vld [vmem:[%s9] sm:$0xff]
      %v578 = vld [vmem:[%s10] sm:$0x1]
      %v579 = vld [vmem:[%s11] sm:$0xff]
      %v580 = vld [vmem:[%s11 + $0x8] sm:$0xff]
      %v581 = vld [vmem:[%s11 + $0x10] sm:$0xff]
      %v582 = vld [vmem:[%s11 + $0x18] sm:$0xff]
      %v583 = vld [vmem:[%s11 + $0x20] sm:$0xff]
      %v584 = vld [vmem:[%s11 + $0x28] sm:$0xff]
      %v585 = vld [vmem:[%s11 + $0x30] sm:$0xff]
      %v586 = vld [vmem:[%s11 + $0x38] sm:$0xff]
      %v587 = vld [vmem:[%s11 + $0x40] sm:$0xff]
      %v588 = vld [vmem:[%s11 + $0x48] sm:$0xff]
      %v589 = vld [vmem:[%s11 + $0x50] sm:$0xff]
      %v590 = vld [vmem:[%s11 + $0x58] sm:$0xff]
      %v591 = vld [vmem:[%s11 + $0x60] sm:$0xff]
      %v592 = vld [vmem:[%s11 + $0x68] sm:$0xff]
      %v593 = vld [vmem:[%s11 + $0x70] sm:$0xff]
      %v594 = vld [vmem:[%s11 + $0x78] sm:$0xff]
      %v595 = vld [vmem:[%s11 + $0x80] sm:$0xff]
      %v596 = vld [vmem:[%s11 + $0x88] sm:$0xff]
      %v597 = vld [vmem:[%s11 + $0x90] sm:$0xff]
      %v598 = vld [vmem:[%s11 + $0x98] sm:$0xff]
      %v599 = vld [vmem:[%s11 + $0xa0] sm:$0xff]
      %v600 = vld [vmem:[%s11 + $0xa8] sm:$0xff]
      %v601 = vld [vmem:[%s11 + $0xb0] sm:$0xff]
      %v602 = vld [vmem:[%s11 + $0xb8] sm:$0xff]
      %v603 = vld [vmem:[%s11 + $0xc0] sm:$0xff]
      %v604 = vld [vmem:[%s11 + $0xc8] sm:$0xff]
      %v605 = vld [vmem:[%s11 + $0xd0] sm:$0xff]
      %v606 = vld [vmem:[%s11 + $0xd8] sm:$0xff]
      %v607 = vld [vmem:[%s11 + $0xe0] sm:$0xff]
      %v608 = vld [vmem:[%s11 + $0xe8] sm:$0xff]
      %v609 = vld [vmem:[%s11 + $0xf0] sm:$0xff]
      %v610 = vld [vmem:[%s11 + $0xf8] sm:$0xff]
      %v611 = vld [vmem:[%s11 + $0x100] sm:$0xff]
      %v612 = vld [vmem:[%s11 + $0x108] sm:$0xff]
      %v613 = vld [vmem:[%s11 + $0x110] sm:$0xff]
      %v614 = vld [vmem:[%s11 + $0x118] sm:$0xff]
      %v615 = vld [vmem:[%s12] sm:$0x1]
      %v616 = vld [vmem:[%s13] sm:$0xff]
      %v617 = vld [vmem:[%s13 + $0x8] sm:$0xff]
      %v618 = vld [vmem:[%s13 + $0x10] sm:$0xff]
      %v619 = vld [vmem:[%s13 + $0x18] sm:$0xff]
      %v620 = vld [vmem:[%s13 + $0x20] sm:$0xff]
      %v621 = vld [vmem:[%s13 + $0x28] sm:$0xff]
      %v622 = vld [vmem:[%s13 + $0x30] sm:$0xff]
      %v623 = vld [vmem:[%s13 + $0x38] sm:$0xff]
      %v624 = vld [vmem:[%s13 + $0x40] sm:$0xff]
      %v625 = vld [vmem:[%s13 + $0x48] sm:$0xff]
      %v626 = vld [vmem:[%s13 + $0x50] sm:$0xff]
      %v627 = vld [vmem:[%s13 + $0x58] sm:$0xff]
      %v628 = vld [vmem:[%s13 + $0x60] sm:$0xff]
      %v629 = vld [vmem:[%s13 + $0x68] sm:$0xff]
      %v630 = vld [vmem:[%s13 + $0x70] sm:$0xff]
      %v631 = vld [vmem:[%s13 + $0x78] sm:$0xff]
      %v632 = vld [vmem:[%s13 + $0x80] sm:$0xff]
      %v633 = vld [vmem:[%s13 + $0x88] sm:$0xff]
      %v634 = vld [vmem:[%s13 + $0x90] sm:$0xff]
      %v635 = vld [vmem:[%s13 + $0x98] sm:$0xff]
      %v636 = vld [vmem:[%s13 + $0xa0] sm:$0xff]
      %v637 = vld [vmem:[%s13 + $0xa8] sm:$0xff]
      %v638 = vld [vmem:[%s13 + $0xb0] sm:$0xff]
      %v639 = vld [vmem:[%s13 + $0xb8] sm:$0xff]
      %v640 = vld [vmem:[%s13 + $0xc0] sm:$0xff]
      %v641 = vld [vmem:[%s13 + $0xc8] sm:$0xff]
      %v642 = vld [vmem:[%s13 + $0xd0] sm:$0xff]
      %v643 = vld [vmem:[%s13 + $0xd8] sm:$0xff]
      %v644 = vld [vmem:[%s13 + $0xe0] sm:$0xff]
      %v645 = vld [vmem:[%s13 + $0xe8] sm:$0xff]
      %v646 = vld [vmem:[%s13 + $0xf0] sm:$0xff]
      %v647 = vld [vmem:[%s13 + $0xf8] sm:$0xff]
      %v648 = vld [vmem:[%s13 + $0x100] sm:$0xff]
      %v649 = vld [vmem:[%s13 + $0x108] sm:$0xff]
      %v650 = vld [vmem:[%s13 + $0x110] sm:$0xff]
      %v651 = vld [vmem:[%s13 + $0x118] sm:$0xff]
      %v652 = vld [vmem:[%s13 + $0x120] sm:$0xff]
      %v653 = vld [vmem:[%s13 + $0x128] sm:$0xff]
      %v654 = vld [vmem:[%s13 + $0x130] sm:$0xff]
      %v655 = vld [vmem:[%s13 + $0x138] sm:$0xff]
      %v656 = vld [vmem:[%s13 + $0x140] sm:$0xff]
      %v657 = vld [vmem:[%s13 + $0x148] sm:$0xff]
      %v658 = vld [vmem:[%s13 + $0x150] sm:$0xff]
      %v659 = vld [vmem:[%s13 + $0x158] sm:$0xff]
      %v660 = vld [vmem:[%s13 + $0x160] sm:$0xff]
      %v661 = vld [vmem:[%s13 + $0x168] sm:$0xff]
      %v662 = vld [vmem:[%s13 + $0x170] sm:$0xff]
      %v663 = vld [vmem:[%s13 + $0x178] sm:$0xff]
      %v664 = vld [vmem:[%s13 + $0x180] sm:$0xff]
      %v665 = vld [vmem:[%s13 + $0x188] sm:$0xff]
      %v666 = vld [vmem:[%s13 + $0x190] sm:$0xff]
      %v667 = vld [vmem:[%s13 + $0x198] sm:$0xff]
      %v668 = vld [vmem:[%s13 + $0x1a0] sm:$0xff]
      %v669 = vld [vmem:[%s13 + $0x1a8] sm:$0xff]
      %v670 = vld [vmem:[%s13 + $0x1b0] sm:$0xff]
      %v671 = vld [vmem:[%s13 + $0x1b8] sm:$0xff]
      %v672 = vld [vmem:[%s13 + $0x1c0] sm:$0xff]
      %v673 = vld [vmem:[%s13 + $0x1c8] sm:$0xff]
      %v674 = vld [vmem:[%s13 + $0x1d0] sm:$0xff]
      %v675 = vld [vmem:[%s13 + $0x1d8] sm:$0xff]
      %v676 = vld [vmem:[%s13 + $0x1e0] sm:$0xff]
      %v677 = vld [vmem:[%s13 + $0x1e8] sm:$0xff]
      %v678 = vld [vmem:[%s13 + $0x1f0] sm:$0xff]
      %v679 = vld [vmem:[%s13 + $0x1f8] sm:$0xff]
      %v680 = vld [vmem:[%s13 + $0x200] sm:$0xff]
      %v681 = vld [vmem:[%s13 + $0x208] sm:$0xff]
      %v682 = vld [vmem:[%s13 + $0x210] sm:$0xff]
      %v683 = vld [vmem:[%s13 + $0x218] sm:$0xff]
      %v684 = vld [vmem:[%s13 + $0x220] sm:$0xff]
      %v685 = vld [vmem:[%s13 + $0x228] sm:$0xff]
      %v686 = vld [vmem:[%s13 + $0x230] sm:$0xff]
      %v687 = vld [vmem:[%s13 + $0x238] sm:$0xff]
      %v688 = vld [vmem:[%s14] sm:$0x1]
      %vm689 = vcmask 31744
      %690 = vst.msk [vmem:[#allocation2] sm:$0xff] %vm689, 0.0
      %vm691 = vcmask 25600
      %692 = vst.msk [vmem:[#allocation2 + $0x8] sm:$0x3] %vm691, 0.0
      %693 = vst.msk [vmem:[#allocation2 + $0x10] sm:$0xff] %vm689, 0.0
      %694 = vst.msk [vmem:[#allocation2 + $0x18] sm:$0x3] %vm691, 0.0
      %695 = vst.msk [vmem:[#allocation2 + $0x20] sm:$0xff] %vm689, 0.0
      %696 = vst.msk [vmem:[#allocation2 + $0x28] sm:$0x3] %vm691, 0.0
      %697 = vst.msk [vmem:[#allocation2 + $0x30] sm:$0xff] %vm689, 0.0
      %698 = vst.msk [vmem:[#allocation2 + $0x38] sm:$0x3] %vm691, 0.0
      %699 = vst.msk [vmem:[#allocation2 + $0x40] sm:$0xff] %vm689, 0.0
      %700 = vst.msk [vmem:[#allocation2 + $0x48] sm:$0x3] %vm691, 0.0
      %701 = vst.msk [vmem:[#allocation2 + $0x50] sm:$0xff] %vm689, 0.0
      %702 = vst.msk [vmem:[#allocation2 + $0x58] sm:$0x3] %vm691, 0.0
      %703 = vst.msk [vmem:[#allocation2 + $0x60] sm:$0xff] %vm689, 0.0
      %704 = vst.msk [vmem:[#allocation2 + $0x68] sm:$0x3] %vm691, 0.0
      %705 = vst.msk [vmem:[#allocation2 + $0x70] sm:$0xff] %vm689, 0.0
      %706 = vst.msk [vmem:[#allocation2 + $0x78] sm:$0x3] %vm691, 0.0
      %707 = vst.msk [vmem:[#allocation2 + $0x80] sm:$0xff] %vm689, 0.0
      %708 = vst.msk [vmem:[#allocation2 + $0x88] sm:$0x3] %vm691, 0.0
      %709 = vst.msk [vmem:[#allocation2 + $0x90] sm:$0xff] %vm689, 0.0
      %710 = vst.msk [vmem:[#allocation2 + $0x98] sm:$0x3] %vm691, 0.0
      %vm711 = vcmask 261120
      %712 = vst.msk [vmem:[#allocation3] sm:$0xff] %vm711, 0.0
      %vm713 = vcmask 254976
      %714 = vst.msk [vmem:[#allocation3 + $0x8] sm:$0x3] %vm713, 0.0
      %715 = vst.msk [vmem:[#allocation3 + $0x10] sm:$0xff] %vm711, 0.0
      %716 = vst.msk [vmem:[#allocation3 + $0x18] sm:$0x3] %vm713, 0.0
      %717 = vst.msk [vmem:[#allocation3 + $0x20] sm:$0xff] %vm711, 0.0
      %718 = vst.msk [vmem:[#allocation3 + $0x28] sm:$0x3] %vm713, 0.0
      %719 = vst.msk [vmem:[#allocation3 + $0x30] sm:$0xff] %vm711, 0.0
      %720 = vst.msk [vmem:[#allocation3 + $0x38] sm:$0x3] %vm713, 0.0
      %721 = vst.msk [vmem:[#allocation3 + $0x40] sm:$0xff] %vm711, 0.0
      %722 = vst.msk [vmem:[#allocation3 + $0x48] sm:$0x3] %vm713, 0.0
      %723 = vst.msk [vmem:[#allocation3 + $0x50] sm:$0xff] %vm711, 0.0
      %724 = vst.msk [vmem:[#allocation3 + $0x58] sm:$0x3] %vm713, 0.0
      %725 = vst.msk [vmem:[#allocation3 + $0x60] sm:$0xff] %vm711, 0.0
      %726 = vst.msk [vmem:[#allocation3 + $0x68] sm:$0x3] %vm713, 0.0
      %727 = vst.msk [vmem:[#allocation3 + $0x70] sm:$0xff] %vm711, 0.0
      %728 = vst.msk [vmem:[#allocation3 + $0x78] sm:$0x3] %vm713, 0.0
      %729 = vst.msk [vmem:[#allocation3 + $0x80] sm:$0xff] %vm711, 0.0
      %730 = vst.msk [vmem:[#allocation3 + $0x88] sm:$0x3] %vm713, 0.0
      %731 = vst.msk [vmem:[#allocation3 + $0x90] sm:$0xff] %vm711, 0.0
      %732 = vst.msk [vmem:[#allocation3 + $0x98] sm:$0x3] %vm713, 0.0
      %vm733 = vcmask 523264
      %734 = vst.msk [vmem:[#allocation4] sm:$0xff] %vm733, 0.0
      %vm735 = vcmask 517120
      %736 = vst.msk [vmem:[#allocation4 + $0x8] sm:$0x3] %vm735, 0.0
      %737 = vst.msk [vmem:[#allocation4 + $0x10] sm:$0xff] %vm733, 0.0
      %738 = vst.msk [vmem:[#allocation4 + $0x18] sm:$0x3] %vm735, 0.0
      %739 = vst.msk [vmem:[#allocation4 + $0x20] sm:$0xff] %vm733, 0.0
      %740 = vst.msk [vmem:[#allocation4 + $0x28] sm:$0x3] %vm735, 0.0
      %741 = vst.msk [vmem:[#allocation4 + $0x30] sm:$0xff] %vm733, 0.0
      %742 = vst.msk [vmem:[#allocation4 + $0x38] sm:$0x3] %vm735, 0.0
      %743 = vst.msk [vmem:[#allocation4 + $0x40] sm:$0xff] %vm733, 0.0
      %744 = vst.msk [vmem:[#allocation4 + $0x48] sm:$0x3] %vm735, 0.0
      %745 = vst.msk [vmem:[#allocation4 + $0x50] sm:$0xff] %vm733, 0.0
      %746 = vst.msk [vmem:[#allocation4 + $0x58] sm:$0x3] %vm735, 0.0
      %747 = vst.msk [vmem:[#allocation4 + $0x60] sm:$0xff] %vm733, 0.0
      %748 = vst.msk [vmem:[#allocation4 + $0x68] sm:$0x3] %vm735, 0.0
      %749 = vst.msk [vmem:[#allocation4 + $0x70] sm:$0xff] %vm733, 0.0
      %750 = vst.msk [vmem:[#allocation4 + $0x78] sm:$0x3] %vm735, 0.0
      %751 = vst.msk [vmem:[#allocation4 + $0x80] sm:$0xff] %vm733, 0.0
      %752 = vst.msk [vmem:[#allocation4 + $0x88] sm:$0x3] %vm735, 0.0
      %753 = vst.msk [vmem:[#allocation4 + $0x90] sm:$0xff] %vm733, 0.0
      %754 = vst.msk [vmem:[#allocation4 + $0x98] sm:$0x3] %vm735, 0.0
      %v755 = vld [vmem:[%s489] sm:$0xff]
      %v756 = vld [vmem:[%s489 + $0x8] sm:$0xff]
      %v757 = vld [vmem:[%s489 + $0x10] sm:$0xff]
      %v758 = vld [vmem:[%s489 + $0x18] sm:$0xff]
      %v759 = vld [vmem:[%s489 + $0x20] sm:$0xff]
      %v760 = vld [vmem:[%s489 + $0x28] sm:$0xff]
      %v761 = vld [vmem:[%s489 + $0x30] sm:$0xff]
      %v762 = vld [vmem:[%s489 + $0x38] sm:$0xff]
      %s763 = scalar_lea.vmem [#allocation2], 16
      %764 = vst.msk [vmem:[%s763 + $0x1] sm:$0xff] %vm689, %v755
      %765 = vst.msk [vmem:[%s763 + $0x11] sm:$0xff] %vm689, %v756
      %766 = vst.msk [vmem:[%s763 + $0x21] sm:$0xff] %vm689, %v757
      %767 = vst.msk [vmem:[%s763 + $0x31] sm:$0xff] %vm689, %v758
      %768 = vst.msk [vmem:[%s763 + $0x41] sm:$0xff] %vm689, %v759
      %769 = vst.msk [vmem:[%s763 + $0x51] sm:$0xff] %vm689, %v760
      %770 = vst.msk [vmem:[%s763 + $0x61] sm:$0xff] %vm689, %v761
      %771 = vst.msk [vmem:[%s763 + $0x71] sm:$0xff] %vm689, %v762
      %v772 = vld [vmem:[#allocation2] sm:$0xff]
      %v773 = vld [vmem:[#allocation2 + $0x8] sm:$0x3]
      %v774 = vld [vmem:[#allocation2 + $0x10] sm:$0xff]
      %v775 = vld [vmem:[#allocation2 + $0x18] sm:$0x3]
      %v776 = vld [vmem:[#allocation2 + $0x20] sm:$0xff]
      %v777 = vld [vmem:[#allocation2 + $0x28] sm:$0x3]
      %v778 = vld [vmem:[#allocation2 + $0x30] sm:$0xff]
      %v779 = vld [vmem:[#allocation2 + $0x38] sm:$0x3]
      %v780 = vld [vmem:[#allocation2 + $0x40] sm:$0xff]
      %v781 = vld [vmem:[#allocation2 + $0x48] sm:$0x3]
      %v782 = vld [vmem:[#allocation2 + $0x50] sm:$0xff]
      %v783 = vld [vmem:[#allocation2 + $0x58] sm:$0x3]
      %v784 = vld [vmem:[#allocation2 + $0x60] sm:$0xff]
      %v785 = vld [vmem:[#allocation2 + $0x68] sm:$0x3]
      %v786 = vld [vmem:[#allocation2 + $0x70] sm:$0xff]
      %v787 = vld [vmem:[#allocation2 + $0x78] sm:$0x3]
      %v788 = vld [vmem:[#allocation2 + $0x80] sm:$0xff]
      %v789 = vld [vmem:[#allocation2 + $0x88] sm:$0x3]
      %v790 = vld [vmem:[#allocation2 + $0x90] sm:$0xff]
      %v791 = vld [vmem:[#allocation2 + $0x98] sm:$0x3]
      %vm808 = vcmask 1046528
      %v809 = vrot.slane %v772, 1
      %v810 = vrot.slane %v773, 1
      %v811 = vsel %vm808, %v809, %v810
      %v812 = vrot.slane %v774, 1
      %v813 = vrot.slane %v775, 1
      %v814 = vsel %vm808, %v812, %v813
      %v815 = vrot.slane %v776, 1
      %v816 = vrot.slane %v777, 1
      %v817 = vsel %vm808, %v815, %v816
      %v818 = vrot.slane %v778, 1
      %v819 = vrot.slane %v779, 1
      %v820 = vsel %vm808, %v818, %v819
      %v821 = vrot.slane %v780, 1
      %v822 = vrot.slane %v781, 1
      %v823 = vsel %vm808, %v821, %v822
      %v824 = vrot.slane %v782, 1
      %v825 = vrot.slane %v783, 1
      %v826 = vsel %vm808, %v824, %v825
      %v827 = vrot.slane %v784, 1
      %v828 = vrot.slane %v785, 1
      %v829 = vsel %vm808, %v827, %v828
      %v830 = vrot.slane %v786, 1
      %v831 = vrot.slane %v787, 1
      %v832 = vsel %vm808, %v830, %v831
      %833 = vrot.lane.b32.xlu0 %v811, 4
      %v834 = vpop.permute.xlu0 %833
      %835 = vrot.lane.b32.xlu0 %v814, 4
      %v836 = vpop.permute.xlu0 %835
      %837 = vrot.lane.b32.xlu0 %v817, 4
      %v838 = vpop.permute.xlu0 %837
      %839 = vrot.lane.b32.xlu0 %v820, 4
      %v840 = vpop.permute.xlu0 %839
      %841 = vrot.lane.b32.xlu0 %v823, 4
      %v842 = vpop.permute.xlu0 %841
      %843 = vrot.lane.b32.xlu0 %v826, 4
      %v844 = vpop.permute.xlu0 %843
      %845 = vrot.lane.b32.xlu0 %v829, 4
      %v846 = vpop.permute.xlu0 %845
      %847 = vrot.lane.b32.xlu0 %v832, 4
      %v848 = vpop.permute.xlu0 %847
      %vm857 = vcmask 1045504
      %v858 = vrot.slane %v772, 2
      %v859 = vrot.slane %v773, 2
      %v860 = vsel %vm857, %v858, %v859
      %v861 = vrot.slane %v774, 2
      %v862 = vrot.slane %v775, 2
      %v863 = vsel %vm857, %v861, %v862
      %v864 = vrot.slane %v776, 2
      %v865 = vrot.slane %v777, 2
      %v866 = vsel %vm857, %v864, %v865
      %v867 = vrot.slane %v778, 2
      %v868 = vrot.slane %v779, 2
      %v869 = vsel %vm857, %v867, %v868
      %v870 = vrot.slane %v780, 2
      %v871 = vrot.slane %v781, 2
      %v872 = vsel %vm857, %v870, %v871
      %v873 = vrot.slane %v782, 2
      %v874 = vrot.slane %v783, 2
      %v875 = vsel %vm857, %v873, %v874
      %v876 = vrot.slane %v784, 2
      %v877 = vrot.slane %v785, 2
      %v878 = vsel %vm857, %v876, %v877
      %v879 = vrot.slane %v786, 2
      %v880 = vrot.slane %v787, 2
      %v881 = vsel %vm857, %v879, %v880
      %882 = vrot.lane.b32.xlu0 %v860, 8
      %v883 = vpop.permute.xlu0 %882
      %884 = vrot.lane.b32.xlu0 %v863, 8
      %v885 = vpop.permute.xlu0 %884
      %886 = vrot.lane.b32.xlu0 %v866, 8
      %v887 = vpop.permute.xlu0 %886
      %888 = vrot.lane.b32.xlu0 %v869, 8
      %v889 = vpop.permute.xlu0 %888
      %890 = vrot.lane.b32.xlu0 %v872, 8
      %v891 = vpop.permute.xlu0 %890
      %892 = vrot.lane.b32.xlu0 %v875, 8
      %v893 = vpop.permute.xlu0 %892
      %894 = vrot.lane.b32.xlu0 %v878, 8
      %v895 = vpop.permute.xlu0 %894
      %896 = vrot.lane.b32.xlu0 %v881, 8
      %v897 = vpop.permute.xlu0 %896
      %907 = vrot.lane.b32.xlu0 %v774, 12
      %v908 = vpop.permute.xlu0 %907
      %909 = vrot.lane.b32.xlu0 %v776, 12
      %v910 = vpop.permute.xlu0 %909
      %911 = vrot.lane.b32.xlu0 %v778, 12
      %v912 = vpop.permute.xlu0 %911
      %913 = vrot.lane.b32.xlu0 %v780, 12
      %v914 = vpop.permute.xlu0 %913
      %915 = vrot.lane.b32.xlu0 %v782, 12
      %v916 = vpop.permute.xlu0 %915
      %917 = vrot.lane.b32.xlu0 %v784, 12
      %v918 = vpop.permute.xlu0 %917
      %919 = vrot.lane.b32.xlu0 %v786, 12
      %v920 = vpop.permute.xlu0 %919
      %921 = vrot.lane.b32.xlu0 %v788, 12
      %v922 = vpop.permute.xlu0 %921
      %v932 = vrot.slane %v788, 1
      %v933 = vrot.slane %v789, 1
      %v934 = vsel %vm808, %v932, %v933
      %935 = vrot.lane.b32.xlu0 %v814, 16
      %v936 = vpop.permute.xlu0 %935
      %937 = vrot.lane.b32.xlu0 %v817, 16
      %v938 = vpop.permute.xlu0 %937
      %939 = vrot.lane.b32.xlu0 %v820, 16
      %v940 = vpop.permute.xlu0 %939
      %941 = vrot.lane.b32.xlu0 %v823, 16
      %v942 = vpop.permute.xlu0 %941
      %943 = vrot.lane.b32.xlu0 %v826, 16
      %v944 = vpop.permute.xlu0 %943
      %945 = vrot.lane.b32.xlu0 %v829, 16
      %v946 = vpop.permute.xlu0 %945
      %947 = vrot.lane.b32.xlu0 %v832, 16
      %v948 = vpop.permute.xlu0 %947
      %949 = vrot.lane.b32.xlu0 %v934, 16
      %v950 = vpop.permute.xlu0 %949
      %v959 = vrot.slane %v788, 2
      %v960 = vrot.slane %v789, 2
      %v961 = vsel %vm857, %v959, %v960
      %962 = vrot.lane.b32.xlu0 %v863, 20
      %v963 = vpop.permute.xlu0 %962
      %964 = vrot.lane.b32.xlu0 %v866, 20
      %v965 = vpop.permute.xlu0 %964
      %966 = vrot.lane.b32.xlu0 %v869, 20
      %v967 = vpop.permute.xlu0 %966
      %968 = vrot.lane.b32.xlu0 %v872, 20
      %v969 = vpop.permute.xlu0 %968
      %970 = vrot.lane.b32.xlu0 %v875, 20
      %v971 = vpop.permute.xlu0 %970
      %972 = vrot.lane.b32.xlu0 %v878, 20
      %v973 = vpop.permute.xlu0 %972
      %974 = vrot.lane.b32.xlu0 %v881, 20
      %v975 = vpop.permute.xlu0 %974
      %976 = vrot.lane.b32.xlu0 %v961, 20
      %v977 = vpop.permute.xlu0 %976
      %987 = vrot.lane.b32.xlu0 %v776, 24
      %v988 = vpop.permute.xlu0 %987
      %989 = vrot.lane.b32.xlu0 %v778, 24
      %v990 = vpop.permute.xlu0 %989
      %991 = vrot.lane.b32.xlu0 %v780, 24
      %v992 = vpop.permute.xlu0 %991
      %993 = vrot.lane.b32.xlu0 %v782, 24
      %v994 = vpop.permute.xlu0 %993
      %995 = vrot.lane.b32.xlu0 %v784, 24
      %v996 = vpop.permute.xlu0 %995
      %997 = vrot.lane.b32.xlu0 %v786, 24
      %v998 = vpop.permute.xlu0 %997
      %999 = vrot.lane.b32.xlu0 %v788, 24
      %v1000 = vpop.permute.xlu0 %999
      %1001 = vrot.lane.b32.xlu0 %v790, 24
      %v1002 = vpop.permute.xlu0 %1001
      %v1012 = vrot.slane %v790, 1
      %v1013 = vrot.slane %v791, 1
      %v1014 = vsel %vm808, %v1012, %v1013
      %1015 = vrot.lane.b32.xlu0 %v817, 28
      %v1016 = vpop.permute.xlu0 %1015
      %1017 = vrot.lane.b32.xlu0 %v820, 28
      %v1018 = vpop.permute.xlu0 %1017
      %1019 = vrot.lane.b32.xlu0 %v823, 28
      %v1020 = vpop.permute.xlu0 %1019
      %1021 = vrot.lane.b32.xlu0 %v826, 28
      %v1022 = vpop.permute.xlu0 %1021
      %1023 = vrot.lane.b32.xlu0 %v829, 28
      %v1024 = vpop.permute.xlu0 %1023
      %1025 = vrot.lane.b32.xlu0 %v832, 28
      %v1026 = vpop.permute.xlu0 %1025
      %1027 = vrot.lane.b32.xlu0 %v934, 28
      %v1028 = vpop.permute.xlu0 %1027
      %1029 = vrot.lane.b32.xlu0 %v1014, 28
      %v1030 = vpop.permute.xlu0 %1029
      %v1039 = vrot.slane %v790, 2
      %v1040 = vrot.slane %v791, 2
      %v1041 = vsel %vm857, %v1039, %v1040
      %1042 = vrot.lane.b32.xlu0 %v866, 32
      %v1043 = vpop.permute.xlu0 %1042
      %1044 = vrot.lane.b32.xlu0 %v869, 32
      %v1045 = vpop.permute.xlu0 %1044
      %1046 = vrot.lane.b32.xlu0 %v872, 32
      %v1047 = vpop.permute.xlu0 %1046
      %1048 = vrot.lane.b32.xlu0 %v875, 32
      %v1049 = vpop.permute.xlu0 %1048
      %1050 = vrot.lane.b32.xlu0 %v878, 32
      %v1051 = vpop.permute.xlu0 %1050
      %1052 = vrot.lane.b32.xlu0 %v881, 32
      %v1053 = vpop.permute.xlu0 %1052
      %1054 = vrot.lane.b32.xlu0 %v961, 32
      %v1055 = vpop.permute.xlu0 %1054
      %1056 = vrot.lane.b32.xlu0 %v1041, 32
      %v1057 = vpop.permute.xlu0 %1056
      %v1066 = vsel %vm689, %v772, %v834
      %v1067 = vsel %vm689, %v774, %v836
      %v1068 = vsel %vm689, %v776, %v838
      %v1069 = vsel %vm689, %v778, %v840
      %v1070 = vsel %vm689, %v780, %v842
      %v1071 = vsel %vm689, %v782, %v844
      %v1072 = vsel %vm689, %v784, %v846
      %v1073 = vsel %vm689, %v786, %v848
      %vm1074 = vcmask 64512
      %v1075 = vsel %vm1074, %v1066, %v883
      %v1076 = vsel %vm1074, %v1067, %v885
      %v1077 = vsel %vm1074, %v1068, %v887
      %v1078 = vsel %vm1074, %v1069, %v889
      %v1079 = vsel %vm1074, %v1070, %v891
      %v1080 = vsel %vm1074, %v1071, %v893
      %v1081 = vsel %vm1074, %v1072, %v895
      %v1082 = vsel %vm1074, %v1073, %v897
      %vm1083 = vcmask 97280
      %v1084 = vsel %vm1083, %v1075, %v908
      %v1085 = vsel %vm1083, %v1076, %v910
      %v1086 = vsel %vm1083, %v1077, %v912
      %v1087 = vsel %vm1083, %v1078, %v914
      %v1088 = vsel %vm1083, %v1079, %v916
      %v1089 = vsel %vm1083, %v1080, %v918
      %v1090 = vsel %vm1083, %v1081, %v920
      %v1091 = vsel %vm1083, %v1082, %v922
      %vm1092 = vcmask 130048
      %v1093 = vsel %vm1092, %v1084, %v936
      %v1094 = vsel %vm1092, %v1085, %v938
      %v1095 = vsel %vm1092, %v1086, %v940
      %v1096 = vsel %vm1092, %v1087, %v942
      %v1097 = vsel %vm1092, %v1088, %v944
      %v1098 = vsel %vm1092, %v1089, %v946
      %v1099 = vsel %vm1092, %v1090, %v948
      %v1100 = vsel %vm1092, %v1091, %v950
      %vm1101 = vcmask 162816
      %v1102 = vsel %vm1101, %v1093, %v963
      %v1103 = vsel %vm1101, %v1094, %v965
      %v1104 = vsel %vm1101, %v1095, %v967
      %v1105 = vsel %vm1101, %v1096, %v969
      %v1106 = vsel %vm1101, %v1097, %v971
      %v1107 = vsel %vm1101, %v1098, %v973
      %v1108 = vsel %vm1101, %v1099, %v975
      %v1109 = vsel %vm1101, %v1100, %v977
      %vm1110 = vcmask 195584
      %v1111 = vsel %vm1110, %v1102, %v988
      %v1112 = vsel %vm1110, %v1103, %v990
      %v1113 = vsel %vm1110, %v1104, %v992
      %v1114 = vsel %vm1110, %v1105, %v994
      %v1115 = vsel %vm1110, %v1106, %v996
      %v1116 = vsel %vm1110, %v1107, %v998
      %v1117 = vsel %vm1110, %v1108, %v1000
      %v1118 = vsel %vm1110, %v1109, %v1002
      %vm1119 = vcmask 228352
      %v1120 = vsel %vm1119, %v1111, %v1016
      %v1121 = vsel %vm1119, %v1112, %v1018
      %v1122 = vsel %vm1119, %v1113, %v1020
      %v1123 = vsel %vm1119, %v1114, %v1022
      %v1124 = vsel %vm1119, %v1115, %v1024
      %v1125 = vsel %vm1119, %v1116, %v1026
      %v1126 = vsel %vm1119, %v1117, %v1028
      %v1127 = vsel %vm1119, %v1118, %v1030
      %v1128 = vsel %vm711, %v1120, %v1043
      %v1129 = vsel %vm711, %v1121, %v1045
      %v1130 = vsel %vm711, %v1122, %v1047
      %v1131 = vsel %vm711, %v1123, %v1049
      %v1132 = vsel %vm711, %v1124, %v1051
      %v1133 = vsel %vm711, %v1125, %v1053
      %v1134 = vsel %vm711, %v1126, %v1055
      %v1135 = vsel %vm711, %v1127, %v1057
      %v1137 = vlaneseq
      %v1138 = vshrl.u32 %v1137, 7
      %v1139 = vsub.s32 0, %v1138
      %v1140 = vrot.slane %v500, %v1139
      %vm1142 = vcmask 293888
      %v1144 = vsel %vm1142, %v1128, 0
      %v1147 = vsel %vm1142, %v1129, 0
      %v1150 = vsel %vm1142, %v1130, 0
      %v1153 = vsel %vm1142, %v1131, 0
      %v1156 = vsel %vm1142, %v1132, 0
      %v1159 = vsel %vm1142, %v1133, 0
      %v1162 = vsel %vm1142, %v1134, 0
      %v1165 = vsel %vm1142, %v1135, 0
      %vm1167 = vcmask 1043456
      %v1169 = vsel %vm1167, %v499, 0
      %1171 = vmatprep.subr.mxu0 0.0
      %1172 = vmatpush1.msra.mxu0 0.0
      %1173 = vmatprep.subr.mxu0 0.0
      %1174 = vmatpush1.msra.mxu0 0.0
      %1175 = vmatprep.subr.mxu0 0.0
      %1176 = vmatpush1.msra.mxu0 0.0
      %1177 = vmatprep.subr.mxu0 0.0
      %1178 = vmatpush1.msra.mxu0 0.0
      %1179 = vmatprep.subr.mxu0 0.0
      %1180 = vmatpush1.msra.mxu0 0.0
      %1181 = vmatprep.subr.mxu0 0.0
      %1182 = vmatpush1.msra.mxu0 0.0
      %1183 = vmatprep.subr.mxu0 0.0
      %1184 = vmatpush1.msra.mxu0 0.0
      %1185 = vmatprep.subr.mxu0 0.0
      %1186 = vmatpush1.msra.mxu0 0.0
      %1187 = vmatprep.subr.mxu0 0.0
      %1188 = vmatpush1.msra.mxu0 0.0
      %1189 = vmatprep.subr.mxu0 0.0
      %1190 = vmatpush1.msra.mxu0 0.0
      %1191 = vmatprep.subr.mxu0 0.0
      %1192 = vmatpush1.msra.mxu0 0.0
      %1193 = vmatprep.subr.mxu0 0.0
      %1194 = vmatpush1.msra.mxu0 %v1169
      %1195 = vmatprep.subr.mxu0 0.0
      %1196 = vmatpush1.msra.mxu0 %v498
      %1197 = vmatprep.subr.mxu0 0.0
      %1198 = vmatpush1.msra.mxu0 %v497
      %1199 = vmatprep.subr.mxu0 0.0
      %1200 = vmatpush1.msra.mxu0 %v496
      %1201 = vmatprep.subr.mxu0 0.0
      %1202 = vmatpush1.msra.mxu0 %v495
      %1203 = vmatprep.subr.mxu0 0.0
      %1204 = vmatpush2.msra.mxu0 0.0
      %1205 = vmatprep.subr.mxu0 0.0
      %1206 = vmatpush2.msra.mxu0 0.0
      %1207 = vmatprep.subr.mxu0 0.0
      %1208 = vmatpush2.msra.mxu0 0.0
      %1209 = vmatprep.subr.mxu0 0.0
      %1210 = vmatpush2.msra.mxu0 0.0
      %1211 = vmatprep.subr.mxu0 0.0
      %1212 = vmatpush2.msra.mxu0 0.0
      %1213 = vmatprep.subr.mxu0 0.0
      %1214 = vmatpush2.msra.mxu0 0.0
      %1215 = vmatprep.subr.mxu0 0.0
      %1216 = vmatpush2.msra.mxu0 0.0
      %1217 = vmatprep.subr.mxu0 0.0
      %1218 = vmatpush2.msra.mxu0 0.0
      %1219 = vmatprep.subr.mxu0 0.0
      %1220 = vmatpush2.msra.mxu0 0.0
      %1221 = vmatprep.subr.mxu0 0.0
      %1222 = vmatpush2.msra.mxu0 0.0
      %1223 = vmatprep.subr.mxu0 0.0
      %1224 = vmatpush2.msra.mxu0 0.0
      %1225 = vmatprep.subr.mxu0 0.0
      %1226 = vmatpush2.msra.mxu0 0.0
      %1227 = vmatprep.subr.mxu0 0.0
      %1228 = vmatpush2.msra.mxu0 0.0
      %1229 = vmatprep.subr.mxu0 0.0
      %1230 = vmatpush2.msra.mxu0 0.0
      %1231 = vmatprep.subr.mxu0 0.0
      %1232 = vmatpush2.msra.mxu0 0.0
      %1233 = vmatprep.subr.mxu0 0.0
      %1234 = vmatpush2.msra.mxu0 0.0
      %1235 = vmatprep.mubr.f32.mxu0 0.0
      %1236 = vmatmul.mubr.f32.gmra.mxu0 %v1144
      %v1237 = vpop.f32.mrf.mxu0
      %v1238 = vadd.f32 %v1140, %v1237
      %v1239 = vpop.f32.mrf.mxu0
      %1240 = vmatprep.mubr.f32.mxu0 0.0
      %1241 = vmatmul.mubr.f32.gmra.mxu0 %v1147
      %v1242 = vpop.f32.mrf.mxu0
      %v1243 = vadd.f32 %v1140, %v1242
      %v1244 = vpop.f32.mrf.mxu0
      %1245 = vmatprep.mubr.f32.mxu0 0.0
      %1246 = vmatmul.mubr.f32.gmra.mxu0 %v1150
      %v1247 = vpop.f32.mrf.mxu0
      %v1248 = vadd.f32 %v1140, %v1247
      %v1249 = vpop.f32.mrf.mxu0
      %1250 = vmatprep.mubr.f32.mxu0 0.0
      %1251 = vmatmul.mubr.f32.gmra.mxu0 %v1153
      %v1252 = vpop.f32.mrf.mxu0
      %v1253 = vadd.f32 %v1140, %v1252
      %v1254 = vpop.f32.mrf.mxu0
      %1255 = vmatprep.mubr.f32.mxu0 0.0
      %1256 = vmatmul.mubr.f32.gmra.mxu0 %v1156
      %v1257 = vpop.f32.mrf.mxu0
      %v1258 = vadd.f32 %v1140, %v1257
      %v1259 = vpop.f32.mrf.mxu0
      %1260 = vmatprep.mubr.f32.mxu0 0.0
      %1261 = vmatmul.mubr.f32.gmra.mxu0 %v1159
      %v1262 = vpop.f32.mrf.mxu0
      %v1263 = vadd.f32 %v1140, %v1262
      %v1264 = vpop.f32.mrf.mxu0
      %1265 = vmatprep.mubr.f32.mxu0 0.0
      %1266 = vmatmul.mubr.f32.gmra.mxu0 %v1162
      %v1267 = vpop.f32.mrf.mxu0
      %v1268 = vadd.f32 %v1140, %v1267
      %v1269 = vpop.f32.mrf.mxu0
      %1270 = vmatprep.mubr.f32.mxu0 0.0
      %1271 = vmatmul.mubr.f32.gmra.mxu0 %v1165
      %v1272 = vpop.f32.mrf.mxu0
      %v1273 = vadd.f32 %v1140, %v1272
      %v1274 = vpop.f32.mrf.mxu0
      %1275 = vdwg.mxu0
      %v1276 = vmax.f32 %v1238, 0.0
      %v1277 = vmax.f32 %v1243, 0.0
      %v1278 = vmax.f32 %v1248, 0.0
      %v1279 = vmax.f32 %v1253, 0.0
      %v1280 = vmax.f32 %v1258, 0.0
      %v1281 = vmax.f32 %v1263, 0.0
      %v1282 = vmax.f32 %v1268, 0.0
      %v1283 = vmax.f32 %v1273, 0.0
      %s1284 = scalar_lea.vmem [#allocation3], 16
      %1285 = vst.msk [vmem:[%s1284 + $0x1] sm:$0xff] %vm711, %v1276
      %1286 = vst.msk [vmem:[%s1284 + $0x11] sm:$0xff] %vm711, %v1277
      %1287 = vst.msk [vmem:[%s1284 + $0x21] sm:$0xff] %vm711, %v1278
      %1288 = vst.msk [vmem:[%s1284 + $0x31] sm:$0xff] %vm711, %v1279
      %1289 = vst.msk [vmem:[%s1284 + $0x41] sm:$0xff] %vm711, %v1280
      %1290 = vst.msk [vmem:[%s1284 + $0x51] sm:$0xff] %vm711, %v1281
      %1291 = vst.msk [vmem:[%s1284 + $0x61] sm:$0xff] %vm711, %v1282
      %1292 = vst.msk [vmem:[%s1284 + $0x71] sm:$0xff] %vm711, %v1283
      %v1293 = vld [vmem:[#allocation3] sm:$0xff]
      %v1294 = vld [vmem:[#allocation3 + $0x8] sm:$0x3]
      %v1295 = vld [vmem:[#allocation3 + $0x10] sm:$0xff]
      %v1296 = vld [vmem:[#allocation3 + $0x18] sm:$0x3]
      %v1297 = vld [vmem:[#allocation3 + $0x20] sm:$0xff]
      %v1298 = vld [vmem:[#allocation3 + $0x28] sm:$0x3]
      %v1299 = vld [vmem:[#allocation3 + $0x30] sm:$0xff]
      %v1300 = vld [vmem:[#allocation3 + $0x38] sm:$0x3]
      %v1301 = vld [vmem:[#allocation3 + $0x40] sm:$0xff]
      %v1302 = vld [vmem:[#allocation3 + $0x48] sm:$0x3]
      %v1303 = vld [vmem:[#allocation3 + $0x50] sm:$0xff]
      %v1304 = vld [vmem:[#allocation3 + $0x58] sm:$0x3]
      %v1305 = vld [vmem:[#allocation3 + $0x60] sm:$0xff]
      %v1306 = vld [vmem:[#allocation3 + $0x68] sm:$0x3]
      %v1307 = vld [vmem:[#allocation3 + $0x70] sm:$0xff]
      %v1308 = vld [vmem:[#allocation3 + $0x78] sm:$0x3]
      %v1309 = vld [vmem:[#allocation3 + $0x80] sm:$0xff]
      %v1310 = vld [vmem:[#allocation3 + $0x88] sm:$0x3]
      %v1311 = vld [vmem:[#allocation3 + $0x90] sm:$0xff]
      %v1312 = vld [vmem:[#allocation3 + $0x98] sm:$0x3]
      %v1329 = vrot.slane %v1293, 1
      %v1330 = vrot.slane %v1294, 1
      %v1331 = vsel %vm808, %v1329, %v1330
      %v1332 = vrot.slane %v1295, 1
      %v1333 = vrot.slane %v1296, 1
      %v1334 = vsel %vm808, %v1332, %v1333
      %v1335 = vrot.slane %v1297, 1
      %v1336 = vrot.slane %v1298, 1
      %v1337 = vsel %vm808, %v1335, %v1336
      %v1338 = vrot.slane %v1299, 1
      %v1339 = vrot.slane %v1300, 1
      %v1340 = vsel %vm808, %v1338, %v1339
      %v1341 = vrot.slane %v1301, 1
      %v1342 = vrot.slane %v1302, 1
      %v1343 = vsel %vm808, %v1341, %v1342
      %v1344 = vrot.slane %v1303, 1
      %v1345 = vrot.slane %v1304, 1
      %v1346 = vsel %vm808, %v1344, %v1345
      %v1347 = vrot.slane %v1305, 1
      %v1348 = vrot.slane %v1306, 1
      %v1349 = vsel %vm808, %v1347, %v1348
      %v1350 = vrot.slane %v1307, 1
      %v1351 = vrot.slane %v1308, 1
      %v1352 = vsel %vm808, %v1350, %v1351
      %1353 = vrot.lane.b32.xlu0 %v1331, 32
      %v1354 = vpop.permute.xlu0 %1353
      %1355 = vrot.lane.b32.xlu0 %v1334, 32
      %v1356 = vpop.permute.xlu0 %1355
      %1357 = vrot.lane.b32.xlu0 %v1337, 32
      %v1358 = vpop.permute.xlu0 %1357
      %1359 = vrot.lane.b32.xlu0 %v1340, 32
      %v1360 = vpop.permute.xlu0 %1359
      %1361 = vrot.lane.b32.xlu0 %v1343, 32
      %v1362 = vpop.permute.xlu0 %1361
      %1363 = vrot.lane.b32.xlu0 %v1346, 32
      %v1364 = vpop.permute.xlu0 %1363
      %1365 = vrot.lane.b32.xlu0 %v1349, 32
      %v1366 = vpop.permute.xlu0 %1365
      %1367 = vrot.lane.b32.xlu0 %v1352, 32
      %v1368 = vpop.permute.xlu0 %1367
      %v1377 = vrot.slane %v1293, 2
      %v1378 = vrot.slane %v1294, 2
      %v1379 = vsel %vm857, %v1377, %v1378
      %v1380 = vrot.slane %v1295, 2
      %v1381 = vrot.slane %v1296, 2
      %v1382 = vsel %vm857, %v1380, %v1381
      %v1383 = vrot.slane %v1297, 2
      %v1384 = vrot.slane %v1298, 2
      %v1385 = vsel %vm857, %v1383, %v1384
      %v1386 = vrot.slane %v1299, 2
      %v1387 = vrot.slane %v1300, 2
      %v1388 = vsel %vm857, %v1386, %v1387
      %v1389 = vrot.slane %v1301, 2
      %v1390 = vrot.slane %v1302, 2
      %v1391 = vsel %vm857, %v1389, %v1390
      %v1392 = vrot.slane %v1303, 2
      %v1393 = vrot.slane %v1304, 2
      %v1394 = vsel %vm857, %v1392, %v1393
      %v1395 = vrot.slane %v1305, 2
      %v1396 = vrot.slane %v1306, 2
      %v1397 = vsel %vm857, %v1395, %v1396
      %v1398 = vrot.slane %v1307, 2
      %v1399 = vrot.slane %v1308, 2
      %v1400 = vsel %vm857, %v1398, %v1399
      %1401 = vrot.lane.b32.xlu0 %v1379, 64
      %v1402 = vpop.permute.xlu0 %1401
      %1403 = vrot.lane.b32.xlu0 %v1382, 64
      %v1404 = vpop.permute.xlu0 %1403
      %1405 = vrot.lane.b32.xlu0 %v1385, 64
      %v1406 = vpop.permute.xlu0 %1405
      %1407 = vrot.lane.b32.xlu0 %v1388, 64
      %v1408 = vpop.permute.xlu0 %1407
      %1409 = vrot.lane.b32.xlu0 %v1391, 64
      %v1410 = vpop.permute.xlu0 %1409
      %1411 = vrot.lane.b32.xlu0 %v1394, 64
      %v1412 = vpop.permute.xlu0 %1411
      %1413 = vrot.lane.b32.xlu0 %v1397, 64
      %v1414 = vpop.permute.xlu0 %1413
      %1415 = vrot.lane.b32.xlu0 %v1400, 64
      %v1416 = vpop.permute.xlu0 %1415
      %1426 = vrot.lane.b32.xlu0 %v1295, 96
      %v1427 = vpop.permute.xlu0 %1426
      %1428 = vrot.lane.b32.xlu0 %v1297, 96
      %v1429 = vpop.permute.xlu0 %1428
      %1430 = vrot.lane.b32.xlu0 %v1299, 96
      %v1431 = vpop.permute.xlu0 %1430
      %1432 = vrot.lane.b32.xlu0 %v1301, 96
      %v1433 = vpop.permute.xlu0 %1432
      %1434 = vrot.lane.b32.xlu0 %v1303, 96
      %v1435 = vpop.permute.xlu0 %1434
      %1436 = vrot.lane.b32.xlu0 %v1305, 96
      %v1437 = vpop.permute.xlu0 %1436
      %1438 = vrot.lane.b32.xlu0 %v1307, 96
      %v1439 = vpop.permute.xlu0 %1438
      %1440 = vrot.lane.b32.xlu0 %v1309, 96
      %v1441 = vpop.permute.xlu0 %1440
      %v1451 = vrot.slane %v1309, 1
      %v1452 = vrot.slane %v1310, 1
      %v1453 = vsel %vm808, %v1451, %v1452
      %v1462 = vrot.slane %v1309, 2
      %v1463 = vrot.slane %v1310, 2
      %v1464 = vsel %vm857, %v1462, %v1463
      %1465 = vrot.lane.b32.xlu0 %v1382, 32
      %v1466 = vpop.permute.xlu0 %1465
      %1467 = vrot.lane.b32.xlu0 %v1385, 32
      %v1468 = vpop.permute.xlu0 %1467
      %1469 = vrot.lane.b32.xlu0 %v1388, 32
      %v1470 = vpop.permute.xlu0 %1469
      %1471 = vrot.lane.b32.xlu0 %v1391, 32
      %v1472 = vpop.permute.xlu0 %1471
      %1473 = vrot.lane.b32.xlu0 %v1394, 32
      %v1474 = vpop.permute.xlu0 %1473
      %1475 = vrot.lane.b32.xlu0 %v1397, 32
      %v1476 = vpop.permute.xlu0 %1475
      %1477 = vrot.lane.b32.xlu0 %v1400, 32
      %v1478 = vpop.permute.xlu0 %1477
      %1479 = vrot.lane.b32.xlu0 %v1464, 32
      %v1480 = vpop.permute.xlu0 %1479
      %1490 = vrot.lane.b32.xlu0 %v1297, 64
      %v1491 = vpop.permute.xlu0 %1490
      %1492 = vrot.lane.b32.xlu0 %v1299, 64
      %v1493 = vpop.permute.xlu0 %1492
      %1494 = vrot.lane.b32.xlu0 %v1301, 64
      %v1495 = vpop.permute.xlu0 %1494
      %1496 = vrot.lane.b32.xlu0 %v1303, 64
      %v1497 = vpop.permute.xlu0 %1496
      %1498 = vrot.lane.b32.xlu0 %v1305, 64
      %v1499 = vpop.permute.xlu0 %1498
      %1500 = vrot.lane.b32.xlu0 %v1307, 64
      %v1501 = vpop.permute.xlu0 %1500
      %1502 = vrot.lane.b32.xlu0 %v1309, 64
      %v1503 = vpop.permute.xlu0 %1502
      %1504 = vrot.lane.b32.xlu0 %v1311, 64
      %v1505 = vpop.permute.xlu0 %1504
      %v1515 = vrot.slane %v1311, 1
      %v1516 = vrot.slane %v1312, 1
      %v1517 = vsel %vm808, %v1515, %v1516
      %1518 = vrot.lane.b32.xlu0 %v1337, 96
      %v1519 = vpop.permute.xlu0 %1518
      %1520 = vrot.lane.b32.xlu0 %v1340, 96
      %v1521 = vpop.permute.xlu0 %1520
      %1522 = vrot.lane.b32.xlu0 %v1343, 96
      %v1523 = vpop.permute.xlu0 %1522
      %1524 = vrot.lane.b32.xlu0 %v1346, 96
      %v1525 = vpop.permute.xlu0 %1524
      %1526 = vrot.lane.b32.xlu0 %v1349, 96
      %v1527 = vpop.permute.xlu0 %1526
      %1528 = vrot.lane.b32.xlu0 %v1352, 96
      %v1529 = vpop.permute.xlu0 %1528
      %1530 = vrot.lane.b32.xlu0 %v1453, 96
      %v1531 = vpop.permute.xlu0 %1530
      %1532 = vrot.lane.b32.xlu0 %v1517, 96
      %v1533 = vpop.permute.xlu0 %1532
      %v1542 = vrot.slane %v1311, 2
      %v1543 = vrot.slane %v1312, 2
      %v1544 = vsel %vm857, %v1542, %v1543
      %v1545 = vsel %vm711, %v1293, %v1354
      %v1546 = vsel %vm711, %v1295, %v1356
      %v1547 = vsel %vm711, %v1297, %v1358
      %v1548 = vsel %vm711, %v1299, %v1360
      %v1549 = vsel %vm711, %v1301, %v1362
      %v1550 = vsel %vm711, %v1303, %v1364
      %v1551 = vsel %vm711, %v1305, %v1366
      %v1552 = vsel %vm711, %v1307, %v1368
      %v1553 = vsel %vm733, %v1545, %v1402
      %v1554 = vsel %vm733, %v1546, %v1404
      %v1555 = vsel %vm733, %v1547, %v1406
      %v1556 = vsel %vm733, %v1548, %v1408
      %v1557 = vsel %vm733, %v1549, %v1410
      %v1558 = vsel %vm733, %v1550, %v1412
      %v1559 = vsel %vm733, %v1551, %v1414
      %v1560 = vsel %vm733, %v1552, %v1416
      %vm1561 = vcmask 785408
      %v1562 = vsel %vm1561, %v1553, %v1427
      %v1563 = vsel %vm1561, %v1554, %v1429
      %v1564 = vsel %vm1561, %v1555, %v1431
      %v1565 = vsel %vm1561, %v1556, %v1433
      %v1566 = vsel %vm1561, %v1557, %v1435
      %v1567 = vsel %vm1561, %v1558, %v1437
      %v1568 = vsel %vm1561, %v1559, %v1439
      %v1569 = vsel %vm1561, %v1560, %v1441
      %v1570 = vsel %vm711, %v1334, %v1466
      %v1571 = vsel %vm711, %v1337, %v1468
      %v1572 = vsel %vm711, %v1340, %v1470
      %v1573 = vsel %vm711, %v1343, %v1472
      %v1574 = vsel %vm711, %v1346, %v1474
      %v1575 = vsel %vm711, %v1349, %v1476
      %v1576 = vsel %vm711, %v1352, %v1478
      %v1577 = vsel %vm711, %v1453, %v1480
      %v1578 = vsel %vm733, %v1570, %v1491
      %v1579 = vsel %vm733, %v1571, %v1493
      %v1580 = vsel %vm733, %v1572, %v1495
      %v1581 = vsel %vm733, %v1573, %v1497
      %v1582 = vsel %vm733, %v1574, %v1499
      %v1583 = vsel %vm733, %v1575, %v1501
      %v1584 = vsel %vm733, %v1576, %v1503
      %v1585 = vsel %vm733, %v1577, %v1505
      %v1586 = vsel %vm1561, %v1578, %v1519
      %v1587 = vsel %vm1561, %v1579, %v1521
      %v1588 = vsel %vm1561, %v1580, %v1523
      %v1589 = vsel %vm1561, %v1581, %v1525
      %v1590 = vsel %vm1561, %v1582, %v1527
      %v1591 = vsel %vm1561, %v1583, %v1529
      %v1592 = vsel %vm1561, %v1584, %v1531
      %v1593 = vsel %vm1561, %v1585, %v1533
      %v1595 = vlaneseq
      %v1596 = vshrl.u32 %v1595, 7
      %v1597 = vsub.s32 0, %v1596
      %v1598 = vrot.slane %v537, %v1597
      %v1600 = vsel %vm711, %v1385, 0
      %v1602 = vsel %vm711, %v1388, 0
      %v1604 = vsel %vm711, %v1391, 0
      %v1606 = vsel %vm711, %v1394, 0
      %v1608 = vsel %vm711, %v1397, 0
      %v1610 = vsel %vm711, %v1400, 0
      %v1612 = vsel %vm711, %v1464, 0
      %v1614 = vsel %vm711, %v1544, 0
      %1616 = vmatprep.subr.mxu0 0.0
      %1617 = vmatpush1.msra.mxu0 %v516
      %1618 = vmatprep.subr.mxu0 0.0
      %1619 = vmatpush1.msra.mxu0 %v515
      %1620 = vmatprep.subr.mxu0 0.0
      %1621 = vmatpush1.msra.mxu0 %v514
      %1622 = vmatprep.subr.mxu0 0.0
      %1623 = vmatpush1.msra.mxu0 %v513
      %1624 = vmatprep.subr.mxu0 0.0
      %1625 = vmatpush1.msra.mxu0 %v512
      %1626 = vmatprep.subr.mxu0 0.0
      %1627 = vmatpush1.msra.mxu0 %v511
      %1628 = vmatprep.subr.mxu0 0.0
      %1629 = vmatpush1.msra.mxu0 %v510
      %1630 = vmatprep.subr.mxu0 0.0
      %1631 = vmatpush1.msra.mxu0 %v509
      %1632 = vmatprep.subr.mxu0 0.0
      %1633 = vmatpush1.msra.mxu0 %v508
      %1634 = vmatprep.subr.mxu0 0.0
      %1635 = vmatpush1.msra.mxu0 %v507
      %1636 = vmatprep.subr.mxu0 0.0
      %1637 = vmatpush1.msra.mxu0 %v506
      %1638 = vmatprep.subr.mxu0 0.0
      %1639 = vmatpush1.msra.mxu0 %v505
      %1640 = vmatprep.subr.mxu0 0.0
      %1641 = vmatpush1.msra.mxu0 %v504
      %1642 = vmatprep.subr.mxu0 0.0
      %1643 = vmatpush1.msra.mxu0 %v503
      %1644 = vmatprep.subr.mxu0 0.0
      %1645 = vmatpush1.msra.mxu0 %v502
      %1646 = vmatprep.subr.mxu0 0.0
      %1647 = vmatpush1.msra.mxu0 %v501
      %1648 = vmatprep.subr.mxu0 0.0
      %1649 = vmatpush2.msra.mxu0 %v532
      %1650 = vmatprep.subr.mxu0 0.0
      %1651 = vmatpush2.msra.mxu0 %v531
      %1652 = vmatprep.subr.mxu0 0.0
      %1653 = vmatpush2.msra.mxu0 %v530
      %1654 = vmatprep.subr.mxu0 0.0
      %1655 = vmatpush2.msra.mxu0 %v529
      %1656 = vmatprep.subr.mxu0 0.0
      %1657 = vmatpush2.msra.mxu0 %v528
      %1658 = vmatprep.subr.mxu0 0.0
      %1659 = vmatpush2.msra.mxu0 %v527
      %1660 = vmatprep.subr.mxu0 0.0
      %1661 = vmatpush2.msra.mxu0 %v526
      %1662 = vmatprep.subr.mxu0 0.0
      %1663 = vmatpush2.msra.mxu0 %v525
      %1664 = vmatprep.subr.mxu0 0.0
      %1665 = vmatpush2.msra.mxu0 %v524
      %1666 = vmatprep.subr.mxu0 0.0
      %1667 = vmatpush2.msra.mxu0 %v523
      %1668 = vmatprep.subr.mxu0 0.0
      %1669 = vmatpush2.msra.mxu0 %v522
      %1670 = vmatprep.subr.mxu0 0.0
      %1671 = vmatpush2.msra.mxu0 %v521
      %1672 = vmatprep.subr.mxu0 0.0
      %1673 = vmatpush2.msra.mxu0 %v520
      %1674 = vmatprep.subr.mxu0 0.0
      %1675 = vmatpush2.msra.mxu0 %v519
      %1676 = vmatprep.subr.mxu0 0.0
      %1677 = vmatpush2.msra.mxu0 %v518
      %1678 = vmatprep.subr.mxu0 0.0
      %1679 = vmatpush2.msra.mxu0 %v517
      %1680 = vmatprep.mubr.f32.mxu0 %v1586
      %1681 = vmatmul.mubr.f32.gmra.mxu0 %v1562
      %v1682 = vpop.f32.mrf.mxu0
      %v1683 = vadd.f32 %v1598, %v1682
      %v1684 = vpop.f32.mrf.mxu0
      %1685 = vmatprep.mubr.f32.mxu0 %v1587
      %1686 = vmatmul.mubr.f32.gmra.mxu0 %v1563
      %v1687 = vpop.f32.mrf.mxu0
      %v1688 = vadd.f32 %v1598, %v1687
      %v1689 = vpop.f32.mrf.mxu0
      %1690 = vmatprep.mubr.f32.mxu0 %v1588
      %1691 = vmatmul.mubr.f32.gmra.mxu0 %v1564
      %v1692 = vpop.f32.mrf.mxu0
      %v1693 = vadd.f32 %v1598, %v1692
      %v1694 = vpop.f32.mrf.mxu0
      %1695 = vmatprep.mubr.f32.mxu0 %v1589
      %1696 = vmatmul.mubr.f32.gmra.mxu0 %v1565
      %v1697 = vpop.f32.mrf.mxu0
      %v1698 = vadd.f32 %v1598, %v1697
      %v1699 = vpop.f32.mrf.mxu0
      %1700 = vmatprep.mubr.f32.mxu0 %v1590
      %1701 = vmatmul.mubr.f32.gmra.mxu0 %v1566
      %v1702 = vpop.f32.mrf.mxu0
      %v1703 = vadd.f32 %v1598, %v1702
      %v1704 = vpop.f32.mrf.mxu0
      %1705 = vmatprep.mubr.f32.mxu0 %v1591
      %1706 = vmatmul.mubr.f32.gmra.mxu0 %v1567
      %v1707 = vpop.f32.mrf.mxu0
      %v1708 = vadd.f32 %v1598, %v1707
      %v1709 = vpop.f32.mrf.mxu0
      %1710 = vmatprep.mubr.f32.mxu0 %v1592
      %1711 = vmatmul.mubr.f32.gmra.mxu0 %v1568
      %v1712 = vpop.f32.mrf.mxu0
      %v1713 = vadd.f32 %v1598, %v1712
      %v1714 = vpop.f32.mrf.mxu0
      %1715 = vmatprep.mubr.f32.mxu0 %v1593
      %1716 = vmatmul.mubr.f32.gmra.mxu0 %v1569
      %v1717 = vpop.f32.mrf.mxu0
      %v1718 = vadd.f32 %v1598, %v1717
      %v1719 = vpop.f32.mrf.mxu0
      %1720 = vdwg.mxu0
      %1721 = vmatprep.subr.mxu0 0.0
      %1722 = vmatpush1.msra.mxu0 0.0
      %1723 = vmatprep.subr.mxu0 0.0
      %1724 = vmatpush1.msra.mxu0 0.0
      %1725 = vmatprep.subr.mxu0 0.0
      %1726 = vmatpush1.msra.mxu0 0.0
      %1727 = vmatprep.subr.mxu0 0.0
      %1728 = vmatpush1.msra.mxu0 0.0
      %1729 = vmatprep.subr.mxu0 0.0
      %1730 = vmatpush1.msra.mxu0 0.0
      %1731 = vmatprep.subr.mxu0 0.0
      %1732 = vmatpush1.msra.mxu0 0.0
      %1733 = vmatprep.subr.mxu0 0.0
      %1734 = vmatpush1.msra.mxu0 0.0
      %1735 = vmatprep.subr.mxu0 0.0
      %1736 = vmatpush1.msra.mxu0 0.0
      %1737 = vmatprep.subr.mxu0 0.0
      %1738 = vmatpush1.msra.mxu0 0.0
      %1739 = vmatprep.subr.mxu0 0.0
      %1740 = vmatpush1.msra.mxu0 0.0
      %1741 = vmatprep.subr.mxu0 0.0
      %1742 = vmatpush1.msra.mxu0 0.0
      %1743 = vmatprep.subr.mxu0 0.0
      %1744 = vmatpush1.msra.mxu0 0.0
      %1745 = vmatprep.subr.mxu0 0.0
      %1746 = vmatpush1.msra.mxu0 %v536
      %1747 = vmatprep.subr.mxu0 0.0
      %1748 = vmatpush1.msra.mxu0 %v535
      %1749 = vmatprep.subr.mxu0 0.0
      %1750 = vmatpush1.msra.mxu0 %v534
      %1751 = vmatprep.subr.mxu0 0.0
      %1752 = vmatpush1.msra.mxu0 %v533
      %1753 = vmatprep.subr.mxu0 0.0
      %1754 = vmatpush2.msra.mxu0 0.0
      %1755 = vmatprep.subr.mxu0 0.0
      %1756 = vmatpush2.msra.mxu0 0.0
      %1757 = vmatprep.subr.mxu0 0.0
      %1758 = vmatpush2.msra.mxu0 0.0
      %1759 = vmatprep.subr.mxu0 0.0
      %1760 = vmatpush2.msra.mxu0 0.0
      %1761 = vmatprep.subr.mxu0 0.0
      %1762 = vmatpush2.msra.mxu0 0.0
      %1763 = vmatprep.subr.mxu0 0.0
      %1764 = vmatpush2.msra.mxu0 0.0
      %1765 = vmatprep.subr.mxu0 0.0
      %1766 = vmatpush2.msra.mxu0 0.0
      %1767 = vmatprep.subr.mxu0 0.0
      %1768 = vmatpush2.msra.mxu0 0.0
      %1769 = vmatprep.subr.mxu0 0.0
      %1770 = vmatpush2.msra.mxu0 0.0
      %1771 = vmatprep.subr.mxu0 0.0
      %1772 = vmatpush2.msra.mxu0 0.0
      %1773 = vmatprep.subr.mxu0 0.0
      %1774 = vmatpush2.msra.mxu0 0.0
      %1775 = vmatprep.subr.mxu0 0.0
      %1776 = vmatpush2.msra.mxu0 0.0
      %1777 = vmatprep.subr.mxu0 0.0
      %1778 = vmatpush2.msra.mxu0 0.0
      %1779 = vmatprep.subr.mxu0 0.0
      %1780 = vmatpush2.msra.mxu0 0.0
      %1781 = vmatprep.subr.mxu0 0.0
      %1782 = vmatpush2.msra.mxu0 0.0
      %1783 = vmatprep.subr.mxu0 0.0
      %1784 = vmatpush2.msra.mxu0 0.0
      %1785 = vmatprep.mubr.f32.mxu0 0.0
      %1786 = vmatmul.mubr.f32.gmra.mxu0 %v1600
      %v1787 = vpop.f32.mrf.mxu0
      %v1788 = vadd.f32 %v1683, %v1787
      %v1789 = vpop.f32.mrf.mxu0
      %1790 = vmatprep.mubr.f32.mxu0 0.0
      %1791 = vmatmul.mubr.f32.gmra.mxu0 %v1602
      %v1792 = vpop.f32.mrf.mxu0
      %v1793 = vadd.f32 %v1688, %v1792
      %v1794 = vpop.f32.mrf.mxu0
      %1795 = vmatprep.mubr.f32.mxu0 0.0
      %1796 = vmatmul.mubr.f32.gmra.mxu0 %v1604
      %v1797 = vpop.f32.mrf.mxu0
      %v1798 = vadd.f32 %v1693, %v1797
      %v1799 = vpop.f32.mrf.mxu0
      %1800 = vmatprep.mubr.f32.mxu0 0.0
      %1801 = vmatmul.mubr.f32.gmra.mxu0 %v1606
      %v1802 = vpop.f32.mrf.mxu0
      %v1803 = vadd.f32 %v1698, %v1802
      %v1804 = vpop.f32.mrf.mxu0
      %1805 = vmatprep.mubr.f32.mxu0 0.0
      %1806 = vmatmul.mubr.f32.gmra.mxu0 %v1608
      %v1807 = vpop.f32.mrf.mxu0
      %v1808 = vadd.f32 %v1703, %v1807
      %v1809 = vpop.f32.mrf.mxu0
      %1810 = vmatprep.mubr.f32.mxu0 0.0
      %1811 = vmatmul.mubr.f32.gmra.mxu0 %v1610
      %v1812 = vpop.f32.mrf.mxu0
      %v1813 = vadd.f32 %v1708, %v1812
      %v1814 = vpop.f32.mrf.mxu0
      %1815 = vmatprep.mubr.f32.mxu0 0.0
      %1816 = vmatmul.mubr.f32.gmra.mxu0 %v1612
      %v1817 = vpop.f32.mrf.mxu0
      %v1818 = vadd.f32 %v1713, %v1817
      %v1819 = vpop.f32.mrf.mxu0
      %1820 = vmatprep.mubr.f32.mxu0 0.0
      %1821 = vmatmul.mubr.f32.gmra.mxu0 %v1614
      %v1822 = vpop.f32.mrf.mxu0
      %v1823 = vadd.f32 %v1718, %v1822
      %v1824 = vpop.f32.mrf.mxu0
      %1825 = vdwg.mxu0
      %v1826 = vmax.f32 %v1788, 0.0
      %v1827 = vmax.f32 %v1793, 0.0
      %v1828 = vmax.f32 %v1798, 0.0
      %v1829 = vmax.f32 %v1803, 0.0
      %v1830 = vmax.f32 %v1808, 0.0
      %v1831 = vmax.f32 %v1813, 0.0
      %v1832 = vmax.f32 %v1818, 0.0
      %v1833 = vmax.f32 %v1823, 0.0
      %v1835 = vlaneseq
      %v1836 = vshrl.u32 %v1835, 7
      %v1837 = vsub.s32 0, %v1836
      %v1838 = vrot.slane %v539, %v1837
      %v1841 = vsel %vm1074, %v1826, 0
      %v1844 = vsel %vm1074, %v1827, 0
      %v1847 = vsel %vm1074, %v1828, 0
      %v1850 = vsel %vm1074, %v1829, 0
      %v1853 = vsel %vm1074, %v1830, 0
      %v1856 = vsel %vm1074, %v1831, 0
      %v1859 = vsel %vm1074, %v1832, 0
      %v1862 = vsel %vm1074, %v1833, 0
      %1864 = vmatprep.subr.mxu0 0.0
      %1865 = vmatpush1.msra.mxu0 0.0
      %1866 = vmatprep.subr.mxu0 0.0
      %1867 = vmatpush1.msra.mxu0 0.0
      %1868 = vmatprep.subr.mxu0 0.0
      %1869 = vmatpush1.msra.mxu0 0.0
      %1870 = vmatprep.subr.mxu0 0.0
      %1871 = vmatpush1.msra.mxu0 0.0
      %1872 = vmatprep.subr.mxu0 0.0
      %1873 = vmatpush1.msra.mxu0 0.0
      %1874 = vmatprep.subr.mxu0 0.0
      %1875 = vmatpush1.msra.mxu0 0.0
      %1876 = vmatprep.subr.mxu0 0.0
      %1877 = vmatpush1.msra.mxu0 0.0
      %1878 = vmatprep.subr.mxu0 0.0
      %1879 = vmatpush1.msra.mxu0 0.0
      %1880 = vmatprep.subr.mxu0 0.0
      %1881 = vmatpush1.msra.mxu0 0.0
      %1882 = vmatprep.subr.mxu0 0.0
      %1883 = vmatpush1.msra.mxu0 0.0
      %1884 = vmatprep.subr.mxu0 0.0
      %1885 = vmatpush1.msra.mxu0 0.0
      %1886 = vmatprep.subr.mxu0 0.0
      %1887 = vmatpush1.msra.mxu0 0.0
      %1888 = vmatprep.subr.mxu0 0.0
      %1889 = vmatpush1.msra.mxu0 0.0
      %1890 = vmatprep.subr.mxu0 0.0
      %1891 = vmatpush1.msra.mxu0 0.0
      %1892 = vmatprep.subr.mxu0 0.0
      %1893 = vmatpush1.msra.mxu0 0.0
      %1894 = vmatprep.subr.mxu0 0.0
      %1895 = vmatpush1.msra.mxu0 %v538
      %1896 = vmatprep.subr.mxu0 0.0
      %1897 = vmatpush2.msra.mxu0 0.0
      %1898 = vmatprep.subr.mxu0 0.0
      %1899 = vmatpush2.msra.mxu0 0.0
      %1900 = vmatprep.subr.mxu0 0.0
      %1901 = vmatpush2.msra.mxu0 0.0
      %1902 = vmatprep.subr.mxu0 0.0
      %1903 = vmatpush2.msra.mxu0 0.0
      %1904 = vmatprep.subr.mxu0 0.0
      %1905 = vmatpush2.msra.mxu0 0.0
      %1906 = vmatprep.subr.mxu0 0.0
      %1907 = vmatpush2.msra.mxu0 0.0
      %1908 = vmatprep.subr.mxu0 0.0
      %1909 = vmatpush2.msra.mxu0 0.0
      %1910 = vmatprep.subr.mxu0 0.0
      %1911 = vmatpush2.msra.mxu0 0.0
      %1912 = vmatprep.subr.mxu0 0.0
      %1913 = vmatpush2.msra.mxu0 0.0
      %1914 = vmatprep.subr.mxu0 0.0
      %1915 = vmatpush2.msra.mxu0 0.0
      %1916 = vmatprep.subr.mxu0 0.0
      %1917 = vmatpush2.msra.mxu0 0.0
      %1918 = vmatprep.subr.mxu0 0.0
      %1919 = vmatpush2.msra.mxu0 0.0
      %1920 = vmatprep.subr.mxu0 0.0
      %1921 = vmatpush2.msra.mxu0 0.0
      %1922 = vmatprep.subr.mxu0 0.0
      %1923 = vmatpush2.msra.mxu0 0.0
      %1924 = vmatprep.subr.mxu0 0.0
      %1925 = vmatpush2.msra.mxu0 0.0
      %1926 = vmatprep.subr.mxu0 0.0
      %1927 = vmatpush2.msra.mxu0 0.0
      %1928 = vmatprep.mubr.f32.mxu0 0.0
      %1929 = vmatmul.mubr.f32.gmra.mxu0 %v1841
      %v1930 = vpop.f32.mrf.mxu0
      %v1931 = vadd.f32 %v1838, %v1930
      %v1932 = vpop.f32.mrf.mxu0
      %1933 = vmatprep.mubr.f32.mxu0 0.0
      %1934 = vmatmul.mubr.f32.gmra.mxu0 %v1844
      %v1935 = vpop.f32.mrf.mxu0
      %v1936 = vadd.f32 %v1838, %v1935
      %v1937 = vpop.f32.mrf.mxu0
      %1938 = vmatprep.mubr.f32.mxu0 0.0
      %1939 = vmatmul.mubr.f32.gmra.mxu0 %v1847
      %v1940 = vpop.f32.mrf.mxu0
      %v1941 = vadd.f32 %v1838, %v1940
      %v1942 = vpop.f32.mrf.mxu0
      %1943 = vmatprep.mubr.f32.mxu0 0.0
      %1944 = vmatmul.mubr.f32.gmra.mxu0 %v1850
      %v1945 = vpop.f32.mrf.mxu0
      %v1946 = vadd.f32 %v1838, %v1945
      %v1947 = vpop.f32.mrf.mxu0
      %1948 = vmatprep.mubr.f32.mxu0 0.0
      %1949 = vmatmul.mubr.f32.gmra.mxu0 %v1853
      %v1950 = vpop.f32.mrf.mxu0
      %v1951 = vadd.f32 %v1838, %v1950
      %v1952 = vpop.f32.mrf.mxu0
      %1953 = vmatprep.mubr.f32.mxu0 0.0
      %1954 = vmatmul.mubr.f32.gmra.mxu0 %v1856
      %v1955 = vpop.f32.mrf.mxu0
      %v1956 = vadd.f32 %v1838, %v1955
      %v1957 = vpop.f32.mrf.mxu0
      %1958 = vmatprep.mubr.f32.mxu0 0.0
      %1959 = vmatmul.mubr.f32.gmra.mxu0 %v1859
      %v1960 = vpop.f32.mrf.mxu0
      %v1961 = vadd.f32 %v1838, %v1960
      %v1962 = vpop.f32.mrf.mxu0
      %1963 = vmatprep.mubr.f32.mxu0 0.0
      %1964 = vmatmul.mubr.f32.gmra.mxu0 %v1862
      %v1965 = vpop.f32.mrf.mxu0
      %v1966 = vadd.f32 %v1838, %v1965
      %v1967 = vpop.f32.mrf.mxu0
      %1968 = vdwg.mxu0
      %v1969 = vadd.f32 %v1238, %v1931
      %v1970 = vadd.f32 %v1243, %v1936
      %v1971 = vadd.f32 %v1248, %v1941
      %v1972 = vadd.f32 %v1253, %v1946
      %v1973 = vadd.f32 %v1258, %v1951
      %v1974 = vadd.f32 %v1263, %v1956
      %v1975 = vadd.f32 %v1268, %v1961
      %v1976 = vadd.f32 %v1273, %v1966
      %v1977 = vmax.f32 %v1969, 0.0
      %v1978 = vmax.f32 %v1970, 0.0
      %v1979 = vmax.f32 %v1971, 0.0
      %v1980 = vmax.f32 %v1972, 0.0
      %v1981 = vmax.f32 %v1973, 0.0
      %v1982 = vmax.f32 %v1974, 0.0
      %v1983 = vmax.f32 %v1975, 0.0
      %v1984 = vmax.f32 %v1976, 0.0
      %1985 = vst.msk [vmem:[%s1284 + $0x1] sm:$0xff] %vm711, %v1977
      %1986 = vst.msk [vmem:[%s1284 + $0x11] sm:$0xff] %vm711, %v1978
      %1987 = vst.msk [vmem:[%s1284 + $0x21] sm:$0xff] %vm711, %v1979
      %1988 = vst.msk [vmem:[%s1284 + $0x31] sm:$0xff] %vm711, %v1980
      %1989 = vst.msk [vmem:[%s1284 + $0x41] sm:$0xff] %vm711, %v1981
      %1990 = vst.msk [vmem:[%s1284 + $0x51] sm:$0xff] %vm711, %v1982
      %1991 = vst.msk [vmem:[%s1284 + $0x61] sm:$0xff] %vm711, %v1983
      %1992 = vst.msk [vmem:[%s1284 + $0x71] sm:$0xff] %vm711, %v1984
      %v1993 = vld [vmem:[#allocation3] sm:$0xff]
      %v1994 = vld [vmem:[#allocation3 + $0x8] sm:$0x3]
      %v1995 = vld [vmem:[#allocation3 + $0x10] sm:$0xff]
      %v1996 = vld [vmem:[#allocation3 + $0x18] sm:$0x3]
      %v1997 = vld [vmem:[#allocation3 + $0x20] sm:$0xff]
      %v1998 = vld [vmem:[#allocation3 + $0x28] sm:$0x3]
      %v1999 = vld [vmem:[#allocation3 + $0x30] sm:$0xff]
      %v2000 = vld [vmem:[#allocation3 + $0x38] sm:$0x3]
      %v2001 = vld [vmem:[#allocation3 + $0x40] sm:$0xff]
      %v2002 = vld [vmem:[#allocation3 + $0x48] sm:$0x3]
      %v2003 = vld [vmem:[#allocation3 + $0x50] sm:$0xff]
      %v2004 = vld [vmem:[#allocation3 + $0x58] sm:$0x3]
      %v2005 = vld [vmem:[#allocation3 + $0x60] sm:$0xff]
      %v2006 = vld [vmem:[#allocation3 + $0x68] sm:$0x3]
      %v2007 = vld [vmem:[#allocation3 + $0x70] sm:$0xff]
      %v2008 = vld [vmem:[#allocation3 + $0x78] sm:$0x3]
      %v2009 = vld [vmem:[#allocation3 + $0x80] sm:$0xff]
      %v2010 = vld [vmem:[#allocation3 + $0x88] sm:$0x3]
      %v2011 = vld [vmem:[#allocation3 + $0x90] sm:$0xff]
      %v2012 = vld [vmem:[#allocation3 + $0x98] sm:$0x3]
      %v2029 = vrot.slane %v1993, 1
      %v2030 = vrot.slane %v1994, 1
      %v2031 = vsel %vm808, %v2029, %v2030
      %v2032 = vrot.slane %v1995, 1
      %v2033 = vrot.slane %v1996, 1
      %v2034 = vsel %vm808, %v2032, %v2033
      %v2035 = vrot.slane %v1997, 1
      %v2036 = vrot.slane %v1998, 1
      %v2037 = vsel %vm808, %v2035, %v2036
      %v2038 = vrot.slane %v1999, 1
      %v2039 = vrot.slane %v2000, 1
      %v2040 = vsel %vm808, %v2038, %v2039
      %v2041 = vrot.slane %v2001, 1
      %v2042 = vrot.slane %v2002, 1
      %v2043 = vsel %vm808, %v2041, %v2042
      %v2044 = vrot.slane %v2003, 1
      %v2045 = vrot.slane %v2004, 1
      %v2046 = vsel %vm808, %v2044, %v2045
      %v2047 = vrot.slane %v2005, 1
      %v2048 = vrot.slane %v2006, 1
      %v2049 = vsel %vm808, %v2047, %v2048
      %v2050 = vrot.slane %v2007, 1
      %v2051 = vrot.slane %v2008, 1
      %v2052 = vsel %vm808, %v2050, %v2051
      %2053 = vrot.lane.b32.xlu0 %v2031, 32
      %v2054 = vpop.permute.xlu0 %2053
      %2055 = vrot.lane.b32.xlu0 %v2034, 32
      %v2056 = vpop.permute.xlu0 %2055
      %2057 = vrot.lane.b32.xlu0 %v2037, 32
      %v2058 = vpop.permute.xlu0 %2057
      %2059 = vrot.lane.b32.xlu0 %v2040, 32
      %v2060 = vpop.permute.xlu0 %2059
      %2061 = vrot.lane.b32.xlu0 %v2043, 32
      %v2062 = vpop.permute.xlu0 %2061
      %2063 = vrot.lane.b32.xlu0 %v2046, 32
      %v2064 = vpop.permute.xlu0 %2063
      %2065 = vrot.lane.b32.xlu0 %v2049, 32
      %v2066 = vpop.permute.xlu0 %2065
      %2067 = vrot.lane.b32.xlu0 %v2052, 32
      %v2068 = vpop.permute.xlu0 %2067
      %v2077 = vrot.slane %v1993, 2
      %v2078 = vrot.slane %v1994, 2
      %v2079 = vsel %vm857, %v2077, %v2078
      %v2080 = vrot.slane %v1995, 2
      %v2081 = vrot.slane %v1996, 2
      %v2082 = vsel %vm857, %v2080, %v2081
      %v2083 = vrot.slane %v1997, 2
      %v2084 = vrot.slane %v1998, 2
      %v2085 = vsel %vm857, %v2083, %v2084
      %v2086 = vrot.slane %v1999, 2
      %v2087 = vrot.slane %v2000, 2
      %v2088 = vsel %vm857, %v2086, %v2087
      %v2089 = vrot.slane %v2001, 2
      %v2090 = vrot.slane %v2002, 2
      %v2091 = vsel %vm857, %v2089, %v2090
      %v2092 = vrot.slane %v2003, 2
      %v2093 = vrot.slane %v2004, 2
      %v2094 = vsel %vm857, %v2092, %v2093
      %v2095 = vrot.slane %v2005, 2
      %v2096 = vrot.slane %v2006, 2
      %v2097 = vsel %vm857, %v2095, %v2096
      %v2098 = vrot.slane %v2007, 2
      %v2099 = vrot.slane %v2008, 2
      %v2100 = vsel %vm857, %v2098, %v2099
      %2101 = vrot.lane.b32.xlu0 %v2079, 64
      %v2102 = vpop.permute.xlu0 %2101
      %2103 = vrot.lane.b32.xlu0 %v2082, 64
      %v2104 = vpop.permute.xlu0 %2103
      %2105 = vrot.lane.b32.xlu0 %v2085, 64
      %v2106 = vpop.permute.xlu0 %2105
      %2107 = vrot.lane.b32.xlu0 %v2088, 64
      %v2108 = vpop.permute.xlu0 %2107
      %2109 = vrot.lane.b32.xlu0 %v2091, 64
      %v2110 = vpop.permute.xlu0 %2109
      %2111 = vrot.lane.b32.xlu0 %v2094, 64
      %v2112 = vpop.permute.xlu0 %2111
      %2113 = vrot.lane.b32.xlu0 %v2097, 64
      %v2114 = vpop.permute.xlu0 %2113
      %2115 = vrot.lane.b32.xlu0 %v2100, 64
      %v2116 = vpop.permute.xlu0 %2115
      %2126 = vrot.lane.b32.xlu0 %v1995, 96
      %v2127 = vpop.permute.xlu0 %2126
      %2128 = vrot.lane.b32.xlu0 %v1997, 96
      %v2129 = vpop.permute.xlu0 %2128
      %2130 = vrot.lane.b32.xlu0 %v1999, 96
      %v2131 = vpop.permute.xlu0 %2130
      %2132 = vrot.lane.b32.xlu0 %v2001, 96
      %v2133 = vpop.permute.xlu0 %2132
      %2134 = vrot.lane.b32.xlu0 %v2003, 96
      %v2135 = vpop.permute.xlu0 %2134
      %2136 = vrot.lane.b32.xlu0 %v2005, 96
      %v2137 = vpop.permute.xlu0 %2136
      %2138 = vrot.lane.b32.xlu0 %v2007, 96
      %v2139 = vpop.permute.xlu0 %2138
      %2140 = vrot.lane.b32.xlu0 %v2009, 96
      %v2141 = vpop.permute.xlu0 %2140
      %v2151 = vrot.slane %v2009, 1
      %v2152 = vrot.slane %v2010, 1
      %v2153 = vsel %vm808, %v2151, %v2152
      %v2162 = vrot.slane %v2009, 2
      %v2163 = vrot.slane %v2010, 2
      %v2164 = vsel %vm857, %v2162, %v2163
      %2165 = vrot.lane.b32.xlu0 %v2082, 32
      %v2166 = vpop.permute.xlu0 %2165
      %2167 = vrot.lane.b32.xlu0 %v2085, 32
      %v2168 = vpop.permute.xlu0 %2167
      %2169 = vrot.lane.b32.xlu0 %v2088, 32
      %v2170 = vpop.permute.xlu0 %2169
      %2171 = vrot.lane.b32.xlu0 %v2091, 32
      %v2172 = vpop.permute.xlu0 %2171
      %2173 = vrot.lane.b32.xlu0 %v2094, 32
      %v2174 = vpop.permute.xlu0 %2173
      %2175 = vrot.lane.b32.xlu0 %v2097, 32
      %v2176 = vpop.permute.xlu0 %2175
      %2177 = vrot.lane.b32.xlu0 %v2100, 32
      %v2178 = vpop.permute.xlu0 %2177
      %2179 = vrot.lane.b32.xlu0 %v2164, 32
      %v2180 = vpop.permute.xlu0 %2179
      %2190 = vrot.lane.b32.xlu0 %v1997, 64
      %v2191 = vpop.permute.xlu0 %2190
      %2192 = vrot.lane.b32.xlu0 %v1999, 64
      %v2193 = vpop.permute.xlu0 %2192
      %2194 = vrot.lane.b32.xlu0 %v2001, 64
      %v2195 = vpop.permute.xlu0 %2194
      %2196 = vrot.lane.b32.xlu0 %v2003, 64
      %v2197 = vpop.permute.xlu0 %2196
      %2198 = vrot.lane.b32.xlu0 %v2005, 64
      %v2199 = vpop.permute.xlu0 %2198
      %2200 = vrot.lane.b32.xlu0 %v2007, 64
      %v2201 = vpop.permute.xlu0 %2200
      %2202 = vrot.lane.b32.xlu0 %v2009, 64
      %v2203 = vpop.permute.xlu0 %2202
      %2204 = vrot.lane.b32.xlu0 %v2011, 64
      %v2205 = vpop.permute.xlu0 %2204
      %v2215 = vrot.slane %v2011, 1
      %v2216 = vrot.slane %v2012, 1
      %v2217 = vsel %vm808, %v2215, %v2216
      %2218 = vrot.lane.b32.xlu0 %v2037, 96
      %v2219 = vpop.permute.xlu0 %2218
      %2220 = vrot.lane.b32.xlu0 %v2040, 96
      %v2221 = vpop.permute.xlu0 %2220
      %2222 = vrot.lane.b32.xlu0 %v2043, 96
      %v2223 = vpop.permute.xlu0 %2222
      %2224 = vrot.lane.b32.xlu0 %v2046, 96
      %v2225 = vpop.permute.xlu0 %2224
      %2226 = vrot.lane.b32.xlu0 %v2049, 96
      %v2227 = vpop.permute.xlu0 %2226
      %2228 = vrot.lane.b32.xlu0 %v2052, 96
      %v2229 = vpop.permute.xlu0 %2228
      %2230 = vrot.lane.b32.xlu0 %v2153, 96
      %v2231 = vpop.permute.xlu0 %2230
      %2232 = vrot.lane.b32.xlu0 %v2217, 96
      %v2233 = vpop.permute.xlu0 %2232
      %v2242 = vrot.slane %v2011, 2
      %v2243 = vrot.slane %v2012, 2
      %v2244 = vsel %vm857, %v2242, %v2243
      %v2245 = vsel %vm711, %v1993, %v2054
      %v2246 = vsel %vm711, %v1995, %v2056
      %v2247 = vsel %vm711, %v1997, %v2058
      %v2248 = vsel %vm711, %v1999, %v2060
      %v2249 = vsel %vm711, %v2001, %v2062
      %v2250 = vsel %vm711, %v2003, %v2064
      %v2251 = vsel %vm711, %v2005, %v2066
      %v2252 = vsel %vm711, %v2007, %v2068
      %v2253 = vsel %vm733, %v2245, %v2102
      %v2254 = vsel %vm733, %v2246, %v2104
      %v2255 = vsel %vm733, %v2247, %v2106
      %v2256 = vsel %vm733, %v2248, %v2108
      %v2257 = vsel %vm733, %v2249, %v2110
      %v2258 = vsel %vm733, %v2250, %v2112
      %v2259 = vsel %vm733, %v2251, %v2114
      %v2260 = vsel %vm733, %v2252, %v2116
      %v2261 = vsel %vm1561, %v2253, %v2127
      %v2262 = vsel %vm1561, %v2254, %v2129
      %v2263 = vsel %vm1561, %v2255, %v2131
      %v2264 = vsel %vm1561, %v2256, %v2133
      %v2265 = vsel %vm1561, %v2257, %v2135
      %v2266 = vsel %vm1561, %v2258, %v2137
      %v2267 = vsel %vm1561, %v2259, %v2139
      %v2268 = vsel %vm1561, %v2260, %v2141
      %v2269 = vsel %vm711, %v2034, %v2166
      %v2270 = vsel %vm711, %v2037, %v2168
      %v2271 = vsel %vm711, %v2040, %v2170
      %v2272 = vsel %vm711, %v2043, %v2172
      %v2273 = vsel %vm711, %v2046, %v2174
      %v2274 = vsel %vm711, %v2049, %v2176
      %v2275 = vsel %vm711, %v2052, %v2178
      %v2276 = vsel %vm711, %v2153, %v2180
      %v2277 = vsel %vm733, %v2269, %v2191
      %v2278 = vsel %vm733, %v2270, %v2193
      %v2279 = vsel %vm733, %v2271, %v2195
      %v2280 = vsel %vm733, %v2272, %v2197
      %v2281 = vsel %vm733, %v2273, %v2199
      %v2282 = vsel %vm733, %v2274, %v2201
      %v2283 = vsel %vm733, %v2275, %v2203
      %v2284 = vsel %vm733, %v2276, %v2205
      %v2285 = vsel %vm1561, %v2277, %v2219
      %v2286 = vsel %vm1561, %v2278, %v2221
      %v2287 = vsel %vm1561, %v2279, %v2223
      %v2288 = vsel %vm1561, %v2280, %v2225
      %v2289 = vsel %vm1561, %v2281, %v2227
      %v2290 = vsel %vm1561, %v2282, %v2229
      %v2291 = vsel %vm1561, %v2283, %v2231
      %v2292 = vsel %vm1561, %v2284, %v2233
      %v2294 = vlaneseq
      %v2295 = vshrl.u32 %v2294, 7
      %v2296 = vsub.s32 0, %v2295
      %v2297 = vrot.slane %v576, %v2296
      %v2299 = vsel %vm711, %v2085, 0
      %v2301 = vsel %vm711, %v2088, 0
      %v2303 = vsel %vm711, %v2091, 0
      %v2305 = vsel %vm711, %v2094, 0
      %v2307 = vsel %vm711, %v2097, 0
      %v2309 = vsel %vm711, %v2100, 0
      %v2311 = vsel %vm711, %v2164, 0
      %v2313 = vsel %vm711, %v2244, 0
      %2315 = vmatprep.subr.mxu0 0.0
      %2316 = vmatpush1.msra.mxu0 %v555
      %2317 = vmatprep.subr.mxu0 0.0
      %2318 = vmatpush1.msra.mxu0 %v554
      %2319 = vmatprep.subr.mxu0 0.0
      %2320 = vmatpush1.msra.mxu0 %v553
      %2321 = vmatprep.subr.mxu0 0.0
      %2322 = vmatpush1.msra.mxu0 %v552
      %2323 = vmatprep.subr.mxu0 0.0
      %2324 = vmatpush1.msra.mxu0 %v551
      %2325 = vmatprep.subr.mxu0 0.0
      %2326 = vmatpush1.msra.mxu0 %v550
      %2327 = vmatprep.subr.mxu0 0.0
      %2328 = vmatpush1.msra.mxu0 %v549
      %2329 = vmatprep.subr.mxu0 0.0
      %2330 = vmatpush1.msra.mxu0 %v548
      %2331 = vmatprep.subr.mxu0 0.0
      %2332 = vmatpush1.msra.mxu0 %v547
      %2333 = vmatprep.subr.mxu0 0.0
      %2334 = vmatpush1.msra.mxu0 %v546
      %2335 = vmatprep.subr.mxu0 0.0
      %2336 = vmatpush1.msra.mxu0 %v545
      %2337 = vmatprep.subr.mxu0 0.0
      %2338 = vmatpush1.msra.mxu0 %v544
      %2339 = vmatprep.subr.mxu0 0.0
      %2340 = vmatpush1.msra.mxu0 %v543
      %2341 = vmatprep.subr.mxu0 0.0
      %2342 = vmatpush1.msra.mxu0 %v542
      %2343 = vmatprep.subr.mxu0 0.0
      %2344 = vmatpush1.msra.mxu0 %v541
      %2345 = vmatprep.subr.mxu0 0.0
      %2346 = vmatpush1.msra.mxu0 %v540
      %2347 = vmatprep.subr.mxu0 0.0
      %2348 = vmatpush2.msra.mxu0 %v571
      %2349 = vmatprep.subr.mxu0 0.0
      %2350 = vmatpush2.msra.mxu0 %v570
      %2351 = vmatprep.subr.mxu0 0.0
      %2352 = vmatpush2.msra.mxu0 %v569
      %2353 = vmatprep.subr.mxu0 0.0
      %2354 = vmatpush2.msra.mxu0 %v568
      %2355 = vmatprep.subr.mxu0 0.0
      %2356 = vmatpush2.msra.mxu0 %v567
      %2357 = vmatprep.subr.mxu0 0.0
      %2358 = vmatpush2.msra.mxu0 %v566
      %2359 = vmatprep.subr.mxu0 0.0
      %2360 = vmatpush2.msra.mxu0 %v565
      %2361 = vmatprep.subr.mxu0 0.0
      %2362 = vmatpush2.msra.mxu0 %v564
      %2363 = vmatprep.subr.mxu0 0.0
      %2364 = vmatpush2.msra.mxu0 %v563
      %2365 = vmatprep.subr.mxu0 0.0
      %2366 = vmatpush2.msra.mxu0 %v562
      %2367 = vmatprep.subr.mxu0 0.0
      %2368 = vmatpush2.msra.mxu0 %v561
      %2369 = vmatprep.subr.mxu0 0.0
      %2370 = vmatpush2.msra.mxu0 %v560
      %2371 = vmatprep.subr.mxu0 0.0
      %2372 = vmatpush2.msra.mxu0 %v559
      %2373 = vmatprep.subr.mxu0 0.0
      %2374 = vmatpush2.msra.mxu0 %v558
      %2375 = vmatprep.subr.mxu0 0.0
      %2376 = vmatpush2.msra.mxu0 %v557
      %2377 = vmatprep.subr.mxu0 0.0
      %2378 = vmatpush2.msra.mxu0 %v556
      %2379 = vmatprep.mubr.f32.mxu0 %v2285
      %2380 = vmatmul.mubr.f32.gmra.mxu0 %v2261
      %v2381 = vpop.f32.mrf.mxu0
      %v2382 = vadd.f32 %v2297, %v2381
      %v2383 = vpop.f32.mrf.mxu0
      %2384 = vmatprep.mubr.f32.mxu0 %v2286
      %2385 = vmatmul.mubr.f32.gmra.mxu0 %v2262
      %v2386 = vpop.f32.mrf.mxu0
      %v2387 = vadd.f32 %v2297, %v2386
      %v2388 = vpop.f32.mrf.mxu0
      %2389 = vmatprep.mubr.f32.mxu0 %v2287
      %2390 = vmatmul.mubr.f32.gmra.mxu0 %v2263
      %v2391 = vpop.f32.mrf.mxu0
      %v2392 = vadd.f32 %v2297, %v2391
      %v2393 = vpop.f32.mrf.mxu0
      %2394 = vmatprep.mubr.f32.mxu0 %v2288
      %2395 = vmatmul.mubr.f32.gmra.mxu0 %v2264
      %v2396 = vpop.f32.mrf.mxu0
      %v2397 = vadd.f32 %v2297, %v2396
      %v2398 = vpop.f32.mrf.mxu0
      %2399 = vmatprep.mubr.f32.mxu0 %v2289
      %2400 = vmatmul.mubr.f32.gmra.mxu0 %v2265
      %v2401 = vpop.f32.mrf.mxu0
      %v2402 = vadd.f32 %v2297, %v2401
      %v2403 = vpop.f32.mrf.mxu0
      %2404 = vmatprep.mubr.f32.mxu0 %v2290
      %2405 = vmatmul.mubr.f32.gmra.mxu0 %v2266
      %v2406 = vpop.f32.mrf.mxu0
      %v2407 = vadd.f32 %v2297, %v2406
      %v2408 = vpop.f32.mrf.mxu0
      %2409 = vmatprep.mubr.f32.mxu0 %v2291
      %2410 = vmatmul.mubr.f32.gmra.mxu0 %v2267
      %v2411 = vpop.f32.mrf.mxu0
      %v2412 = vadd.f32 %v2297, %v2411
      %v2413 = vpop.f32.mrf.mxu0
      %2414 = vmatprep.mubr.f32.mxu0 %v2292
      %2415 = vmatmul.mubr.f32.gmra.mxu0 %v2268
      %v2416 = vpop.f32.mrf.mxu0
      %v2417 = vadd.f32 %v2297, %v2416
      %v2418 = vpop.f32.mrf.mxu0
      %2419 = vdwg.mxu0
      %2420 = vmatprep.subr.mxu0 0.0
      %2421 = vmatpush1.msra.mxu0 0.0
      %2422 = vmatprep.subr.mxu0 0.0
      %2423 = vmatpush1.msra.mxu0 0.0
      %2424 = vmatprep.subr.mxu0 0.0
      %2425 = vmatpush1.msra.mxu0 0.0
      %2426 = vmatprep.subr.mxu0 0.0
      %2427 = vmatpush1.msra.mxu0 0.0
      %2428 = vmatprep.subr.mxu0 0.0
      %2429 = vmatpush1.msra.mxu0 0.0
      %2430 = vmatprep.subr.mxu0 0.0
      %2431 = vmatpush1.msra.mxu0 0.0
      %2432 = vmatprep.subr.mxu0 0.0
      %2433 = vmatpush1.msra.mxu0 0.0
      %2434 = vmatprep.subr.mxu0 0.0
      %2435 = vmatpush1.msra.mxu0 0.0
      %2436 = vmatprep.subr.mxu0 0.0
      %2437 = vmatpush1.msra.mxu0 0.0
      %2438 = vmatprep.subr.mxu0 0.0
      %2439 = vmatpush1.msra.mxu0 0.0
      %2440 = vmatprep.subr.mxu0 0.0
      %2441 = vmatpush1.msra.mxu0 0.0
      %2442 = vmatprep.subr.mxu0 0.0
      %2443 = vmatpush1.msra.mxu0 0.0
      %2444 = vmatprep.subr.mxu0 0.0
      %2445 = vmatpush1.msra.mxu0 %v575
      %2446 = vmatprep.subr.mxu0 0.0
      %2447 = vmatpush1.msra.mxu0 %v574
      %2448 = vmatprep.subr.mxu0 0.0
      %2449 = vmatpush1.msra.mxu0 %v573
      %2450 = vmatprep.subr.mxu0 0.0
      %2451 = vmatpush1.msra.mxu0 %v572
      %2452 = vmatprep.subr.mxu0 0.0
      %2453 = vmatpush2.msra.mxu0 0.0
      %2454 = vmatprep.subr.mxu0 0.0
      %2455 = vmatpush2.msra.mxu0 0.0
      %2456 = vmatprep.subr.mxu0 0.0
      %2457 = vmatpush2.msra.mxu0 0.0
      %2458 = vmatprep.subr.mxu0 0.0
      %2459 = vmatpush2.msra.mxu0 0.0
      %2460 = vmatprep.subr.mxu0 0.0
      %2461 = vmatpush2.msra.mxu0 0.0
      %2462 = vmatprep.subr.mxu0 0.0
      %2463 = vmatpush2.msra.mxu0 0.0
      %2464 = vmatprep.subr.mxu0 0.0
      %2465 = vmatpush2.msra.mxu0 0.0
      %2466 = vmatprep.subr.mxu0 0.0
      %2467 = vmatpush2.msra.mxu0 0.0
      %2468 = vmatprep.subr.mxu0 0.0
      %2469 = vmatpush2.msra.mxu0 0.0
      %2470 = vmatprep.subr.mxu0 0.0
      %2471 = vmatpush2.msra.mxu0 0.0
      %2472 = vmatprep.subr.mxu0 0.0
      %2473 = vmatpush2.msra.mxu0 0.0
      %2474 = vmatprep.subr.mxu0 0.0
      %2475 = vmatpush2.msra.mxu0 0.0
      %2476 = vmatprep.subr.mxu0 0.0
      %2477 = vmatpush2.msra.mxu0 0.0
      %2478 = vmatprep.subr.mxu0 0.0
      %2479 = vmatpush2.msra.mxu0 0.0
      %2480 = vmatprep.subr.mxu0 0.0
      %2481 = vmatpush2.msra.mxu0 0.0
      %2482 = vmatprep.subr.mxu0 0.0
      %2483 = vmatpush2.msra.mxu0 0.0
      %2484 = vmatprep.mubr.f32.mxu0 0.0
      %2485 = vmatmul.mubr.f32.gmra.mxu0 %v2299
      %v2486 = vpop.f32.mrf.mxu0
      %v2487 = vadd.f32 %v2382, %v2486
      %v2488 = vpop.f32.mrf.mxu0
      %2489 = vmatprep.mubr.f32.mxu0 0.0
      %2490 = vmatmul.mubr.f32.gmra.mxu0 %v2301
      %v2491 = vpop.f32.mrf.mxu0
      %v2492 = vadd.f32 %v2387, %v2491
      %v2493 = vpop.f32.mrf.mxu0
      %2494 = vmatprep.mubr.f32.mxu0 0.0
      %2495 = vmatmul.mubr.f32.gmra.mxu0 %v2303
      %v2496 = vpop.f32.mrf.mxu0
      %v2497 = vadd.f32 %v2392, %v2496
      %v2498 = vpop.f32.mrf.mxu0
      %2499 = vmatprep.mubr.f32.mxu0 0.0
      %2500 = vmatmul.mubr.f32.gmra.mxu0 %v2305
      %v2501 = vpop.f32.mrf.mxu0
      %v2502 = vadd.f32 %v2397, %v2501
      %v2503 = vpop.f32.mrf.mxu0
      %2504 = vmatprep.mubr.f32.mxu0 0.0
      %2505 = vmatmul.mubr.f32.gmra.mxu0 %v2307
      %v2506 = vpop.f32.mrf.mxu0
      %v2507 = vadd.f32 %v2402, %v2506
      %v2508 = vpop.f32.mrf.mxu0
      %2509 = vmatprep.mubr.f32.mxu0 0.0
      %2510 = vmatmul.mubr.f32.gmra.mxu0 %v2309
      %v2511 = vpop.f32.mrf.mxu0
      %v2512 = vadd.f32 %v2407, %v2511
      %v2513 = vpop.f32.mrf.mxu0
      %2514 = vmatprep.mubr.f32.mxu0 0.0
      %2515 = vmatmul.mubr.f32.gmra.mxu0 %v2311
      %v2516 = vpop.f32.mrf.mxu0
      %v2517 = vadd.f32 %v2412, %v2516
      %v2518 = vpop.f32.mrf.mxu0
      %2519 = vmatprep.mubr.f32.mxu0 0.0
      %2520 = vmatmul.mubr.f32.gmra.mxu0 %v2313
      %v2521 = vpop.f32.mrf.mxu0
      %v2522 = vadd.f32 %v2417, %v2521
      %v2523 = vpop.f32.mrf.mxu0
      %2524 = vdwg.mxu0
      %v2525 = vmax.f32 %v2487, 0.0
      %v2526 = vmax.f32 %v2492, 0.0
      %v2527 = vmax.f32 %v2497, 0.0
      %v2528 = vmax.f32 %v2502, 0.0
      %v2529 = vmax.f32 %v2507, 0.0
      %v2530 = vmax.f32 %v2512, 0.0
      %v2531 = vmax.f32 %v2517, 0.0
      %v2532 = vmax.f32 %v2522, 0.0
      %v2534 = vlaneseq
      %v2535 = vshrl.u32 %v2534, 7
      %v2536 = vsub.s32 0, %v2535
      %v2537 = vrot.slane %v578, %v2536
      %v2540 = vsel %vm1074, %v2525, 0
      %v2543 = vsel %vm1074, %v2526, 0
      %v2546 = vsel %vm1074, %v2527, 0
      %v2549 = vsel %vm1074, %v2528, 0
      %v2552 = vsel %vm1074, %v2529, 0
      %v2555 = vsel %vm1074, %v2530, 0
      %v2558 = vsel %vm1074, %v2531, 0
      %v2561 = vsel %vm1074, %v2532, 0
      %2563 = vmatprep.subr.mxu0 0.0
      %2564 = vmatpush1.msra.mxu0 0.0
      %2565 = vmatprep.subr.mxu0 0.0
      %2566 = vmatpush1.msra.mxu0 0.0
      %2567 = vmatprep.subr.mxu0 0.0
      %2568 = vmatpush1.msra.mxu0 0.0
      %2569 = vmatprep.subr.mxu0 0.0
      %2570 = vmatpush1.msra.mxu0 0.0
      %2571 = vmatprep.subr.mxu0 0.0
      %2572 = vmatpush1.msra.mxu0 0.0
      %2573 = vmatprep.subr.mxu0 0.0
      %2574 = vmatpush1.msra.mxu0 0.0
      %2575 = vmatprep.subr.mxu0 0.0
      %2576 = vmatpush1.msra.mxu0 0.0
      %2577 = vmatprep.subr.mxu0 0.0
      %2578 = vmatpush1.msra.mxu0 0.0
      %2579 = vmatprep.subr.mxu0 0.0
      %2580 = vmatpush1.msra.mxu0 0.0
      %2581 = vmatprep.subr.mxu0 0.0
      %2582 = vmatpush1.msra.mxu0 0.0
      %2583 = vmatprep.subr.mxu0 0.0
      %2584 = vmatpush1.msra.mxu0 0.0
      %2585 = vmatprep.subr.mxu0 0.0
      %2586 = vmatpush1.msra.mxu0 0.0
      %2587 = vmatprep.subr.mxu0 0.0
      %2588 = vmatpush1.msra.mxu0 0.0
      %2589 = vmatprep.subr.mxu0 0.0
      %2590 = vmatpush1.msra.mxu0 0.0
      %2591 = vmatprep.subr.mxu0 0.0
      %2592 = vmatpush1.msra.mxu0 0.0
      %2593 = vmatprep.subr.mxu0 0.0
      %2594 = vmatpush1.msra.mxu0 %v577
      %2595 = vmatprep.subr.mxu0 0.0
      %2596 = vmatpush2.msra.mxu0 0.0
      %2597 = vmatprep.subr.mxu0 0.0
      %2598 = vmatpush2.msra.mxu0 0.0
      %2599 = vmatprep.subr.mxu0 0.0
      %2600 = vmatpush2.msra.mxu0 0.0
      %2601 = vmatprep.subr.mxu0 0.0
      %2602 = vmatpush2.msra.mxu0 0.0
      %2603 = vmatprep.subr.mxu0 0.0
      %2604 = vmatpush2.msra.mxu0 0.0
      %2605 = vmatprep.subr.mxu0 0.0
      %2606 = vmatpush2.msra.mxu0 0.0
      %2607 = vmatprep.subr.mxu0 0.0
      %2608 = vmatpush2.msra.mxu0 0.0
      %2609 = vmatprep.subr.mxu0 0.0
      %2610 = vmatpush2.msra.mxu0 0.0
      %2611 = vmatprep.subr.mxu0 0.0
      %2612 = vmatpush2.msra.mxu0 0.0
      %2613 = vmatprep.subr.mxu0 0.0
      %2614 = vmatpush2.msra.mxu0 0.0
      %2615 = vmatprep.subr.mxu0 0.0
      %2616 = vmatpush2.msra.mxu0 0.0
      %2617 = vmatprep.subr.mxu0 0.0
      %2618 = vmatpush2.msra.mxu0 0.0
      %2619 = vmatprep.subr.mxu0 0.0
      %2620 = vmatpush2.msra.mxu0 0.0
      %2621 = vmatprep.subr.mxu0 0.0
      %2622 = vmatpush2.msra.mxu0 0.0
      %2623 = vmatprep.subr.mxu0 0.0
      %2624 = vmatpush2.msra.mxu0 0.0
      %2625 = vmatprep.subr.mxu0 0.0
      %2626 = vmatpush2.msra.mxu0 0.0
      %2627 = vmatprep.mubr.f32.mxu0 0.0
      %2628 = vmatmul.mubr.f32.gmra.mxu0 %v2540
      %v2629 = vpop.f32.mrf.mxu0
      %v2630 = vadd.f32 %v2537, %v2629
      %v2631 = vpop.f32.mrf.mxu0
      %2632 = vmatprep.mubr.f32.mxu0 0.0
      %2633 = vmatmul.mubr.f32.gmra.mxu0 %v2543
      %v2634 = vpop.f32.mrf.mxu0
      %v2635 = vadd.f32 %v2537, %v2634
      %v2636 = vpop.f32.mrf.mxu0
      %2637 = vmatprep.mubr.f32.mxu0 0.0
      %2638 = vmatmul.mubr.f32.gmra.mxu0 %v2546
      %v2639 = vpop.f32.mrf.mxu0
      %v2640 = vadd.f32 %v2537, %v2639
      %v2641 = vpop.f32.mrf.mxu0
      %2642 = vmatprep.mubr.f32.mxu0 0.0
      %2643 = vmatmul.mubr.f32.gmra.mxu0 %v2549
      %v2644 = vpop.f32.mrf.mxu0
      %v2645 = vadd.f32 %v2537, %v2644
      %v2646 = vpop.f32.mrf.mxu0
      %2647 = vmatprep.mubr.f32.mxu0 0.0
      %2648 = vmatmul.mubr.f32.gmra.mxu0 %v2552
      %v2649 = vpop.f32.mrf.mxu0
      %v2650 = vadd.f32 %v2537, %v2649
      %v2651 = vpop.f32.mrf.mxu0
      %2652 = vmatprep.mubr.f32.mxu0 0.0
      %2653 = vmatmul.mubr.f32.gmra.mxu0 %v2555
      %v2654 = vpop.f32.mrf.mxu0
      %v2655 = vadd.f32 %v2537, %v2654
      %v2656 = vpop.f32.mrf.mxu0
      %2657 = vmatprep.mubr.f32.mxu0 0.0
      %2658 = vmatmul.mubr.f32.gmra.mxu0 %v2558
      %v2659 = vpop.f32.mrf.mxu0
      %v2660 = vadd.f32 %v2537, %v2659
      %v2661 = vpop.f32.mrf.mxu0
      %2662 = vmatprep.mubr.f32.mxu0 0.0
      %2663 = vmatmul.mubr.f32.gmra.mxu0 %v2561
      %v2664 = vpop.f32.mrf.mxu0
      %v2665 = vadd.f32 %v2537, %v2664
      %v2666 = vpop.f32.mrf.mxu0
      %2667 = vdwg.mxu0
      %v2668 = vadd.f32 %v1969, %v2630
      %v2669 = vadd.f32 %v1970, %v2635
      %v2670 = vadd.f32 %v1971, %v2640
      %v2671 = vadd.f32 %v1972, %v2645
      %v2672 = vadd.f32 %v1973, %v2650
      %v2673 = vadd.f32 %v1974, %v2655
      %v2674 = vadd.f32 %v1975, %v2660
      %v2675 = vadd.f32 %v1976, %v2665
      %v2676 = vmax.f32 %v2668, 0.0
      %v2677 = vmax.f32 %v2669, 0.0
      %v2678 = vmax.f32 %v2670, 0.0
      %v2679 = vmax.f32 %v2671, 0.0
      %v2680 = vmax.f32 %v2672, 0.0
      %v2681 = vmax.f32 %v2673, 0.0
      %v2682 = vmax.f32 %v2674, 0.0
      %v2683 = vmax.f32 %v2675, 0.0
      %2684 = vst.msk [vmem:[%s1284 + $0x1] sm:$0xff] %vm711, %v2676
      %2685 = vst.msk [vmem:[%s1284 + $0x11] sm:$0xff] %vm711, %v2677
      %2686 = vst.msk [vmem:[%s1284 + $0x21] sm:$0xff] %vm711, %v2678
      %2687 = vst.msk [vmem:[%s1284 + $0x31] sm:$0xff] %vm711, %v2679
      %2688 = vst.msk [vmem:[%s1284 + $0x41] sm:$0xff] %vm711, %v2680
      %2689 = vst.msk [vmem:[%s1284 + $0x51] sm:$0xff] %vm711, %v2681
      %2690 = vst.msk [vmem:[%s1284 + $0x61] sm:$0xff] %vm711, %v2682
      %2691 = vst.msk [vmem:[%s1284 + $0x71] sm:$0xff] %vm711, %v2683
      %v2692 = vld [vmem:[#allocation3] sm:$0xff]
      %v2693 = vld [vmem:[#allocation3 + $0x8] sm:$0x3]
      %v2694 = vld [vmem:[#allocation3 + $0x10] sm:$0xff]
      %v2695 = vld [vmem:[#allocation3 + $0x18] sm:$0x3]
      %v2696 = vld [vmem:[#allocation3 + $0x20] sm:$0xff]
      %v2697 = vld [vmem:[#allocation3 + $0x28] sm:$0x3]
      %v2698 = vld [vmem:[#allocation3 + $0x30] sm:$0xff]
      %v2699 = vld [vmem:[#allocation3 + $0x38] sm:$0x3]
      %v2700 = vld [vmem:[#allocation3 + $0x40] sm:$0xff]
      %v2701 = vld [vmem:[#allocation3 + $0x48] sm:$0x3]
      %v2702 = vld [vmem:[#allocation3 + $0x50] sm:$0xff]
      %v2703 = vld [vmem:[#allocation3 + $0x58] sm:$0x3]
      %v2704 = vld [vmem:[#allocation3 + $0x60] sm:$0xff]
      %v2705 = vld [vmem:[#allocation3 + $0x68] sm:$0x3]
      %v2706 = vld [vmem:[#allocation3 + $0x70] sm:$0xff]
      %v2707 = vld [vmem:[#allocation3 + $0x78] sm:$0x3]
      %v2708 = vld [vmem:[#allocation3 + $0x80] sm:$0xff]
      %v2709 = vld [vmem:[#allocation3 + $0x88] sm:$0x3]
      %v2710 = vld [vmem:[#allocation3 + $0x90] sm:$0xff]
      %v2711 = vld [vmem:[#allocation3 + $0x98] sm:$0x3]
      %v2728 = vrot.slane %v2692, 1
      %v2729 = vrot.slane %v2693, 1
      %v2730 = vsel %vm808, %v2728, %v2729
      %v2731 = vrot.slane %v2694, 1
      %v2732 = vrot.slane %v2695, 1
      %v2733 = vsel %vm808, %v2731, %v2732
      %v2734 = vrot.slane %v2696, 1
      %v2735 = vrot.slane %v2697, 1
      %v2736 = vsel %vm808, %v2734, %v2735
      %v2737 = vrot.slane %v2698, 1
      %v2738 = vrot.slane %v2699, 1
      %v2739 = vsel %vm808, %v2737, %v2738
      %v2740 = vrot.slane %v2700, 1
      %v2741 = vrot.slane %v2701, 1
      %v2742 = vsel %vm808, %v2740, %v2741
      %v2743 = vrot.slane %v2702, 1
      %v2744 = vrot.slane %v2703, 1
      %v2745 = vsel %vm808, %v2743, %v2744
      %v2746 = vrot.slane %v2704, 1
      %v2747 = vrot.slane %v2705, 1
      %v2748 = vsel %vm808, %v2746, %v2747
      %v2749 = vrot.slane %v2706, 1
      %v2750 = vrot.slane %v2707, 1
      %v2751 = vsel %vm808, %v2749, %v2750
      %2752 = vrot.lane.b32.xlu0 %v2730, 32
      %v2753 = vpop.permute.xlu0 %2752
      %2754 = vrot.lane.b32.xlu0 %v2733, 32
      %v2755 = vpop.permute.xlu0 %2754
      %2756 = vrot.lane.b32.xlu0 %v2736, 32
      %v2757 = vpop.permute.xlu0 %2756
      %2758 = vrot.lane.b32.xlu0 %v2739, 32
      %v2759 = vpop.permute.xlu0 %2758
      %2760 = vrot.lane.b32.xlu0 %v2742, 32
      %v2761 = vpop.permute.xlu0 %2760
      %2762 = vrot.lane.b32.xlu0 %v2745, 32
      %v2763 = vpop.permute.xlu0 %2762
      %2764 = vrot.lane.b32.xlu0 %v2748, 32
      %v2765 = vpop.permute.xlu0 %2764
      %2766 = vrot.lane.b32.xlu0 %v2751, 32
      %v2767 = vpop.permute.xlu0 %2766
      %v2776 = vrot.slane %v2692, 2
      %v2777 = vrot.slane %v2693, 2
      %v2778 = vsel %vm857, %v2776, %v2777
      %v2779 = vrot.slane %v2694, 2
      %v2780 = vrot.slane %v2695, 2
      %v2781 = vsel %vm857, %v2779, %v2780
      %v2782 = vrot.slane %v2696, 2
      %v2783 = vrot.slane %v2697, 2
      %v2784 = vsel %vm857, %v2782, %v2783
      %v2785 = vrot.slane %v2698, 2
      %v2786 = vrot.slane %v2699, 2
      %v2787 = vsel %vm857, %v2785, %v2786
      %v2788 = vrot.slane %v2700, 2
      %v2789 = vrot.slane %v2701, 2
      %v2790 = vsel %vm857, %v2788, %v2789
      %v2791 = vrot.slane %v2702, 2
      %v2792 = vrot.slane %v2703, 2
      %v2793 = vsel %vm857, %v2791, %v2792
      %v2794 = vrot.slane %v2704, 2
      %v2795 = vrot.slane %v2705, 2
      %v2796 = vsel %vm857, %v2794, %v2795
      %v2797 = vrot.slane %v2706, 2
      %v2798 = vrot.slane %v2707, 2
      %v2799 = vsel %vm857, %v2797, %v2798
      %2800 = vrot.lane.b32.xlu0 %v2778, 64
      %v2801 = vpop.permute.xlu0 %2800
      %2802 = vrot.lane.b32.xlu0 %v2781, 64
      %v2803 = vpop.permute.xlu0 %2802
      %2804 = vrot.lane.b32.xlu0 %v2784, 64
      %v2805 = vpop.permute.xlu0 %2804
      %2806 = vrot.lane.b32.xlu0 %v2787, 64
      %v2807 = vpop.permute.xlu0 %2806
      %2808 = vrot.lane.b32.xlu0 %v2790, 64
      %v2809 = vpop.permute.xlu0 %2808
      %2810 = vrot.lane.b32.xlu0 %v2793, 64
      %v2811 = vpop.permute.xlu0 %2810
      %2812 = vrot.lane.b32.xlu0 %v2796, 64
      %v2813 = vpop.permute.xlu0 %2812
      %2814 = vrot.lane.b32.xlu0 %v2799, 64
      %v2815 = vpop.permute.xlu0 %2814
      %2825 = vrot.lane.b32.xlu0 %v2694, 96
      %v2826 = vpop.permute.xlu0 %2825
      %2827 = vrot.lane.b32.xlu0 %v2696, 96
      %v2828 = vpop.permute.xlu0 %2827
      %2829 = vrot.lane.b32.xlu0 %v2698, 96
      %v2830 = vpop.permute.xlu0 %2829
      %2831 = vrot.lane.b32.xlu0 %v2700, 96
      %v2832 = vpop.permute.xlu0 %2831
      %2833 = vrot.lane.b32.xlu0 %v2702, 96
      %v2834 = vpop.permute.xlu0 %2833
      %2835 = vrot.lane.b32.xlu0 %v2704, 96
      %v2836 = vpop.permute.xlu0 %2835
      %2837 = vrot.lane.b32.xlu0 %v2706, 96
      %v2838 = vpop.permute.xlu0 %2837
      %2839 = vrot.lane.b32.xlu0 %v2708, 96
      %v2840 = vpop.permute.xlu0 %2839
      %v2850 = vrot.slane %v2708, 1
      %v2851 = vrot.slane %v2709, 1
      %v2852 = vsel %vm808, %v2850, %v2851
      %v2861 = vrot.slane %v2708, 2
      %v2862 = vrot.slane %v2709, 2
      %v2863 = vsel %vm857, %v2861, %v2862
      %2864 = vrot.lane.b32.xlu0 %v2781, 32
      %v2865 = vpop.permute.xlu0 %2864
      %2866 = vrot.lane.b32.xlu0 %v2784, 32
      %v2867 = vpop.permute.xlu0 %2866
      %2868 = vrot.lane.b32.xlu0 %v2787, 32
      %v2869 = vpop.permute.xlu0 %2868
      %2870 = vrot.lane.b32.xlu0 %v2790, 32
      %v2871 = vpop.permute.xlu0 %2870
      %2872 = vrot.lane.b32.xlu0 %v2793, 32
      %v2873 = vpop.permute.xlu0 %2872
      %2874 = vrot.lane.b32.xlu0 %v2796, 32
      %v2875 = vpop.permute.xlu0 %2874
      %2876 = vrot.lane.b32.xlu0 %v2799, 32
      %v2877 = vpop.permute.xlu0 %2876
      %2878 = vrot.lane.b32.xlu0 %v2863, 32
      %v2879 = vpop.permute.xlu0 %2878
      %2889 = vrot.lane.b32.xlu0 %v2696, 64
      %v2890 = vpop.permute.xlu0 %2889
      %2891 = vrot.lane.b32.xlu0 %v2698, 64
      %v2892 = vpop.permute.xlu0 %2891
      %2893 = vrot.lane.b32.xlu0 %v2700, 64
      %v2894 = vpop.permute.xlu0 %2893
      %2895 = vrot.lane.b32.xlu0 %v2702, 64
      %v2896 = vpop.permute.xlu0 %2895
      %2897 = vrot.lane.b32.xlu0 %v2704, 64
      %v2898 = vpop.permute.xlu0 %2897
      %2899 = vrot.lane.b32.xlu0 %v2706, 64
      %v2900 = vpop.permute.xlu0 %2899
      %2901 = vrot.lane.b32.xlu0 %v2708, 64
      %v2902 = vpop.permute.xlu0 %2901
      %2903 = vrot.lane.b32.xlu0 %v2710, 64
      %v2904 = vpop.permute.xlu0 %2903
      %v2914 = vrot.slane %v2710, 1
      %v2915 = vrot.slane %v2711, 1
      %v2916 = vsel %vm808, %v2914, %v2915
      %2917 = vrot.lane.b32.xlu0 %v2736, 96
      %v2918 = vpop.permute.xlu0 %2917
      %2919 = vrot.lane.b32.xlu0 %v2739, 96
      %v2920 = vpop.permute.xlu0 %2919
      %2921 = vrot.lane.b32.xlu0 %v2742, 96
      %v2922 = vpop.permute.xlu0 %2921
      %2923 = vrot.lane.b32.xlu0 %v2745, 96
      %v2924 = vpop.permute.xlu0 %2923
      %2925 = vrot.lane.b32.xlu0 %v2748, 96
      %v2926 = vpop.permute.xlu0 %2925
      %2927 = vrot.lane.b32.xlu0 %v2751, 96
      %v2928 = vpop.permute.xlu0 %2927
      %2929 = vrot.lane.b32.xlu0 %v2852, 96
      %v2930 = vpop.permute.xlu0 %2929
      %2931 = vrot.lane.b32.xlu0 %v2916, 96
      %v2932 = vpop.permute.xlu0 %2931
      %v2941 = vrot.slane %v2710, 2
      %v2942 = vrot.slane %v2711, 2
      %v2943 = vsel %vm857, %v2941, %v2942
      %v2944 = vsel %vm711, %v2692, %v2753
      %v2945 = vsel %vm711, %v2694, %v2755
      %v2946 = vsel %vm711, %v2696, %v2757
      %v2947 = vsel %vm711, %v2698, %v2759
      %v2948 = vsel %vm711, %v2700, %v2761
      %v2949 = vsel %vm711, %v2702, %v2763
      %v2950 = vsel %vm711, %v2704, %v2765
      %v2951 = vsel %vm711, %v2706, %v2767
      %v2952 = vsel %vm733, %v2944, %v2801
      %v2953 = vsel %vm733, %v2945, %v2803
      %v2954 = vsel %vm733, %v2946, %v2805
      %v2955 = vsel %vm733, %v2947, %v2807
      %v2956 = vsel %vm733, %v2948, %v2809
      %v2957 = vsel %vm733, %v2949, %v2811
      %v2958 = vsel %vm733, %v2950, %v2813
      %v2959 = vsel %vm733, %v2951, %v2815
      %v2960 = vsel %vm1561, %v2952, %v2826
      %v2961 = vsel %vm1561, %v2953, %v2828
      %v2962 = vsel %vm1561, %v2954, %v2830
      %v2963 = vsel %vm1561, %v2955, %v2832
      %v2964 = vsel %vm1561, %v2956, %v2834
      %v2965 = vsel %vm1561, %v2957, %v2836
      %v2966 = vsel %vm1561, %v2958, %v2838
      %v2967 = vsel %vm1561, %v2959, %v2840
      %v2968 = vsel %vm711, %v2733, %v2865
      %v2969 = vsel %vm711, %v2736, %v2867
      %v2970 = vsel %vm711, %v2739, %v2869
      %v2971 = vsel %vm711, %v2742, %v2871
      %v2972 = vsel %vm711, %v2745, %v2873
      %v2973 = vsel %vm711, %v2748, %v2875
      %v2974 = vsel %vm711, %v2751, %v2877
      %v2975 = vsel %vm711, %v2852, %v2879
      %v2976 = vsel %vm733, %v2968, %v2890
      %v2977 = vsel %vm733, %v2969, %v2892
      %v2978 = vsel %vm733, %v2970, %v2894
      %v2979 = vsel %vm733, %v2971, %v2896
      %v2980 = vsel %vm733, %v2972, %v2898
      %v2981 = vsel %vm733, %v2973, %v2900
      %v2982 = vsel %vm733, %v2974, %v2902
      %v2983 = vsel %vm733, %v2975, %v2904
      %v2984 = vsel %vm1561, %v2976, %v2918
      %v2985 = vsel %vm1561, %v2977, %v2920
      %v2986 = vsel %vm1561, %v2978, %v2922
      %v2987 = vsel %vm1561, %v2979, %v2924
      %v2988 = vsel %vm1561, %v2980, %v2926
      %v2989 = vsel %vm1561, %v2981, %v2928
      %v2990 = vsel %vm1561, %v2982, %v2930
      %v2991 = vsel %vm1561, %v2983, %v2932
      %v2993 = vlaneseq
      %v2994 = vshrl.u32 %v2993, 7
      %v2995 = vsub.s32 0, %v2994
      %v2996 = vrot.slane %v615, %v2995
      %v2998 = vsel %vm711, %v2784, 0
      %v3000 = vsel %vm711, %v2787, 0
      %v3002 = vsel %vm711, %v2790, 0
      %v3004 = vsel %vm711, %v2793, 0
      %v3006 = vsel %vm711, %v2796, 0
      %v3008 = vsel %vm711, %v2799, 0
      %v3010 = vsel %vm711, %v2863, 0
      %v3012 = vsel %vm711, %v2943, 0
      %3014 = vmatprep.subr.mxu0 0.0
      %3015 = vmatpush1.msra.mxu0 %v594
      %3016 = vmatprep.subr.mxu0 0.0
      %3017 = vmatpush1.msra.mxu0 %v593
      %3018 = vmatprep.subr.mxu0 0.0
      %3019 = vmatpush1.msra.mxu0 %v592
      %3020 = vmatprep.subr.mxu0 0.0
      %3021 = vmatpush1.msra.mxu0 %v591
      %3022 = vmatprep.subr.mxu0 0.0
      %3023 = vmatpush1.msra.mxu0 %v590
      %3024 = vmatprep.subr.mxu0 0.0
      %3025 = vmatpush1.msra.mxu0 %v589
      %3026 = vmatprep.subr.mxu0 0.0
      %3027 = vmatpush1.msra.mxu0 %v588
      %3028 = vmatprep.subr.mxu0 0.0
      %3029 = vmatpush1.msra.mxu0 %v587
      %3030 = vmatprep.subr.mxu0 0.0
      %3031 = vmatpush1.msra.mxu0 %v586
      %3032 = vmatprep.subr.mxu0 0.0
      %3033 = vmatpush1.msra.mxu0 %v585
      %3034 = vmatprep.subr.mxu0 0.0
      %3035 = vmatpush1.msra.mxu0 %v584
      %3036 = vmatprep.subr.mxu0 0.0
      %3037 = vmatpush1.msra.mxu0 %v583
      %3038 = vmatprep.subr.mxu0 0.0
      %3039 = vmatpush1.msra.mxu0 %v582
      %3040 = vmatprep.subr.mxu0 0.0
      %3041 = vmatpush1.msra.mxu0 %v581
      %3042 = vmatprep.subr.mxu0 0.0
      %3043 = vmatpush1.msra.mxu0 %v580
      %3044 = vmatprep.subr.mxu0 0.0
      %3045 = vmatpush1.msra.mxu0 %v579
      %3046 = vmatprep.subr.mxu0 0.0
      %3047 = vmatpush2.msra.mxu0 %v610
      %3048 = vmatprep.subr.mxu0 0.0
      %3049 = vmatpush2.msra.mxu0 %v609
      %3050 = vmatprep.subr.mxu0 0.0
      %3051 = vmatpush2.msra.mxu0 %v608
      %3052 = vmatprep.subr.mxu0 0.0
      %3053 = vmatpush2.msra.mxu0 %v607
      %3054 = vmatprep.subr.mxu0 0.0
      %3055 = vmatpush2.msra.mxu0 %v606
      %3056 = vmatprep.subr.mxu0 0.0
      %3057 = vmatpush2.msra.mxu0 %v605
      %3058 = vmatprep.subr.mxu0 0.0
      %3059 = vmatpush2.msra.mxu0 %v604
      %3060 = vmatprep.subr.mxu0 0.0
      %3061 = vmatpush2.msra.mxu0 %v603
      %3062 = vmatprep.subr.mxu0 0.0
      %3063 = vmatpush2.msra.mxu0 %v602
      %3064 = vmatprep.subr.mxu0 0.0
      %3065 = vmatpush2.msra.mxu0 %v601
      %3066 = vmatprep.subr.mxu0 0.0
      %3067 = vmatpush2.msra.mxu0 %v600
      %3068 = vmatprep.subr.mxu0 0.0
      %3069 = vmatpush2.msra.mxu0 %v599
      %3070 = vmatprep.subr.mxu0 0.0
      %3071 = vmatpush2.msra.mxu0 %v598
      %3072 = vmatprep.subr.mxu0 0.0
      %3073 = vmatpush2.msra.mxu0 %v597
      %3074 = vmatprep.subr.mxu0 0.0
      %3075 = vmatpush2.msra.mxu0 %v596
      %3076 = vmatprep.subr.mxu0 0.0
      %3077 = vmatpush2.msra.mxu0 %v595
      %3078 = vmatprep.mubr.f32.mxu0 %v2984
      %3079 = vmatmul.mubr.f32.gmra.mxu0 %v2960
      %v3080 = vpop.f32.mrf.mxu0
      %v3081 = vadd.f32 %v2996, %v3080
      %v3082 = vpop.f32.mrf.mxu0
      %3083 = vmatprep.mubr.f32.mxu0 %v2985
      %3084 = vmatmul.mubr.f32.gmra.mxu0 %v2961
      %v3085 = vpop.f32.mrf.mxu0
      %v3086 = vadd.f32 %v2996, %v3085
      %v3087 = vpop.f32.mrf.mxu0
      %3088 = vmatprep.mubr.f32.mxu0 %v2986
      %3089 = vmatmul.mubr.f32.gmra.mxu0 %v2962
      %v3090 = vpop.f32.mrf.mxu0
      %v3091 = vadd.f32 %v2996, %v3090
      %v3092 = vpop.f32.mrf.mxu0
      %3093 = vmatprep.mubr.f32.mxu0 %v2987
      %3094 = vmatmul.mubr.f32.gmra.mxu0 %v2963
      %v3095 = vpop.f32.mrf.mxu0
      %v3096 = vadd.f32 %v2996, %v3095
      %v3097 = vpop.f32.mrf.mxu0
      %3098 = vmatprep.mubr.f32.mxu0 %v2988
      %3099 = vmatmul.mubr.f32.gmra.mxu0 %v2964
      %v3100 = vpop.f32.mrf.mxu0
      %v3101 = vadd.f32 %v2996, %v3100
      %v3102 = vpop.f32.mrf.mxu0
      %3103 = vmatprep.mubr.f32.mxu0 %v2989
      %3104 = vmatmul.mubr.f32.gmra.mxu0 %v2965
      %v3105 = vpop.f32.mrf.mxu0
      %v3106 = vadd.f32 %v2996, %v3105
      %v3107 = vpop.f32.mrf.mxu0
      %3108 = vmatprep.mubr.f32.mxu0 %v2990
      %3109 = vmatmul.mubr.f32.gmra.mxu0 %v2966
      %v3110 = vpop.f32.mrf.mxu0
      %v3111 = vadd.f32 %v2996, %v3110
      %v3112 = vpop.f32.mrf.mxu0
      %3113 = vmatprep.mubr.f32.mxu0 %v2991
      %3114 = vmatmul.mubr.f32.gmra.mxu0 %v2967
      %v3115 = vpop.f32.mrf.mxu0
      %v3116 = vadd.f32 %v2996, %v3115
      %v3117 = vpop.f32.mrf.mxu0
      %3118 = vdwg.mxu0
      %3119 = vmatprep.subr.mxu0 0.0
      %3120 = vmatpush1.msra.mxu0 0.0
      %3121 = vmatprep.subr.mxu0 0.0
      %3122 = vmatpush1.msra.mxu0 0.0
      %3123 = vmatprep.subr.mxu0 0.0
      %3124 = vmatpush1.msra.mxu0 0.0
      %3125 = vmatprep.subr.mxu0 0.0
      %3126 = vmatpush1.msra.mxu0 0.0
      %3127 = vmatprep.subr.mxu0 0.0
      %3128 = vmatpush1.msra.mxu0 0.0
      %3129 = vmatprep.subr.mxu0 0.0
      %3130 = vmatpush1.msra.mxu0 0.0
      %3131 = vmatprep.subr.mxu0 0.0
      %3132 = vmatpush1.msra.mxu0 0.0
      %3133 = vmatprep.subr.mxu0 0.0
      %3134 = vmatpush1.msra.mxu0 0.0
      %3135 = vmatprep.subr.mxu0 0.0
      %3136 = vmatpush1.msra.mxu0 0.0
      %3137 = vmatprep.subr.mxu0 0.0
      %3138 = vmatpush1.msra.mxu0 0.0
      %3139 = vmatprep.subr.mxu0 0.0
      %3140 = vmatpush1.msra.mxu0 0.0
      %3141 = vmatprep.subr.mxu0 0.0
      %3142 = vmatpush1.msra.mxu0 0.0
      %3143 = vmatprep.subr.mxu0 0.0
      %3144 = vmatpush1.msra.mxu0 %v614
      %3145 = vmatprep.subr.mxu0 0.0
      %3146 = vmatpush1.msra.mxu0 %v613
      %3147 = vmatprep.subr.mxu0 0.0
      %3148 = vmatpush1.msra.mxu0 %v612
      %3149 = vmatprep.subr.mxu0 0.0
      %3150 = vmatpush1.msra.mxu0 %v611
      %3151 = vmatprep.subr.mxu0 0.0
      %3152 = vmatpush2.msra.mxu0 0.0
      %3153 = vmatprep.subr.mxu0 0.0
      %3154 = vmatpush2.msra.mxu0 0.0
      %3155 = vmatprep.subr.mxu0 0.0
      %3156 = vmatpush2.msra.mxu0 0.0
      %3157 = vmatprep.subr.mxu0 0.0
      %3158 = vmatpush2.msra.mxu0 0.0
      %3159 = vmatprep.subr.mxu0 0.0
      %3160 = vmatpush2.msra.mxu0 0.0
      %3161 = vmatprep.subr.mxu0 0.0
      %3162 = vmatpush2.msra.mxu0 0.0
      %3163 = vmatprep.subr.mxu0 0.0
      %3164 = vmatpush2.msra.mxu0 0.0
      %3165 = vmatprep.subr.mxu0 0.0
      %3166 = vmatpush2.msra.mxu0 0.0
      %3167 = vmatprep.subr.mxu0 0.0
      %3168 = vmatpush2.msra.mxu0 0.0
      %3169 = vmatprep.subr.mxu0 0.0
      %3170 = vmatpush2.msra.mxu0 0.0
      %3171 = vmatprep.subr.mxu0 0.0
      %3172 = vmatpush2.msra.mxu0 0.0
      %3173 = vmatprep.subr.mxu0 0.0
      %3174 = vmatpush2.msra.mxu0 0.0
      %3175 = vmatprep.subr.mxu0 0.0
      %3176 = vmatpush2.msra.mxu0 0.0
      %3177 = vmatprep.subr.mxu0 0.0
      %3178 = vmatpush2.msra.mxu0 0.0
      %3179 = vmatprep.subr.mxu0 0.0
      %3180 = vmatpush2.msra.mxu0 0.0
      %3181 = vmatprep.subr.mxu0 0.0
      %3182 = vmatpush2.msra.mxu0 0.0
      %3183 = vmatprep.mubr.f32.mxu0 0.0
      %3184 = vmatmul.mubr.f32.gmra.mxu0 %v2998
      %v3185 = vpop.f32.mrf.mxu0
      %v3186 = vadd.f32 %v3081, %v3185
      %v3187 = vpop.f32.mrf.mxu0
      %3188 = vmatprep.mubr.f32.mxu0 0.0
      %3189 = vmatmul.mubr.f32.gmra.mxu0 %v3000
      %v3190 = vpop.f32.mrf.mxu0
      %v3191 = vadd.f32 %v3086, %v3190
      %v3192 = vpop.f32.mrf.mxu0
      %3193 = vmatprep.mubr.f32.mxu0 0.0
      %3194 = vmatmul.mubr.f32.gmra.mxu0 %v3002
      %v3195 = vpop.f32.mrf.mxu0
      %v3196 = vadd.f32 %v3091, %v3195
      %v3197 = vpop.f32.mrf.mxu0
      %3198 = vmatprep.mubr.f32.mxu0 0.0
      %3199 = vmatmul.mubr.f32.gmra.mxu0 %v3004
      %v3200 = vpop.f32.mrf.mxu0
      %v3201 = vadd.f32 %v3096, %v3200
      %v3202 = vpop.f32.mrf.mxu0
      %3203 = vmatprep.mubr.f32.mxu0 0.0
      %3204 = vmatmul.mubr.f32.gmra.mxu0 %v3006
      %v3205 = vpop.f32.mrf.mxu0
      %v3206 = vadd.f32 %v3101, %v3205
      %v3207 = vpop.f32.mrf.mxu0
      %3208 = vmatprep.mubr.f32.mxu0 0.0
      %3209 = vmatmul.mubr.f32.gmra.mxu0 %v3008
      %v3210 = vpop.f32.mrf.mxu0
      %v3211 = vadd.f32 %v3106, %v3210
      %v3212 = vpop.f32.mrf.mxu0
      %3213 = vmatprep.mubr.f32.mxu0 0.0
      %3214 = vmatmul.mubr.f32.gmra.mxu0 %v3010
      %v3215 = vpop.f32.mrf.mxu0
      %v3216 = vadd.f32 %v3111, %v3215
      %v3217 = vpop.f32.mrf.mxu0
      %3218 = vmatprep.mubr.f32.mxu0 0.0
      %3219 = vmatmul.mubr.f32.gmra.mxu0 %v3012
      %v3220 = vpop.f32.mrf.mxu0
      %v3221 = vadd.f32 %v3116, %v3220
      %v3222 = vpop.f32.mrf.mxu0
      %3223 = vdwg.mxu0
      %v3224 = vmax.f32 %v3186, 0.0
      %v3225 = vmax.f32 %v3191, 0.0
      %v3226 = vmax.f32 %v3196, 0.0
      %v3227 = vmax.f32 %v3201, 0.0
      %v3228 = vmax.f32 %v3206, 0.0
      %v3229 = vmax.f32 %v3211, 0.0
      %v3230 = vmax.f32 %v3216, 0.0
      %v3231 = vmax.f32 %v3221, 0.0
      %s3232 = scalar_lea.vmem [#allocation4], 16
      %3233 = vst.msk [vmem:[%s3232 + $0x1] sm:$0xff] %vm733, %v3224
      %3234 = vst.msk [vmem:[%s3232 + $0x11] sm:$0xff] %vm733, %v3225
      %3235 = vst.msk [vmem:[%s3232 + $0x21] sm:$0xff] %vm733, %v3226
      %3236 = vst.msk [vmem:[%s3232 + $0x31] sm:$0xff] %vm733, %v3227
      %3237 = vst.msk [vmem:[%s3232 + $0x41] sm:$0xff] %vm733, %v3228
      %3238 = vst.msk [vmem:[%s3232 + $0x51] sm:$0xff] %vm733, %v3229
      %3239 = vst.msk [vmem:[%s3232 + $0x61] sm:$0xff] %vm733, %v3230
      %3240 = vst.msk [vmem:[%s3232 + $0x71] sm:$0xff] %vm733, %v3231
      %v3241 = vld [vmem:[#allocation4] sm:$0xff]
      %v3242 = vld [vmem:[#allocation4 + $0x8] sm:$0x3]
      %v3243 = vld [vmem:[#allocation4 + $0x10] sm:$0xff]
      %v3244 = vld [vmem:[#allocation4 + $0x18] sm:$0x3]
      %v3245 = vld [vmem:[#allocation4 + $0x20] sm:$0xff]
      %v3246 = vld [vmem:[#allocation4 + $0x28] sm:$0x3]
      %v3247 = vld [vmem:[#allocation4 + $0x30] sm:$0xff]
      %v3248 = vld [vmem:[#allocation4 + $0x38] sm:$0x3]
      %v3249 = vld [vmem:[#allocation4 + $0x40] sm:$0xff]
      %v3250 = vld [vmem:[#allocation4 + $0x48] sm:$0x3]
      %v3251 = vld [vmem:[#allocation4 + $0x50] sm:$0xff]
      %v3252 = vld [vmem:[#allocation4 + $0x58] sm:$0x3]
      %v3253 = vld [vmem:[#allocation4 + $0x60] sm:$0xff]
      %v3254 = vld [vmem:[#allocation4 + $0x68] sm:$0x3]
      %v3255 = vld [vmem:[#allocation4 + $0x70] sm:$0xff]
      %v3256 = vld [vmem:[#allocation4 + $0x78] sm:$0x3]
      %v3257 = vld [vmem:[#allocation4 + $0x80] sm:$0xff]
      %v3258 = vld [vmem:[#allocation4 + $0x88] sm:$0x3]
      %v3259 = vld [vmem:[#allocation4 + $0x90] sm:$0xff]
      %v3260 = vld [vmem:[#allocation4 + $0x98] sm:$0x3]
      %v3277 = vrot.slane %v3241, 1
      %v3278 = vrot.slane %v3242, 1
      %v3279 = vsel %vm808, %v3277, %v3278
      %v3280 = vrot.slane %v3243, 1
      %v3281 = vrot.slane %v3244, 1
      %v3282 = vsel %vm808, %v3280, %v3281
      %v3283 = vrot.slane %v3245, 1
      %v3284 = vrot.slane %v3246, 1
      %v3285 = vsel %vm808, %v3283, %v3284
      %v3286 = vrot.slane %v3247, 1
      %v3287 = vrot.slane %v3248, 1
      %v3288 = vsel %vm808, %v3286, %v3287
      %v3289 = vrot.slane %v3249, 1
      %v3290 = vrot.slane %v3250, 1
      %v3291 = vsel %vm808, %v3289, %v3290
      %v3292 = vrot.slane %v3251, 1
      %v3293 = vrot.slane %v3252, 1
      %v3294 = vsel %vm808, %v3292, %v3293
      %v3295 = vrot.slane %v3253, 1
      %v3296 = vrot.slane %v3254, 1
      %v3297 = vsel %vm808, %v3295, %v3296
      %v3298 = vrot.slane %v3255, 1
      %v3299 = vrot.slane %v3256, 1
      %v3300 = vsel %vm808, %v3298, %v3299
      %3301 = vrot.lane.b32.xlu0 %v3279, 64
      %v3302 = vpop.permute.xlu0 %3301
      %3303 = vrot.lane.b32.xlu0 %v3282, 64
      %v3304 = vpop.permute.xlu0 %3303
      %3305 = vrot.lane.b32.xlu0 %v3285, 64
      %v3306 = vpop.permute.xlu0 %3305
      %3307 = vrot.lane.b32.xlu0 %v3288, 64
      %v3308 = vpop.permute.xlu0 %3307
      %3309 = vrot.lane.b32.xlu0 %v3291, 64
      %v3310 = vpop.permute.xlu0 %3309
      %3311 = vrot.lane.b32.xlu0 %v3294, 64
      %v3312 = vpop.permute.xlu0 %3311
      %3313 = vrot.lane.b32.xlu0 %v3297, 64
      %v3314 = vpop.permute.xlu0 %3313
      %3315 = vrot.lane.b32.xlu0 %v3300, 64
      %v3316 = vpop.permute.xlu0 %3315
      %v3325 = vrot.slane %v3241, 2
      %v3326 = vrot.slane %v3242, 2
      %v3327 = vsel %vm857, %v3325, %v3326
      %v3328 = vrot.slane %v3243, 2
      %v3329 = vrot.slane %v3244, 2
      %v3330 = vsel %vm857, %v3328, %v3329
      %v3331 = vrot.slane %v3245, 2
      %v3332 = vrot.slane %v3246, 2
      %v3333 = vsel %vm857, %v3331, %v3332
      %v3334 = vrot.slane %v3247, 2
      %v3335 = vrot.slane %v3248, 2
      %v3336 = vsel %vm857, %v3334, %v3335
      %v3337 = vrot.slane %v3249, 2
      %v3338 = vrot.slane %v3250, 2
      %v3339 = vsel %vm857, %v3337, %v3338
      %v3340 = vrot.slane %v3251, 2
      %v3341 = vrot.slane %v3252, 2
      %v3342 = vsel %vm857, %v3340, %v3341
      %v3343 = vrot.slane %v3253, 2
      %v3344 = vrot.slane %v3254, 2
      %v3345 = vsel %vm857, %v3343, %v3344
      %v3346 = vrot.slane %v3255, 2
      %v3347 = vrot.slane %v3256, 2
      %v3348 = vsel %vm857, %v3346, %v3347
      %3358 = vrot.lane.b32.xlu0 %v3243, 64
      %v3359 = vpop.permute.xlu0 %3358
      %3360 = vrot.lane.b32.xlu0 %v3245, 64
      %v3361 = vpop.permute.xlu0 %3360
      %3362 = vrot.lane.b32.xlu0 %v3247, 64
      %v3363 = vpop.permute.xlu0 %3362
      %3364 = vrot.lane.b32.xlu0 %v3249, 64
      %v3365 = vpop.permute.xlu0 %3364
      %3366 = vrot.lane.b32.xlu0 %v3251, 64
      %v3367 = vpop.permute.xlu0 %3366
      %3368 = vrot.lane.b32.xlu0 %v3253, 64
      %v3369 = vpop.permute.xlu0 %3368
      %3370 = vrot.lane.b32.xlu0 %v3255, 64
      %v3371 = vpop.permute.xlu0 %3370
      %3372 = vrot.lane.b32.xlu0 %v3257, 64
      %v3373 = vpop.permute.xlu0 %3372
      %v3383 = vrot.slane %v3257, 1
      %v3384 = vrot.slane %v3258, 1
      %v3385 = vsel %vm808, %v3383, %v3384
      %v3394 = vrot.slane %v3257, 2
      %v3395 = vrot.slane %v3258, 2
      %v3396 = vsel %vm857, %v3394, %v3395
      %3397 = vrot.lane.b32.xlu0 %v3330, 64
      %v3398 = vpop.permute.xlu0 %3397
      %3399 = vrot.lane.b32.xlu0 %v3333, 64
      %v3400 = vpop.permute.xlu0 %3399
      %3401 = vrot.lane.b32.xlu0 %v3336, 64
      %v3402 = vpop.permute.xlu0 %3401
      %3403 = vrot.lane.b32.xlu0 %v3339, 64
      %v3404 = vpop.permute.xlu0 %3403
      %3405 = vrot.lane.b32.xlu0 %v3342, 64
      %v3406 = vpop.permute.xlu0 %3405
      %3407 = vrot.lane.b32.xlu0 %v3345, 64
      %v3408 = vpop.permute.xlu0 %3407
      %3409 = vrot.lane.b32.xlu0 %v3348, 64
      %v3410 = vpop.permute.xlu0 %3409
      %3411 = vrot.lane.b32.xlu0 %v3396, 64
      %v3412 = vpop.permute.xlu0 %3411
      %v3423 = vrot.slane %v3259, 1
      %v3424 = vrot.slane %v3260, 1
      %v3425 = vsel %vm808, %v3423, %v3424
      %3426 = vrot.lane.b32.xlu0 %v3385, 64
      %v3427 = vpop.permute.xlu0 %3426
      %3428 = vrot.lane.b32.xlu0 %v3425, 64
      %v3429 = vpop.permute.xlu0 %3428
      %v3432 = vrot.slane %v3259, 2
      %v3433 = vrot.slane %v3260, 2
      %v3434 = vsel %vm857, %v3432, %v3433
      %v3435 = vsel %vm733, %v3241, %v3302
      %v3436 = vsel %vm733, %v3243, %v3304
      %v3437 = vsel %vm733, %v3245, %v3306
      %v3438 = vsel %vm733, %v3247, %v3308
      %v3439 = vsel %vm733, %v3249, %v3310
      %v3440 = vsel %vm733, %v3251, %v3312
      %v3441 = vsel %vm733, %v3253, %v3314
      %v3442 = vsel %vm733, %v3255, %v3316
      %v3443 = vsel %vm733, %v3327, %v3359
      %v3444 = vsel %vm733, %v3330, %v3361
      %v3445 = vsel %vm733, %v3333, %v3363
      %v3446 = vsel %vm733, %v3336, %v3365
      %v3447 = vsel %vm733, %v3339, %v3367
      %v3448 = vsel %vm733, %v3342, %v3369
      %v3449 = vsel %vm733, %v3345, %v3371
      %v3450 = vsel %vm733, %v3348, %v3373
      %v3451 = vsel %vm733, %v3282, %v3398
      %v3452 = vsel %vm733, %v3285, %v3400
      %v3453 = vsel %vm733, %v3288, %v3402
      %v3454 = vsel %vm733, %v3291, %v3404
      %v3455 = vsel %vm733, %v3294, %v3406
      %v3456 = vsel %vm733, %v3297, %v3408
      %v3457 = vsel %vm733, %v3300, %v3410
      %v3458 = vsel %vm733, %v3385, %v3412
      %v3459 = vsel %vm733, %v3257, %v3427
      %v3460 = vsel %vm733, %v3259, %v3429
      %v3462 = vlaneseq
      %v3463 = vshrl.u32 %v3462, 7
      %v3464 = vsub.s32 0, %v3463
      %v3465 = vrot.slane %v688, %v3464
      %v3467 = vsel %vm733, %v3333, 0
      %v3469 = vsel %vm733, %v3336, 0
      %v3471 = vsel %vm733, %v3339, 0
      %v3473 = vsel %vm733, %v3342, 0
      %v3475 = vsel %vm733, %v3345, 0
      %v3477 = vsel %vm733, %v3348, 0
      %v3479 = vsel %vm733, %v3396, 0
      %v3481 = vsel %vm733, %v3434, 0
      %3483 = vmatprep.subr.mxu0 0.0
      %3484 = vmatpush1.msra.mxu0 %v631
      %3485 = vmatprep.subr.mxu0 0.0
      %3486 = vmatpush1.msra.mxu0 %v630
      %3487 = vmatprep.subr.mxu0 0.0
      %3488 = vmatpush1.msra.mxu0 %v629
      %3489 = vmatprep.subr.mxu0 0.0
      %3490 = vmatpush1.msra.mxu0 %v628
      %3491 = vmatprep.subr.mxu0 0.0
      %3492 = vmatpush1.msra.mxu0 %v627
      %3493 = vmatprep.subr.mxu0 0.0
      %3494 = vmatpush1.msra.mxu0 %v626
      %3495 = vmatprep.subr.mxu0 0.0
      %3496 = vmatpush1.msra.mxu0 %v625
      %3497 = vmatprep.subr.mxu0 0.0
      %3498 = vmatpush1.msra.mxu0 %v624
      %3499 = vmatprep.subr.mxu0 0.0
      %3500 = vmatpush1.msra.mxu0 %v623
      %3501 = vmatprep.subr.mxu0 0.0
      %3502 = vmatpush1.msra.mxu0 %v622
      %3503 = vmatprep.subr.mxu0 0.0
      %3504 = vmatpush1.msra.mxu0 %v621
      %3505 = vmatprep.subr.mxu0 0.0
      %3506 = vmatpush1.msra.mxu0 %v620
      %3507 = vmatprep.subr.mxu0 0.0
      %3508 = vmatpush1.msra.mxu0 %v619
      %3509 = vmatprep.subr.mxu0 0.0
      %3510 = vmatpush1.msra.mxu0 %v618
      %3511 = vmatprep.subr.mxu0 0.0
      %3512 = vmatpush1.msra.mxu0 %v617
      %3513 = vmatprep.subr.mxu0 0.0
      %3514 = vmatpush1.msra.mxu0 %v616
      %3515 = vmatprep.subr.mxu0 0.0
      %3516 = vmatpush2.msra.mxu0 %v647
      %3517 = vmatprep.subr.mxu0 0.0
      %3518 = vmatpush2.msra.mxu0 %v646
      %3519 = vmatprep.subr.mxu0 0.0
      %3520 = vmatpush2.msra.mxu0 %v645
      %3521 = vmatprep.subr.mxu0 0.0
      %3522 = vmatpush2.msra.mxu0 %v644
      %3523 = vmatprep.subr.mxu0 0.0
      %3524 = vmatpush2.msra.mxu0 %v643
      %3525 = vmatprep.subr.mxu0 0.0
      %3526 = vmatpush2.msra.mxu0 %v642
      %3527 = vmatprep.subr.mxu0 0.0
      %3528 = vmatpush2.msra.mxu0 %v641
      %3529 = vmatprep.subr.mxu0 0.0
      %3530 = vmatpush2.msra.mxu0 %v640
      %3531 = vmatprep.subr.mxu0 0.0
      %3532 = vmatpush2.msra.mxu0 %v639
      %3533 = vmatprep.subr.mxu0 0.0
      %3534 = vmatpush2.msra.mxu0 %v638
      %3535 = vmatprep.subr.mxu0 0.0
      %3536 = vmatpush2.msra.mxu0 %v637
      %3537 = vmatprep.subr.mxu0 0.0
      %3538 = vmatpush2.msra.mxu0 %v636
      %3539 = vmatprep.subr.mxu0 0.0
      %3540 = vmatpush2.msra.mxu0 %v635
      %3541 = vmatprep.subr.mxu0 0.0
      %3542 = vmatpush2.msra.mxu0 %v634
      %3543 = vmatprep.subr.mxu0 0.0
      %3544 = vmatpush2.msra.mxu0 %v633
      %3545 = vmatprep.subr.mxu0 0.0
      %3546 = vmatpush2.msra.mxu0 %v632
      %3547 = vmatprep.mubr.f32.mxu0 %v3443
      %3548 = vmatmul.mubr.f32.gmra.mxu0 %v3435
      %v3549 = vpop.f32.mrf.mxu0
      %v3550 = vadd.f32 %v3465, %v3549
      %v3551 = vpop.f32.mrf.mxu0
      %3552 = vmatprep.mubr.f32.mxu0 %v3444
      %3553 = vmatmul.mubr.f32.gmra.mxu0 %v3436
      %v3554 = vpop.f32.mrf.mxu0
      %v3555 = vadd.f32 %v3465, %v3554
      %v3556 = vpop.f32.mrf.mxu0
      %3557 = vmatprep.mubr.f32.mxu0 %v3445
      %3558 = vmatmul.mubr.f32.gmra.mxu0 %v3437
      %v3559 = vpop.f32.mrf.mxu0
      %v3560 = vadd.f32 %v3465, %v3559
      %v3561 = vpop.f32.mrf.mxu0
      %3562 = vmatprep.mubr.f32.mxu0 %v3446
      %3563 = vmatmul.mubr.f32.gmra.mxu0 %v3438
      %v3564 = vpop.f32.mrf.mxu0
      %v3565 = vadd.f32 %v3465, %v3564
      %v3566 = vpop.f32.mrf.mxu0
      %3567 = vmatprep.mubr.f32.mxu0 %v3447
      %3568 = vmatmul.mubr.f32.gmra.mxu0 %v3439
      %v3569 = vpop.f32.mrf.mxu0
      %v3570 = vadd.f32 %v3465, %v3569
      %v3571 = vpop.f32.mrf.mxu0
      %3572 = vmatprep.mubr.f32.mxu0 %v3448
      %3573 = vmatmul.mubr.f32.gmra.mxu0 %v3440
      %v3574 = vpop.f32.mrf.mxu0
      %v3575 = vadd.f32 %v3465, %v3574
      %v3576 = vpop.f32.mrf.mxu0
      %3577 = vmatprep.mubr.f32.mxu0 %v3449
      %3578 = vmatmul.mubr.f32.gmra.mxu0 %v3441
      %v3579 = vpop.f32.mrf.mxu0
      %v3580 = vadd.f32 %v3465, %v3579
      %v3581 = vpop.f32.mrf.mxu0
      %3582 = vmatprep.mubr.f32.mxu0 %v3450
      %3583 = vmatmul.mubr.f32.gmra.mxu0 %v3442
      %v3584 = vpop.f32.mrf.mxu0
      %v3585 = vadd.f32 %v3465, %v3584
      %v3586 = vpop.f32.mrf.mxu0
      %3587 = vdwg.mxu0
      %3588 = vmatprep.subr.mxu0 0.0
      %3589 = vmatpush1.msra.mxu0 %v663
      %3590 = vmatprep.subr.mxu0 0.0
      %3591 = vmatpush1.msra.mxu0 %v662
      %3592 = vmatprep.subr.mxu0 0.0
      %3593 = vmatpush1.msra.mxu0 %v661
      %3594 = vmatprep.subr.mxu0 0.0
      %3595 = vmatpush1.msra.mxu0 %v660
      %3596 = vmatprep.subr.mxu0 0.0
      %3597 = vmatpush1.msra.mxu0 %v659
      %3598 = vmatprep.subr.mxu0 0.0
      %3599 = vmatpush1.msra.mxu0 %v658
      %3600 = vmatprep.subr.mxu0 0.0
      %3601 = vmatpush1.msra.mxu0 %v657
      %3602 = vmatprep.subr.mxu0 0.0
      %3603 = vmatpush1.msra.mxu0 %v656
      %3604 = vmatprep.subr.mxu0 0.0
      %3605 = vmatpush1.msra.mxu0 %v655
      %3606 = vmatprep.subr.mxu0 0.0
      %3607 = vmatpush1.msra.mxu0 %v654
      %3608 = vmatprep.subr.mxu0 0.0
      %3609 = vmatpush1.msra.mxu0 %v653
      %3610 = vmatprep.subr.mxu0 0.0
      %3611 = vmatpush1.msra.mxu0 %v652
      %3612 = vmatprep.subr.mxu0 0.0
      %3613 = vmatpush1.msra.mxu0 %v651
      %3614 = vmatprep.subr.mxu0 0.0
      %3615 = vmatpush1.msra.mxu0 %v650
      %3616 = vmatprep.subr.mxu0 0.0
      %3617 = vmatpush1.msra.mxu0 %v649
      %3618 = vmatprep.subr.mxu0 0.0
      %3619 = vmatpush1.msra.mxu0 %v648
      %3620 = vmatprep.subr.mxu0 0.0
      %3621 = vmatpush2.msra.mxu0 %v679
      %3622 = vmatprep.subr.mxu0 0.0
      %3623 = vmatpush2.msra.mxu0 %v678
      %3624 = vmatprep.subr.mxu0 0.0
      %3625 = vmatpush2.msra.mxu0 %v677
      %3626 = vmatprep.subr.mxu0 0.0
      %3627 = vmatpush2.msra.mxu0 %v676
      %3628 = vmatprep.subr.mxu0 0.0
      %3629 = vmatpush2.msra.mxu0 %v675
      %3630 = vmatprep.subr.mxu0 0.0
      %3631 = vmatpush2.msra.mxu0 %v674
      %3632 = vmatprep.subr.mxu0 0.0
      %3633 = vmatpush2.msra.mxu0 %v673
      %3634 = vmatprep.subr.mxu0 0.0
      %3635 = vmatpush2.msra.mxu0 %v672
      %3636 = vmatprep.subr.mxu0 0.0
      %3637 = vmatpush2.msra.mxu0 %v671
      %3638 = vmatprep.subr.mxu0 0.0
      %3639 = vmatpush2.msra.mxu0 %v670
      %3640 = vmatprep.subr.mxu0 0.0
      %3641 = vmatpush2.msra.mxu0 %v669
      %3642 = vmatprep.subr.mxu0 0.0
      %3643 = vmatpush2.msra.mxu0 %v668
      %3644 = vmatprep.subr.mxu0 0.0
      %3645 = vmatpush2.msra.mxu0 %v667
      %3646 = vmatprep.subr.mxu0 0.0
      %3647 = vmatpush2.msra.mxu0 %v666
      %3648 = vmatprep.subr.mxu0 0.0
      %3649 = vmatpush2.msra.mxu0 %v665
      %3650 = vmatprep.subr.mxu0 0.0
      %3651 = vmatpush2.msra.mxu0 %v664
      %3652 = vmatprep.mubr.f32.mxu0 %v3437
      %3653 = vmatmul.mubr.f32.gmra.mxu0 %v3451
      %v3654 = vpop.f32.mrf.mxu0
      %v3655 = vadd.f32 %v3550, %v3654
      %v3656 = vpop.f32.mrf.mxu0
      %3657 = vmatprep.mubr.f32.mxu0 %v3438
      %3658 = vmatmul.mubr.f32.gmra.mxu0 %v3452
      %v3659 = vpop.f32.mrf.mxu0
      %v3660 = vadd.f32 %v3555, %v3659
      %v3661 = vpop.f32.mrf.mxu0
      %3662 = vmatprep.mubr.f32.mxu0 %v3439
      %3663 = vmatmul.mubr.f32.gmra.mxu0 %v3453
      %v3664 = vpop.f32.mrf.mxu0
      %v3665 = vadd.f32 %v3560, %v3664
      %v3666 = vpop.f32.mrf.mxu0
      %3667 = vmatprep.mubr.f32.mxu0 %v3440
      %3668 = vmatmul.mubr.f32.gmra.mxu0 %v3454
      %v3669 = vpop.f32.mrf.mxu0
      %v3670 = vadd.f32 %v3565, %v3669
      %v3671 = vpop.f32.mrf.mxu0
      %3672 = vmatprep.mubr.f32.mxu0 %v3441
      %3673 = vmatmul.mubr.f32.gmra.mxu0 %v3455
      %v3674 = vpop.f32.mrf.mxu0
      %v3675 = vadd.f32 %v3570, %v3674
      %v3676 = vpop.f32.mrf.mxu0
      %3677 = vmatprep.mubr.f32.mxu0 %v3442
      %3678 = vmatmul.mubr.f32.gmra.mxu0 %v3456
      %v3679 = vpop.f32.mrf.mxu0
      %v3680 = vadd.f32 %v3575, %v3679
      %v3681 = vpop.f32.mrf.mxu0
      %3682 = vmatprep.mubr.f32.mxu0 %v3459
      %3683 = vmatmul.mubr.f32.gmra.mxu0 %v3457
      %v3684 = vpop.f32.mrf.mxu0
      %v3685 = vadd.f32 %v3580, %v3684
      %v3686 = vpop.f32.mrf.mxu0
      %3687 = vmatprep.mubr.f32.mxu0 %v3460
      %3688 = vmatmul.mubr.f32.gmra.mxu0 %v3458
      %v3689 = vpop.f32.mrf.mxu0
      %v3690 = vadd.f32 %v3585, %v3689
      %v3691 = vpop.f32.mrf.mxu0
      %3692 = vdwg.mxu0
      %3693 = vmatprep.subr.mxu0 0.0
      %3694 = vmatpush1.msra.mxu0 0.0
      %3695 = vmatprep.subr.mxu0 0.0
      %3696 = vmatpush1.msra.mxu0 0.0
      %3697 = vmatprep.subr.mxu0 0.0
      %3698 = vmatpush1.msra.mxu0 0.0
      %3699 = vmatprep.subr.mxu0 0.0
      %3700 = vmatpush1.msra.mxu0 0.0
      %3701 = vmatprep.subr.mxu0 0.0
      %3702 = vmatpush1.msra.mxu0 0.0
      %3703 = vmatprep.subr.mxu0 0.0
      %3704 = vmatpush1.msra.mxu0 0.0
      %3705 = vmatprep.subr.mxu0 0.0
      %3706 = vmatpush1.msra.mxu0 0.0
      %3707 = vmatprep.subr.mxu0 0.0
      %3708 = vmatpush1.msra.mxu0 0.0
      %3709 = vmatprep.subr.mxu0 0.0
      %3710 = vmatpush1.msra.mxu0 %v687
      %3711 = vmatprep.subr.mxu0 0.0
      %3712 = vmatpush1.msra.mxu0 %v686
      %3713 = vmatprep.subr.mxu0 0.0
      %3714 = vmatpush1.msra.mxu0 %v685
      %3715 = vmatprep.subr.mxu0 0.0
      %3716 = vmatpush1.msra.mxu0 %v684
      %3717 = vmatprep.subr.mxu0 0.0
      %3718 = vmatpush1.msra.mxu0 %v683
      %3719 = vmatprep.subr.mxu0 0.0
      %3720 = vmatpush1.msra.mxu0 %v682
      %3721 = vmatprep.subr.mxu0 0.0
      %3722 = vmatpush1.msra.mxu0 %v681
      %3723 = vmatprep.subr.mxu0 0.0
      %3724 = vmatpush1.msra.mxu0 %v680
      %3725 = vmatprep.subr.mxu0 0.0
      %3726 = vmatpush2.msra.mxu0 0.0
      %3727 = vmatprep.subr.mxu0 0.0
      %3728 = vmatpush2.msra.mxu0 0.0
      %3729 = vmatprep.subr.mxu0 0.0
      %3730 = vmatpush2.msra.mxu0 0.0
      %3731 = vmatprep.subr.mxu0 0.0
      %3732 = vmatpush2.msra.mxu0 0.0
      %3733 = vmatprep.subr.mxu0 0.0
      %3734 = vmatpush2.msra.mxu0 0.0
      %3735 = vmatprep.subr.mxu0 0.0
      %3736 = vmatpush2.msra.mxu0 0.0
      %3737 = vmatprep.subr.mxu0 0.0
      %3738 = vmatpush2.msra.mxu0 0.0
      %3739 = vmatprep.subr.mxu0 0.0
      %3740 = vmatpush2.msra.mxu0 0.0
      %3741 = vmatprep.subr.mxu0 0.0
      %3742 = vmatpush2.msra.mxu0 0.0
      %3743 = vmatprep.subr.mxu0 0.0
      %3744 = vmatpush2.msra.mxu0 0.0
      %3745 = vmatprep.subr.mxu0 0.0
      %3746 = vmatpush2.msra.mxu0 0.0
      %3747 = vmatprep.subr.mxu0 0.0
      %3748 = vmatpush2.msra.mxu0 0.0
      %3749 = vmatprep.subr.mxu0 0.0
      %3750 = vmatpush2.msra.mxu0 0.0
      %3751 = vmatprep.subr.mxu0 0.0
      %3752 = vmatpush2.msra.mxu0 0.0
      %3753 = vmatprep.subr.mxu0 0.0
      %3754 = vmatpush2.msra.mxu0 0.0
      %3755 = vmatprep.subr.mxu0 0.0
      %3756 = vmatpush2.msra.mxu0 0.0
      %3757 = vmatprep.mubr.f32.mxu0 0.0
      %3758 = vmatmul.mubr.f32.gmra.mxu0 %v3467
      %v3759 = vpop.f32.mrf.mxu0
      %v3760 = vadd.f32 %v3655, %v3759
      %v3761 = vpop.f32.mrf.mxu0
      %3762 = vmatprep.mubr.f32.mxu0 0.0
      %3763 = vmatmul.mubr.f32.gmra.mxu0 %v3469
      %v3764 = vpop.f32.mrf.mxu0
      %v3765 = vadd.f32 %v3660, %v3764
      %v3766 = vpop.f32.mrf.mxu0
      %3767 = vmatprep.mubr.f32.mxu0 0.0
      %3768 = vmatmul.mubr.f32.gmra.mxu0 %v3471
      %v3769 = vpop.f32.mrf.mxu0
      %v3770 = vadd.f32 %v3665, %v3769
      %v3771 = vpop.f32.mrf.mxu0
      %3772 = vmatprep.mubr.f32.mxu0 0.0
      %3773 = vmatmul.mubr.f32.gmra.mxu0 %v3473
      %v3774 = vpop.f32.mrf.mxu0
      %v3775 = vadd.f32 %v3670, %v3774
      %v3776 = vpop.f32.mrf.mxu0
      %3777 = vmatprep.mubr.f32.mxu0 0.0
      %3778 = vmatmul.mubr.f32.gmra.mxu0 %v3475
      %v3779 = vpop.f32.mrf.mxu0
      %v3780 = vadd.f32 %v3675, %v3779
      %v3781 = vpop.f32.mrf.mxu0
      %3782 = vmatprep.mubr.f32.mxu0 0.0
      %3783 = vmatmul.mubr.f32.gmra.mxu0 %v3477
      %v3784 = vpop.f32.mrf.mxu0
      %v3785 = vadd.f32 %v3680, %v3784
      %v3786 = vpop.f32.mrf.mxu0
      %3787 = vmatprep.mubr.f32.mxu0 0.0
      %3788 = vmatmul.mubr.f32.gmra.mxu0 %v3479
      %v3789 = vpop.f32.mrf.mxu0
      %v3790 = vadd.f32 %v3685, %v3789
      %v3791 = vpop.f32.mrf.mxu0
      %3792 = vmatprep.mubr.f32.mxu0 0.0
      %3793 = vmatmul.mubr.f32.gmra.mxu0 %v3481
      %v3794 = vpop.f32.mrf.mxu0
      %v3795 = vadd.f32 %v3690, %v3794
      %v3796 = vpop.f32.mrf.mxu0
      %3797 = vdwg.mxu0
      %vm3798 = vcmask 392192
      %3799 = vst.msk [vmem:[%s494] sm:$0xff] %vm3798, %v3760
      %3800 = vst.msk [vmem:[%s494 + $0x8] sm:$0xff] %vm3798, %v3765
      %3801 = vst.msk [vmem:[%s494 + $0x10] sm:$0xff] %vm3798, %v3770
      %3802 = vst.msk [vmem:[%s494 + $0x18] sm:$0xff] %vm3798, %v3775
      %3803 = vst.msk [vmem:[%s494 + $0x20] sm:$0xff] %vm3798, %v3780
      %3804 = vst.msk [vmem:[%s494 + $0x28] sm:$0xff] %vm3798, %v3785
      %3805 = vst.msk [vmem:[%s494 + $0x30] sm:$0xff] %vm3798, %v3790
      %3806 = vst.msk [vmem:[%s494 + $0x38] sm:$0xff] %vm3798, %v3795
      %p3807 = scmp.lt.s32.totalorder %s26, 1
      %s3808 = scalar_select %p3807, %s26, 1
      %s3809 = smul.addr %s3808, 8
      %s3810 = smul.addr %s3809, 8
      %s3811 = scalar_lea.vmem %s15, %s3810
      // Predicated region
      $region81: #{decoder_forward.1} parent=79 // pred_check
        %p3812 = pneg %p364
      $region82: #{decoder_forward.1} parent=79 // pred_check_branch
        %3814 = sbr.rel (%p3812) target = $region84
      $region83: #{decoder_forward.1} parent=79 // pred_region
        _
      $region84: #{decoder_forward.1} parent=79 // pred_fallthru
        _
    $region80: #{decoder_forward.1} parent=5 // pred_fallthru
      _
    %p3815 = scmp.le.s32.totalorder 2, %s21
    // Predicated region
    $region85: #{decoder_forward.1} parent=5 // pred_check
      %p3816 = pneg %p3815
    $region86: #{decoder_forward.1} parent=5 // pred_check_branch
      %3818 = sbr.rel (%p3816) target = $region88
    $region87: #{decoder_forward.1} parent=5 // pred_region
      %s3819 = ssub.s32 %s21, 2
      // Predicated region
      $region89: #{decoder_forward.1} parent=87 // pred_check
        %p3820 = pneg %p370
      $region90: #{decoder_forward.1} parent=87 // pred_check_branch
        %3822 = sbr.rel (%p3820) target = $region92
      $region91: #{decoder_forward.1} parent=87 // pred_region
        %p3823 = scmp.lt.s32.totalorder %s27, 1
        %s3824 = scalar_select %p3823, %s27, 1
        %s3825 = smul.addr %s3824, 8
        %s3826 = smul.addr %s3825, 8
        %s3827 = scalar_lea.vmem %s15, %s3826
      $region92: #{decoder_forward.1} parent=87 // pred_fallthru
        _
    $region88: #{decoder_forward.1} parent=5 // pred_fallthru
      _
  $region6: #{decoder_forward.1} parent=0 // loop_footer
    %s25 = sadd.s32 1, %s21
  $region7: #{decoder_forward.1} parent=0 // loop_footer_branch
    %20 = sbr.rel target = $region3
  $region8: #{decoder_forward.1} parent=0 // loop_exit
    _

</llo_original>
